<compile_context>
chip_gen: v7x
topology: tpu7x:2x2x1
jax: 0.10.0
libtpu: 0.0.40
codegen_flags: <defaults>
</compile_context>

<pallas_src>
import functools

import jax
import jax.numpy as jnp
from jax import lax
from jax.experimental import pallas as pl
from jax.experimental.pallas import tpu as pltpu

LN_EPS = 1e-5
FF_CHUNK = 512        # MLP hidden-dim chunk (multiple of 128 -> aligned slices)
MAX_Q_TILE = 256      # default Q rows per grid step at large Lq


# ----------------------------------------------------------------------------
# Fused Pallas kernel
# ----------------------------------------------------------------------------
def _layernorm(x, g, b):
    # f32 statistics throughout (v5e has no bf16 VALU/EUP).
    mu = jnp.mean(x, axis=-1, keepdims=True)
    var = jnp.mean(jnp.square(x - mu), axis=-1, keepdims=True)
    return (x - mu) * lax.rsqrt(var + LN_EPS) * g + b


def make_block_kernel(num_heads: int, head_dim: int, q_tile: int):
    """One grid step = (batch element, Q-row tile); full block in-kernel."""
    H, D = num_heads, head_dim

    def _attend(xn, wq_ref, bq_ref, k, v, wo_ref, bo_ref):
        """Attention of a (TQ, ·) query tile against resident bf16 K/V (Lk, A).

        - Q projection: ONE wide (TQ, A) matmul (full MXU width); the
          reference's q/scale = q*sqrt(D) is already folded into wq/bq.
        - Per-head work slices *activations* (not weight lanes); the score
          matmul contracts the D axes directly (no k^T materialization).
        - Softmax normalization deferred: scale the (TQ, D) head output, not
          the (TQ, Lk) probability matrix; denominator via EUP reciprocal.
        - Head outputs concatenated once -> single (TQ, A)@(A, C) output
          projection (full MXU contraction depth).
        """
        q = (jnp.dot(xn.astype(jnp.bfloat16), wq_ref[...],
                     preferred_element_type=jnp.float32)
             + bq_ref[...]).astype(jnp.bfloat16)                    # (TQ, A)
        heads = []
        # TODO(synk): with realistic head counts (8+) switch this static loop
        # to lax.fori_loop(unroll=True) (or a head grid axis) to bound the
        # live ranges of the per-head (TQ, Lk) temporaries.
        for h in range(H):
            lo = h * D
            qh = q[:, lo:lo + D]                                     # (TQ, D)
            kh = k[:, lo:lo + D]                                     # (Lk, D)
            vh = v[:, lo:lo + D]
            s = lax.dot_general(qh, kh, (((1,), (1,)), ((), ())),
                                preferred_element_type=jnp.float32)  # (TQ,Lk)
            # f32 softmax (v5e-safe); exp could go bf16 on v6e/v7x.
            s = s - jnp.max(s, axis=-1, keepdims=True)
            p = jnp.exp(s)
            inv = pl.reciprocal(jnp.sum(p, axis=-1, keepdims=True), approx=True)
            oh = jnp.dot(p.astype(jnp.bfloat16), vh,
                         preferred_element_type=jnp.float32)          # (TQ, D)
            heads.append(oh * inv)                # deferred normalization
        o = jnp.concatenate(heads, axis=-1).astype(jnp.bfloat16)      # (TQ, A)
        return jnp.dot(o, wo_ref[...],
                       preferred_element_type=jnp.float32) + bo_ref[...]

    def kernel(x_ref, emb_ref,
               g1, be1, wq1, bq1, wk1, bk1, wv1, bv1, wo1, bo1,
               g2, be2, wq2, bq2, wk2, bk2, wv2, bv2, wo2, bo2,
               g3, be3, w1, b1, w2, b2,
               o_ref,
               k1_scr, v1_scr, k2_scr, v2_scr):
        j = pl.program_id(1)

        # ---- once per batch element: K/V for both attentions -> VMEM scratch
        @pl.when(j == 0)
        def _():
            x_full = x_ref[0].astype(jnp.float32)                    # (Lq, C)
            xn = _layernorm(x_full, g1[...], be1[...]).astype(jnp.bfloat16)
            k1_scr[...] = (jnp.dot(xn, wk1[...],
                                   preferred_element_type=jnp.float32)
                           + bk1[...]).astype(jnp.bfloat16)
            v1_scr[...] = (jnp.dot(xn, wv1[...],
                                   preferred_element_type=jnp.float32)
                           + bv1[...]).astype(jnp.bfloat16)
            ctx = emb_ref[0]                                 # (Lk, E) bf16
            k2_scr[...] = (jnp.dot(ctx, wk2[...],
                                   preferred_element_type=jnp.float32)
                           + bk2[...]).astype(jnp.bfloat16)
            v2_scr[...] = (jnp.dot(ctx, wv2[...],
                                   preferred_element_type=jnp.float32)
                           + bv2[...]).astype(jnp.bfloat16)

        # ---- this grid step's Q-row tile of x (residual path stays f32)
        row0 = pl.multiple_of(j * q_tile, q_tile)
        x = x_ref[0, pl.ds(row0, q_tile), :].astype(jnp.float32)     # (TQ, C)

        # ---- self-attention + residual (context = normed full x, in scratch)
        xn = _layernorm(x, g1[...], be1[...])
        x = x + _attend(xn, wq1, bq1, k1_scr[...], v1_scr[...], wo1, bo1)

        # ---- cross-attention over text embeddings + residual
        xn = _layernorm(x, g2[...], be2[...])
        x = x + _attend(xn, wq2, bq2, k2_scr[...], v2_scr[...], wo2, bo2)

        # ---- feed-forward: Linear(C,4C) -> ReLU -> Linear(4C,C), chunked
        xn = _layernorm(x, g3[...], be3[...]).astype(jnp.bfloat16)
        hid = w1.shape[1]
        chunk = FF_CHUNK if (hid > FF_CHUNK and hid % FF_CHUNK == 0) else hid
        acc = jnp.zeros(x.shape, jnp.float32)
        for c0 in range(0, hid, chunk):                  # 128-aligned slices
            hc = (jnp.dot(xn, w1[:, c0:c0 + chunk],
                          preferred_element_type=jnp.float32)
                  + b1[:, c0:c0 + chunk])
            hc = jnp.maximum(hc, 0.0).astype(jnp.bfloat16)
            acc = acc + jnp.dot(hc, w2[c0:c0 + chunk, :],
                                preferred_element_type=jnp.float32)
        x = x + acc + b2[...]

        o_ref[0] = x.astype(o_ref.dtype)

    return kernel


# ----------------------------------------------------------------------------
# Wrapper (pallas_call plumbing)
# ----------------------------------------------------------------------------
def transformer_block(x, embeds, params, *, num_heads, head_dim, q_tile=None):
    B, Lq, C = x.shape
    _, Lk, E = embeds.shape
    A = num_heads * head_dim
    Hid = params["ff"]["w1"].shape[1]

    if q_tile is None:
        q_tile = Lq if Lq <= MAX_Q_TILE else MAX_Q_TILE
    assert Lq % q_tile == 0 and (q_tile % 8 == 0 or q_tile == Lq), \
        "q_tile must divide Lq and be a multiple of 8"
    n_tiles = Lq // q_tile

    qs = float(head_dim) ** 0.5      # reference's q/scale == q*sqrt(D), folded
    bf16 = lambda w: w.astype(jnp.bfloat16)   # MXU operands; biases stay f32
    a1, a2, ff = params["attn1"], params["attn2"], params["ff"]

    args = (
        x, embeds.astype(jnp.bfloat16),
        params["ln1"]["g"], params["ln1"]["b"],
        bf16(a1["wq"] * qs), a1["bq"] * qs, bf16(a1["wk"]), a1["bk"],
        bf16(a1["wv"]), a1["bv"], bf16(a1["wo"]), a1["bo"],
        params["ln2"]["g"], params["ln2"]["b"],
        bf16(a2["wq"] * qs), a2["bq"] * qs, bf16(a2["wk"]), a2["bk"],
        bf16(a2["wv"]), a2["bv"], bf16(a2["wo"]), a2["bo"],
        params["ln3"]["g"], params["ln3"]["b"],
        bf16(ff["w1"]), ff["b1"], bf16(ff["w2"]), ff["b2"],
    )
    const_shapes = [
        # ln1 + attn1 (self)
        (1, C), (1, C), (C, A), (1, A), (C, A), (1, A),
        (C, A), (1, A), (A, C), (1, C),
        # ln2 + attn2 (cross)
        (1, C), (1, C), (C, A), (1, A), (E, A), (1, A),
        (E, A), (1, A), (A, C), (1, C),
        # ln3 + feed-forward
        (1, C), (1, C), (C, Hid), (1, Hid), (Hid, C), (1, C),
    ]

    # Advisory cost model so XLA schedules surrounding ops correctly.
    flops = B * (
        2 * Lq * C * A * 4                     # self-attn q/k/v/out projections
        + 2 * Lq * Lq * A * 2                  # self-attn scores + PV
        + 2 * Lq * C * A * 2 + 2 * Lk * E * A * 2   # cross-attn projections
        + 2 * Lq * Lk * A * 2                  # cross-attn scores + PV
        + 2 * Lq * C * Hid * 2)                # MLP
    transcendentals = B * num_heads * (Lq * Lq + Lq * Lk)
    bytes_accessed = (8 * B * Lq * C + 2 * B * Lk * E
                      + sum(2 * a * b for a, b in const_shapes))
    cost = pl.CostEstimate(flops=int(flops),
                           transcendentals=int(transcendentals),
                           bytes_accessed=int(bytes_accessed))

    # Generation-appropriate scoped-VMEM budget (v5e/v6e: ~96 MiB of 128,
    # v7x: ~48 MiB of 64); fall back to a universally safe 48 MiB.
    try:
        vmem_cap = pltpu.get_tpu_info().vmem_capacity_bytes
    except Exception:
        vmem_cap = 64 << 20
    vmem_limit = int(min(vmem_cap * 3 // 4, 100 << 20))

    kernel = make_block_kernel(num_heads, head_dim, q_tile)
    grid = (B, n_tiles)

    def _call(single_buffer_weights):
        def const_spec(shape):
            idx = lambda b, j: (0,) * len(shape)
            if single_buffer_weights:
                # Block index never changes across the grid -> single-buffer
                # to halve weight VMEM residency (matters at SD-1280 shapes).
                return pl.BlockSpec(shape, idx,
                                    pipeline_mode=pl.Buffered(buffer_count=1))
            return pl.BlockSpec(shape, idx)

        in_specs = [
            pl.BlockSpec((1, Lq, C), lambda b, j: (b, 0, 0)),   # full x / batch
            pl.BlockSpec((1, Lk, E), lambda b, j: (b, 0, 0)),   # embeds (bf16)
        ] + [const_spec(s) for s in const_shapes]

        return pl.pallas_call(
            kernel,
            out_shape=jax.ShapeDtypeStruct((B, Lq, C), x.dtype),
            grid=grid,
            in_specs=in_specs,
            out_specs=pl.BlockSpec((1, q_tile, C), lambda b, j: (b, j, 0)),
            scratch_shapes=[
                pltpu.VMEM((Lq, A), jnp.bfloat16),   # self-attn K (per batch)
                pltpu.VMEM((Lq, A), jnp.bfloat16),   # self-attn V
                pltpu.VMEM((Lk, A), jnp.bfloat16),   # cross-attn K
                pltpu.VMEM((Lk, A), jnp.bfloat16),   # cross-attn V
            ],
            compiler_params=pltpu.CompilerParams(
                dimension_semantics=("parallel", "arbitrary"),
                vmem_limit_bytes=vmem_limit),
            cost_estimate=cost,
        )(*args)

    try:
        return _call(True)
    except Exception:
        # TODO(synk): this jax build rejected pl.Buffered(1) single-buffering;
        # fall back to default double-buffered constant operands.
        return _call(False)


# ----------------------------------------------------------------------------
# Pure-JAX f32 reference (for correctness check)
# ----------------------------------------------------------------------------
def _ln_ref(x, g, b):
    mu = x.mean(-1, keepdims=True)
    var = ((x - mu) ** 2).mean(-1, keepdims=True)
    return (x - mu) / jnp.sqrt(var + LN_EPS) * g + b


def _attn_ref(x, ctx, ln_p, ap, self_attn, H, D):
    xn = _ln_ref(x, ln_p["g"], ln_p["b"])
    c = xn if self_attn else ctx
    q = xn @ ap["wq"] + ap["bq"]
    k = c @ ap["wk"] + ap["bk"]
    v = c @ ap["wv"] + ap["bv"]
    B, Lq, _ = q.shape
    Lk = k.shape[1]
    q = q.reshape(B, Lq, H, D).transpose(0, 2, 1, 3)
    k = k.reshape(B, Lk, H, D).transpose(0, 2, 1, 3)
    v = v.reshape(B, Lk, H, D).transpose(0, 2, 1, 3)
    s = jnp.einsum("bhqd,bhkd->bhqk", q * (D ** 0.5), k)  # q / scale
    p = jax.nn.softmax(s, axis=-1)
    o = jnp.einsum("bhqk,bhkd->bhqd", p, v)
    o = o.transpose(0, 2, 1, 3).reshape(B, Lq, H * D)
    return o @ ap["wo"] + ap["bo"] + x


def _ref_block(x, embeds, params, H, D):
    x = _attn_ref(x, x, params["ln1"], params["attn1"], True, H, D)
    x = _attn_ref(x, embeds, params["ln2"], params["attn2"], False, H, D)
    xn = _ln_ref(x, params["ln3"]["g"], params["ln3"]["b"])
    h = jnp.maximum(xn @ params["ff"]["w1"] + params["ff"]["b1"], 0.0)
    return h @ params["ff"]["w2"] + params["ff"]["b2"] + x


# ----------------------------------------------------------------------------
# Deterministic parameter init
# ----------------------------------------------------------------------------
def init_params(key, C, E, num_heads, head_dim):
    A = num_heads * head_dim
    ks = iter(jax.random.split(key, 32))

    def lin(kin, din, dout):
        return (0.05 * jax.random.normal(kin, (din, dout), jnp.float32),
                0.05 * jax.random.normal(next(ks), (1, dout), jnp.float32))

    def attn(ctx_dim):
        wq, bq = lin(next(ks), C, A)
        wk, bk = lin(next(ks), ctx_dim, A)
        wv, bv = lin(next(ks), ctx_dim, A)
        wo, bo = lin(next(ks), A, C)
        return dict(wq=wq, bq=bq, wk=wk, bk=bk, wv=wv, bv=bv, wo=wo, bo=bo)

    def ln():
        return dict(g=jnp.ones((1, C), jnp.float32),
                    b=jnp.zeros((1, C), jnp.float32))

    w1, b1 = lin(next(ks), C, 4 * C)
    w2, b2 = lin(next(ks), 4 * C, C)
    return dict(attn1=attn(C), attn2=attn(E),
                ln1=ln(), ln2=ln(), ln3=ln(),
                ff=dict(w1=w1, b1=b1, w2=w2, b2=b2))


# ----------------------------------------------------------------------------
if __name__ == "__main__":
    B, Lq, Lk = 2, 16, 8
    C = 32            # intermediate_dim
    E = 16            # embed_dim
    num_heads, head_dim = 2, 8

    key = jax.random.PRNGKey(0)
    kx, ke, kp = jax.random.split(key, 3)
    x = jax.random.normal(kx, (B, Lq, C), jnp.float32)
    embeds = jax.random.normal(ke, (B, Lk, E), jnp.float32)
    params = init_params(kp, C, E, num_heads, head_dim)

    # Eager call (the pallas_call itself is compiled); q_tile=8 -> grid (2, 2)
    # exercises the Lq-tile axis and the per-batch K/V scratch reuse.
    out = transformer_block(x, embeds, params,
                            num_heads=num_heads, head_dim=head_dim, q_tile=8)
    out = jax.block_until_ready(out)

    ref = _ref_block(x, embeds, params, num_heads, head_dim)
    assert out.shape == (B, Lq, C)
    # bf16 MXU operands / bf16 embeds vs. pure-f32 reference -> relaxed tol.
    err = float(jnp.max(jnp.abs(out - ref)))
    assert jnp.allclose(out, ref, atol=2e-2, rtol=2e-2), f"max err {err}"

    print("KERNEL_OK")
</pallas_src>

<mosaic_0001>
module attributes {stable_mosaic.version = 11 : i64} {
  func.func @kernel(%arg0: i32, %arg1: i32, %arg2: memref<1x16x32xf32, #tpu.memory_space<vmem>>, %arg3: memref<1x8x16xbf16, #tpu.memory_space<vmem>>, %arg4: memref<1x32xf32, #tpu.memory_space<vmem>>, %arg5: memref<1x32xf32, #tpu.memory_space<vmem>>, %arg6: memref<32x16xbf16, #tpu.memory_space<vmem>>, %arg7: memref<1x16xf32, #tpu.memory_space<vmem>>, %arg8: memref<32x16xbf16, #tpu.memory_space<vmem>>, %arg9: memref<1x16xf32, #tpu.memory_space<vmem>>, %arg10: memref<32x16xbf16, #tpu.memory_space<vmem>>, %arg11: memref<1x16xf32, #tpu.memory_space<vmem>>, %arg12: memref<16x32xbf16, #tpu.memory_space<vmem>>, %arg13: memref<1x32xf32, #tpu.memory_space<vmem>>, %arg14: memref<1x32xf32, #tpu.memory_space<vmem>>, %arg15: memref<1x32xf32, #tpu.memory_space<vmem>>, %arg16: memref<32x16xbf16, #tpu.memory_space<vmem>>, %arg17: memref<1x16xf32, #tpu.memory_space<vmem>>, %arg18: memref<16x16xbf16, #tpu.memory_space<vmem>>, %arg19: memref<1x16xf32, #tpu.memory_space<vmem>>, %arg20: memref<16x16xbf16, #tpu.memory_space<vmem>>, %arg21: memref<1x16xf32, #tpu.memory_space<vmem>>, %arg22: memref<16x32xbf16, #tpu.memory_space<vmem>>, %arg23: memref<1x32xf32, #tpu.memory_space<vmem>>, %arg24: memref<1x32xf32, #tpu.memory_space<vmem>>, %arg25: memref<1x32xf32, #tpu.memory_space<vmem>>, %arg26: memref<32x128xbf16, #tpu.memory_space<vmem>>, %arg27: memref<1x128xf32, #tpu.memory_space<vmem>>, %arg28: memref<128x32xbf16, #tpu.memory_space<vmem>>, %arg29: memref<1x32xf32, #tpu.memory_space<vmem>>, %arg30: memref<1x8x32xf32, #tpu.memory_space<vmem>>, %arg31: memref<16x16xbf16, #tpu.memory_space<vmem>>, %arg32: memref<16x16xbf16, #tpu.memory_space<vmem>>, %arg33: memref<8x16xbf16, #tpu.memory_space<vmem>>, %arg34: memref<8x16xbf16, #tpu.memory_space<vmem>>) attributes {dimension_semantics = [#tpu.dimension_semantics<parallel>, #tpu.dimension_semantics<arbitrary>], iteration_bounds = array<i64: 2, 2>, scalar_prefetch = 0 : i64, scratch_operands = 4 : i64, tpu.core_type = #tpu.core_type<tc>, window_params = [{transform_indices = @transform_0, window_bounds = array<i64: 1, 16, 32>}, {transform_indices = @transform_1, window_bounds = array<i64: 1, 8, 16>}, {pipeline_mode = #tpu.pipeline_mode<synchronous>, transform_indices = @transform_2, window_bounds = array<i64: 1, 32>}, {pipeline_mode = #tpu.pipeline_mode<synchronous>, transform_indices = @transform_3, window_bounds = array<i64: 1, 32>}, {pipeline_mode = #tpu.pipeline_mode<synchronous>, transform_indices = @transform_4, window_bounds = array<i64: 32, 16>}, {pipeline_mode = #tpu.pipeline_mode<synchronous>, transform_indices = @transform_5, window_bounds = array<i64: 1, 16>}, {pipeline_mode = #tpu.pipeline_mode<synchronous>, transform_indices = @transform_6, window_bounds = array<i64: 32, 16>}, {pipeline_mode = #tpu.pipeline_mode<synchronous>, transform_indices = @transform_7, window_bounds = array<i64: 1, 16>}, {pipeline_mode = #tpu.pipeline_mode<synchronous>, transform_indices = @transform_8, window_bounds = array<i64: 32, 16>}, {pipeline_mode = #tpu.pipeline_mode<synchronous>, transform_indices = @transform_9, window_bounds = array<i64: 1, 16>}, {pipeline_mode = #tpu.pipeline_mode<synchronous>, transform_indices = @transform_10, window_bounds = array<i64: 16, 32>}, {pipeline_mode = #tpu.pipeline_mode<synchronous>, transform_indices = @transform_11, window_bounds = array<i64: 1, 32>}, {pipeline_mode = #tpu.pipeline_mode<synchronous>, transform_indices = @transform_12, window_bounds = array<i64: 1, 32>}, {pipeline_mode = #tpu.pipeline_mode<synchronous>, transform_indices = @transform_13, window_bounds = array<i64: 1, 32>}, {pipeline_mode = #tpu.pipeline_mode<synchronous>, transform_indices = @transform_14, window_bounds = array<i64: 32, 16>}, {pipeline_mode = #tpu.pipeline_mode<synchronous>, transform_indices = @transform_15, window_bounds = array<i64: 1, 16>}, {pipeline_mode = #tpu.pipeline_mode<synchronous>, transform_indices = @transform_16, window_bounds = array<i64: 16, 16>}, {pipeline_mode = #tpu.pipeline_mode<synchronous>, transform_indices = @transform_17, window_bounds = array<i64: 1, 16>}, {pipeline_mode = #tpu.pipeline_mode<synchronous>, transform_indices = @transform_18, window_bounds = array<i64: 16, 16>}, {pipeline_mode = #tpu.pipeline_mode<synchronous>, transform_indices = @transform_19, window_bounds = array<i64: 1, 16>}, {pipeline_mode = #tpu.pipeline_mode<synchronous>, transform_indices = @transform_20, window_bounds = array<i64: 16, 32>}, {pipeline_mode = #tpu.pipeline_mode<synchronous>, transform_indices = @transform_21, window_bounds = array<i64: 1, 32>}, {pipeline_mode = #tpu.pipeline_mode<synchronous>, transform_indices = @transform_22, window_bounds = array<i64: 1, 32>}, {pipeline_mode = #tpu.pipeline_mode<synchronous>, transform_indices = @transform_23, window_bounds = array<i64: 1, 32>}, {pipeline_mode = #tpu.pipeline_mode<synchronous>, transform_indices = @transform_24, window_bounds = array<i64: 32, 128>}, {pipeline_mode = #tpu.pipeline_mode<synchronous>, transform_indices = @transform_25, window_bounds = array<i64: 1, 128>}, {pipeline_mode = #tpu.pipeline_mode<synchronous>, transform_indices = @transform_26, window_bounds = array<i64: 128, 32>}, {pipeline_mode = #tpu.pipeline_mode<synchronous>, transform_indices = @transform_27, window_bounds = array<i64: 1, 32>}, {transform_indices = @transform_28, window_bounds = array<i64: 1, 8, 32>}]} {
    %c0_i32 = arith.constant 0 : i32
    %0 = arith.cmpi eq, %arg1, %c0_i32 : i32
    %1 = arith.extui %0 : i1 to i32
    %c0_i32_0 = arith.constant 0 : i32
    %2 = arith.cmpi ne, %1, %c0_i32_0 : i32
    scf.if %2 {
      %c0_87 = arith.constant 0 : index
      %c0_88 = arith.constant 0 : index
      %c0_89 = arith.constant 0 : index
      %198 = vector.load %arg2[%c0_87, %c0_88, %c0_89] : memref<1x16x32xf32, #tpu.memory_space<vmem>>, vector<1x16x32xf32>
      %199 = vector.shape_cast %198 : vector<1x16x32xf32> to vector<16x32xf32>
      %c0_90 = arith.constant 0 : index
      %c0_91 = arith.constant 0 : index
      %200 = vector.load %arg4[%c0_90, %c0_91] : memref<1x32xf32, #tpu.memory_space<vmem>>, vector<1x32xf32>
      %c0_92 = arith.constant 0 : index
      %c0_93 = arith.constant 0 : index
      %201 = vector.load %arg5[%c0_92, %c0_93] : memref<1x32xf32, #tpu.memory_space<vmem>>, vector<1x32xf32>
      %cst_94 = arith.constant dense<0.000000e+00> : vector<16xf32>
      %202 = vector.multi_reduction <add>, %199, %cst_94 [1] : vector<16x32xf32> to vector<16xf32>
      %203 = vector.shape_cast %202 : vector<16xf32> to vector<16x1xf32>
      %cst_95 = arith.constant 3.200000e+01 : f32
      %204 = vector.broadcast %cst_95 : f32 to vector<16x1xf32>
      %205 = arith.divf %203, %204 : vector<16x1xf32>
      %206 = vector.broadcast %205 : vector<16x1xf32> to vector<16x32xf32>
      %207 = arith.subf %199, %206 : vector<16x32xf32>
      %208 = arith.mulf %207, %207 : vector<16x32xf32>
      %cst_96 = arith.constant dense<0.000000e+00> : vector<16xf32>
      %209 = vector.multi_reduction <add>, %208, %cst_96 [1] : vector<16x32xf32> to vector<16xf32>
      %210 = vector.shape_cast %209 : vector<16xf32> to vector<16x1xf32>
      %cst_97 = arith.constant 3.200000e+01 : f32
      %211 = vector.broadcast %cst_97 : f32 to vector<16x1xf32>
      %212 = arith.divf %210, %211 : vector<16x1xf32>
      %213 = vector.broadcast %205 : vector<16x1xf32> to vector<16x32xf32>
      %214 = arith.subf %199, %213 : vector<16x32xf32>
      %cst_98 = arith.constant 9.99999974E-6 : f32
      %215 = vector.broadcast %cst_98 : f32 to vector<16x1xf32>
      %216 = arith.addf %212, %215 : vector<16x1xf32>
      %217 = math.rsqrt %216 : vector<16x1xf32>
      %218 = vector.broadcast %217 : vector<16x1xf32> to vector<16x32xf32>
      %219 = arith.mulf %214, %218 : vector<16x32xf32>
      %220 = vector.broadcast %200 : vector<1x32xf32> to vector<16x32xf32>
      %221 = arith.mulf %219, %220 : vector<16x32xf32>
      %222 = vector.broadcast %201 : vector<1x32xf32> to vector<16x32xf32>
      %223 = arith.addf %221, %222 : vector<16x32xf32>
      %224 = arith.truncf %223 : vector<16x32xf32> to vector<16x32xbf16>
      %c0_99 = arith.constant 0 : index
      %c0_100 = arith.constant 0 : index
      %225 = vector.load %arg8[%c0_99, %c0_100] : memref<32x16xbf16, #tpu.memory_space<vmem>>, vector<32x16xbf16>
      %cst_101 = arith.constant dense<0.000000e+00> : vector<16x16xf32>
      %226 = tpu.matmul %224, %225, %cst_101 {dimension_numbers = #tpu.dot_dimension_numbers<[1], [0], [0], [1], [0, 0, 1, 1], [], []>} : vector<16x32xbf16>, vector<32x16xbf16>, vector<16x16xf32> -> vector<16x16xf32>
      %c0_102 = arith.constant 0 : index
      %c0_103 = arith.constant 0 : index
      %227 = vector.load %arg9[%c0_102, %c0_103] : memref<1x16xf32, #tpu.memory_space<vmem>>, vector<1x16xf32>
      %228 = vector.broadcast %227 : vector<1x16xf32> to vector<16x16xf32>
      %229 = arith.addf %226, %228 : vector<16x16xf32>
      %230 = arith.truncf %229 : vector<16x16xf32> to vector<16x16xbf16>
      %c0_104 = arith.constant 0 : index
      %c0_105 = arith.constant 0 : index
      %231 = vector.load %arg31[%c0_104, %c0_105] : memref<16x16xbf16, #tpu.memory_space<vmem>>, vector<16x16xbf16>
      tpu.vector_store %arg31[%c0_104, %c0_105], %230 {strides = array<i32>} : memref<16x16xbf16, #tpu.memory_space<vmem>>, vector<16x16xbf16>,
      %c0_106 = arith.constant 0 : index
      %c0_107 = arith.constant 0 : index
      %232 = vector.load %arg10[%c0_106, %c0_107] : memref<32x16xbf16, #tpu.memory_space<vmem>>, vector<32x16xbf16>
      %cst_108 = arith.constant dense<0.000000e+00> : vector<16x16xf32>
      %233 = tpu.matmul %224, %232, %cst_108 {dimension_numbers = #tpu.dot_dimension_numbers<[1], [0], [0], [1], [0, 0, 1, 1], [], []>} : vector<16x32xbf16>, vector<32x16xbf16>, vector<16x16xf32> -> vector<16x16xf32>
      %c0_109 = arith.constant 0 : index
      %c0_110 = arith.constant 0 : index
      %234 = vector.load %arg11[%c0_109, %c0_110] : memref<1x16xf32, #tpu.memory_space<vmem>>, vector<1x16xf32>
      %235 = vector.broadcast %234 : vector<1x16xf32> to vector<16x16xf32>
      %236 = arith.addf %233, %235 : vector<16x16xf32>
      %237 = arith.truncf %236 : vector<16x16xf32> to vector<16x16xbf16>
      %c0_111 = arith.constant 0 : index
      %c0_112 = arith.constant 0 : index
      %238 = vector.load %arg32[%c0_111, %c0_112] : memref<16x16xbf16, #tpu.memory_space<vmem>>, vector<16x16xbf16>
      tpu.vector_store %arg32[%c0_111, %c0_112], %237 {strides = array<i32>} : memref<16x16xbf16, #tpu.memory_space<vmem>>, vector<16x16xbf16>,
      %c0_113 = arith.constant 0 : index
      %c0_114 = arith.constant 0 : index
      %c0_115 = arith.constant 0 : index
      %239 = vector.load %arg3[%c0_113, %c0_114, %c0_115] : memref<1x8x16xbf16, #tpu.memory_space<vmem>>, vector<1x8x16xbf16>
      %240 = vector.shape_cast %239 : vector<1x8x16xbf16> to vector<8x16xbf16>
      %c0_116 = arith.constant 0 : index
      %c0_117 = arith.constant 0 : index
      %241 = vector.load %arg18[%c0_116, %c0_117] : memref<16x16xbf16, #tpu.memory_space<vmem>>, vector<16x16xbf16>
      %cst_118 = arith.constant dense<0.000000e+00> : vector<8x16xf32>
      %242 = tpu.matmul %240, %241, %cst_118 {dimension_numbers = #tpu.dot_dimension_numbers<[1], [0], [0], [1], [0, 0, 1, 1], [], []>} : vector<8x16xbf16>, vector<16x16xbf16>, vector<8x16xf32> -> vector<8x16xf32>
      %c0_119 = arith.constant 0 : index
      %c0_120 = arith.constant 0 : index
      %243 = vector.load %arg19[%c0_119, %c0_120] : memref<1x16xf32, #tpu.memory_space<vmem>>, vector<1x16xf32>
      %244 = vector.broadcast %243 : vector<1x16xf32> to vector<8x16xf32>
      %245 = arith.addf %242, %244 : vector<8x16xf32>
      %246 = arith.truncf %245 : vector<8x16xf32> to vector<8x16xbf16>
      %c0_121 = arith.constant 0 : index
      %c0_122 = arith.constant 0 : index
      %247 = vector.load %arg33[%c0_121, %c0_122] : memref<8x16xbf16, #tpu.memory_space<vmem>>, vector<8x16xbf16>
      tpu.vector_store %arg33[%c0_121, %c0_122], %246 {strides = array<i32>} : memref<8x16xbf16, #tpu.memory_space<vmem>>, vector<8x16xbf16>,
      %c0_123 = arith.constant 0 : index
      %c0_124 = arith.constant 0 : index
      %248 = vector.load %arg20[%c0_123, %c0_124] : memref<16x16xbf16, #tpu.memory_space<vmem>>, vector<16x16xbf16>
      %cst_125 = arith.constant dense<0.000000e+00> : vector<8x16xf32>
      %249 = tpu.matmul %240, %248, %cst_125 {dimension_numbers = #tpu.dot_dimension_numbers<[1], [0], [0], [1], [0, 0, 1, 1], [], []>} : vector<8x16xbf16>, vector<16x16xbf16>, vector<8x16xf32> -> vector<8x16xf32>
      %c0_126 = arith.constant 0 : index
      %c0_127 = arith.constant 0 : index
      %250 = vector.load %arg21[%c0_126, %c0_127] : memref<1x16xf32, #tpu.memory_space<vmem>>, vector<1x16xf32>
      %251 = vector.broadcast %250 : vector<1x16xf32> to vector<8x16xf32>
      %252 = arith.addf %249, %251 : vector<8x16xf32>
      %253 = arith.truncf %252 : vector<8x16xf32> to vector<8x16xbf16>
      %c0_128 = arith.constant 0 : index
      %c0_129 = arith.constant 0 : index
      %254 = vector.load %arg34[%c0_128, %c0_129] : memref<8x16xbf16, #tpu.memory_space<vmem>>, vector<8x16xbf16>
      tpu.vector_store %arg34[%c0_128, %c0_129], %253 {strides = array<i32>} : memref<8x16xbf16, #tpu.memory_space<vmem>>, vector<8x16xbf16>,
    } else {
    }
    %c8_i32 = arith.constant 8 : i32
    %3 = arith.muli %arg1, %c8_i32 : i32
    %4 = tpu.assume_multiple %3, 8 : i32
    %c0 = arith.constant 0 : index
    %5 = arith.index_cast %4 : i32 to index
    %c0_1 = arith.constant 0 : index
    %6 = vector.load %arg2[%c0, %5, %c0_1] : memref<1x16x32xf32, #tpu.memory_space<vmem>>, vector<1x8x32xf32>
    %7 = vector.shape_cast %6 : vector<1x8x32xf32> to vector<8x32xf32>
    %c0_2 = arith.constant 0 : index
    %c0_3 = arith.constant 0 : index
    %8 = vector.load %arg4[%c0_2, %c0_3] : memref<1x32xf32, #tpu.memory_space<vmem>>, vector<1x32xf32>
    %c0_4 = arith.constant 0 : index
    %c0_5 = arith.constant 0 : index
    %9 = vector.load %arg5[%c0_4, %c0_5] : memref<1x32xf32, #tpu.memory_space<vmem>>, vector<1x32xf32>
    %cst = arith.constant dense<0.000000e+00> : vector<8xf32>
    %10 = vector.multi_reduction <add>, %7, %cst [1] : vector<8x32xf32> to vector<8xf32>
    %11 = vector.shape_cast %10 : vector<8xf32> to vector<8x1xf32>
    %cst_6 = arith.constant 3.200000e+01 : f32
    %12 = vector.broadcast %cst_6 : f32 to vector<8x1xf32>
    %13 = arith.divf %11, %12 : vector<8x1xf32>
    %14 = vector.broadcast %13 : vector<8x1xf32> to vector<8x32xf32>
    %15 = arith.subf %7, %14 : vector<8x32xf32>
    %16 = arith.mulf %15, %15 : vector<8x32xf32>
    %cst_7 = arith.constant dense<0.000000e+00> : vector<8xf32>
    %17 = vector.multi_reduction <add>, %16, %cst_7 [1] : vector<8x32xf32> to vector<8xf32>
    %18 = vector.shape_cast %17 : vector<8xf32> to vector<8x1xf32>
    %cst_8 = arith.constant 3.200000e+01 : f32
    %19 = vector.broadcast %cst_8 : f32 to vector<8x1xf32>
    %20 = arith.divf %18, %19 : vector<8x1xf32>
    %21 = vector.broadcast %13 : vector<8x1xf32> to vector<8x32xf32>
    %22 = arith.subf %7, %21 : vector<8x32xf32>
    %cst_9 = arith.constant 9.99999974E-6 : f32
    %23 = vector.broadcast %cst_9 : f32 to vector<8x1xf32>
    %24 = arith.addf %20, %23 : vector<8x1xf32>
    %25 = math.rsqrt %24 : vector<8x1xf32>
    %26 = vector.broadcast %25 : vector<8x1xf32> to vector<8x32xf32>
    %27 = arith.mulf %22, %26 : vector<8x32xf32>
    %28 = vector.broadcast %8 : vector<1x32xf32> to vector<8x32xf32>
    %29 = arith.mulf %27, %28 : vector<8x32xf32>
    %30 = vector.broadcast %9 : vector<1x32xf32> to vector<8x32xf32>
    %31 = arith.addf %29, %30 : vector<8x32xf32>
    %c0_10 = arith.constant 0 : index
    %c0_11 = arith.constant 0 : index
    %32 = vector.load %arg31[%c0_10, %c0_11] : memref<16x16xbf16, #tpu.memory_space<vmem>>, vector<16x16xbf16>
    %c0_12 = arith.constant 0 : index
    %c0_13 = arith.constant 0 : index
    %33 = vector.load %arg32[%c0_12, %c0_13] : memref<16x16xbf16, #tpu.memory_space<vmem>>, vector<16x16xbf16>
    %34 = arith.truncf %31 : vector<8x32xf32> to vector<8x32xbf16>
    %c0_14 = arith.constant 0 : index
    %c0_15 = arith.constant 0 : index
    %35 = vector.load %arg6[%c0_14, %c0_15] : memref<32x16xbf16, #tpu.memory_space<vmem>>, vector<32x16xbf16>
    %cst_16 = arith.constant dense<0.000000e+00> : vector<8x16xf32>
    %36 = tpu.matmul %34, %35, %cst_16 {dimension_numbers = #tpu.dot_dimension_numbers<[1], [0], [0], [1], [0, 0, 1, 1], [], []>} : vector<8x32xbf16>, vector<32x16xbf16>, vector<8x16xf32> -> vector<8x16xf32>
    %c0_17 = arith.constant 0 : index
    %c0_18 = arith.constant 0 : index
    %37 = vector.load %arg7[%c0_17, %c0_18] : memref<1x16xf32, #tpu.memory_space<vmem>>, vector<1x16xf32>
    %38 = vector.broadcast %37 : vector<1x16xf32> to vector<8x16xf32>
    %39 = arith.addf %36, %38 : vector<8x16xf32>
    %40 = arith.truncf %39 : vector<8x16xf32> to vector<8x16xbf16>
    %41 = vector.extract_strided_slice %40 {offsets = [0, 0], sizes = [8, 8], strides = [1, 1]} : vector<8x16xbf16> to vector<8x8xbf16>
    %42 = vector.extract_strided_slice %32 {offsets = [0, 0], sizes = [16, 8], strides = [1, 1]} : vector<16x16xbf16> to vector<16x8xbf16>
    %43 = vector.extract_strided_slice %33 {offsets = [0, 0], sizes = [16, 8], strides = [1, 1]} : vector<16x16xbf16> to vector<16x8xbf16>
    %cst_19 = arith.constant dense<0.000000e+00> : vector<8x16xf32>
    %44 = tpu.matmul %41, %42, %cst_19 {dimension_numbers = #tpu.dot_dimension_numbers<[1], [1], [0], [0], [0, 0, 1, 0], [], []>} : vector<8x8xbf16>, vector<16x8xbf16>, vector<8x16xf32> -> vector<8x16xf32>
    %cst_20 = arith.constant dense<0xFF800000> : vector<8xf32>
    %45 = vector.multi_reduction <maximumf>, %44, %cst_20 [1] : vector<8x16xf32> to vector<8xf32>
    %46 = vector.shape_cast %45 : vector<8xf32> to vector<8x1xf32>
    %47 = vector.broadcast %46 : vector<8x1xf32> to vector<8x16xf32>
    %48 = arith.subf %44, %47 : vector<8x16xf32>
    %49 = math.exp %48 : vector<8x16xf32>
    %cst_21 = arith.constant dense<0.000000e+00> : vector<8xf32>
    %50 = vector.multi_reduction <add>, %49, %cst_21 [1] : vector<8x16xf32> to vector<8xf32>
    %51 = vector.shape_cast %50 : vector<8xf32> to vector<8x1xf32>
    %52 = tpu.reciprocal %51 {approx = true} : vector<8x1xf32> -> vector<8x1xf32>
    %53 = arith.truncf %49 : vector<8x16xf32> to vector<8x16xbf16>
    %cst_22 = arith.constant dense<0.000000e+00> : vector<8x8xf32>
    %54 = tpu.matmul %53, %43, %cst_22 {dimension_numbers = #tpu.dot_dimension_numbers<[1], [0], [0], [1], [0, 0, 1, 1], [], []>} : vector<8x16xbf16>, vector<16x8xbf16>, vector<8x8xf32> -> vector<8x8xf32>
    %55 = vector.broadcast %52 : vector<8x1xf32> to vector<8x8xf32>
    %56 = arith.mulf %54, %55 : vector<8x8xf32>
    %57 = vector.extract_strided_slice %40 {offsets = [0, 8], sizes = [8, 8], strides = [1, 1]} : vector<8x16xbf16> to vector<8x8xbf16>
    %58 = vector.extract_strided_slice %32 {offsets = [0, 8], sizes = [16, 8], strides = [1, 1]} : vector<16x16xbf16> to vector<16x8xbf16>
    %59 = vector.extract_strided_slice %33 {offsets = [0, 8], sizes = [16, 8], strides = [1, 1]} : vector<16x16xbf16> to vector<16x8xbf16>
    %cst_23 = arith.constant dense<0.000000e+00> : vector<8x16xf32>
    %60 = tpu.matmul %57, %58, %cst_23 {dimension_numbers = #tpu.dot_dimension_numbers<[1], [1], [0], [0], [0, 0, 1, 0], [], []>} : vector<8x8xbf16>, vector<16x8xbf16>, vector<8x16xf32> -> vector<8x16xf32>
    %cst_24 = arith.constant dense<0xFF800000> : vector<8xf32>
    %61 = vector.multi_reduction <maximumf>, %60, %cst_24 [1] : vector<8x16xf32> to vector<8xf32>
    %62 = vector.shape_cast %61 : vector<8xf32> to vector<8x1xf32>
    %63 = vector.broadcast %62 : vector<8x1xf32> to vector<8x16xf32>
    %64 = arith.subf %60, %63 : vector<8x16xf32>
    %65 = math.exp %64 : vector<8x16xf32>
    %cst_25 = arith.constant dense<0.000000e+00> : vector<8xf32>
    %66 = vector.multi_reduction <add>, %65, %cst_25 [1] : vector<8x16xf32> to vector<8xf32>
    %67 = vector.shape_cast %66 : vector<8xf32> to vector<8x1xf32>
    %68 = tpu.reciprocal %67 {approx = true} : vector<8x1xf32> -> vector<8x1xf32>
    %69 = arith.truncf %65 : vector<8x16xf32> to vector<8x16xbf16>
    %cst_26 = arith.constant dense<0.000000e+00> : vector<8x8xf32>
    %70 = tpu.matmul %69, %59, %cst_26 {dimension_numbers = #tpu.dot_dimension_numbers<[1], [0], [0], [1], [0, 0, 1, 1], [], []>} : vector<8x16xbf16>, vector<16x8xbf16>, vector<8x8xf32> -> vector<8x8xf32>
    %71 = vector.broadcast %68 : vector<8x1xf32> to vector<8x8xf32>
    %72 = arith.mulf %70, %71 : vector<8x8xf32>
    %73 = tpu.concatenate %56, %72 in 1 : vector<8x8xf32>, vector<8x8xf32> -> vector<8x16xf32>
    %74 = arith.truncf %73 : vector<8x16xf32> to vector<8x16xbf16>
    %c0_27 = arith.constant 0 : index
    %c0_28 = arith.constant 0 : index
    %75 = vector.load %arg12[%c0_27, %c0_28] : memref<16x32xbf16, #tpu.memory_space<vmem>>, vector<16x32xbf16>
    %cst_29 = arith.constant dense<0.000000e+00> : vector<8x32xf32>
    %76 = tpu.matmul %74, %75, %cst_29 {dimension_numbers = #tpu.dot_dimension_numbers<[1], [0], [0], [1], [0, 0, 1, 1], [], []>} : vector<8x16xbf16>, vector<16x32xbf16>, vector<8x32xf32> -> vector<8x32xf32>
    %c0_30 = arith.constant 0 : index
    %c0_31 = arith.constant 0 : index
    %77 = vector.load %arg13[%c0_30, %c0_31] : memref<1x32xf32, #tpu.memory_space<vmem>>, vector<1x32xf32>
    %78 = vector.broadcast %77 : vector<1x32xf32> to vector<8x32xf32>
    %79 = arith.addf %76, %78 : vector<8x32xf32>
    %80 = arith.addf %7, %79 : vector<8x32xf32>
    %c0_32 = arith.constant 0 : index
    %c0_33 = arith.constant 0 : index
    %81 = vector.load %arg14[%c0_32, %c0_33] : memref<1x32xf32, #tpu.memory_space<vmem>>, vector<1x32xf32>
    %c0_34 = arith.constant 0 : index
    %c0_35 = arith.constant 0 : index
    %82 = vector.load %arg15[%c0_34, %c0_35] : memref<1x32xf32, #tpu.memory_space<vmem>>, vector<1x32xf32>
    %cst_36 = arith.constant dense<0.000000e+00> : vector<8xf32>
    %83 = vector.multi_reduction <add>, %80, %cst_36 [1] : vector<8x32xf32> to vector<8xf32>
    %84 = vector.shape_cast %83 : vector<8xf32> to vector<8x1xf32>
    %cst_37 = arith.constant 3.200000e+01 : f32
    %85 = vector.broadcast %cst_37 : f32 to vector<8x1xf32>
    %86 = arith.divf %84, %85 : vector<8x1xf32>
    %87 = vector.broadcast %86 : vector<8x1xf32> to vector<8x32xf32>
    %88 = arith.subf %80, %87 : vector<8x32xf32>
    %89 = arith.mulf %88, %88 : vector<8x32xf32>
    %cst_38 = arith.constant dense<0.000000e+00> : vector<8xf32>
    %90 = vector.multi_reduction <add>, %89, %cst_38 [1] : vector<8x32xf32> to vector<8xf32>
    %91 = vector.shape_cast %90 : vector<8xf32> to vector<8x1xf32>
    %cst_39 = arith.constant 3.200000e+01 : f32
    %92 = vector.broadcast %cst_39 : f32 to vector<8x1xf32>
    %93 = arith.divf %91, %92 : vector<8x1xf32>
    %94 = vector.broadcast %86 : vector<8x1xf32> to vector<8x32xf32>
    %95 = arith.subf %80, %94 : vector<8x32xf32>
    %cst_40 = arith.constant 9.99999974E-6 : f32
    %96 = vector.broadcast %cst_40 : f32 to vector<8x1xf32>
    %97 = arith.addf %93, %96 : vector<8x1xf32>
    %98 = math.rsqrt %97 : vector<8x1xf32>
    %99 = vector.broadcast %98 : vector<8x1xf32> to vector<8x32xf32>
    %100 = arith.mulf %95, %99 : vector<8x32xf32>
    %101 = vector.broadcast %81 : vector<1x32xf32> to vector<8x32xf32>
    %102 = arith.mulf %100, %101 : vector<8x32xf32>
    %103 = vector.broadcast %82 : vector<1x32xf32> to vector<8x32xf32>
    %104 = arith.addf %102, %103 : vector<8x32xf32>
    %c0_41 = arith.constant 0 : index
    %c0_42 = arith.constant 0 : index
    %105 = vector.load %arg33[%c0_41, %c0_42] : memref<8x16xbf16, #tpu.memory_space<vmem>>, vector<8x16xbf16>
    %c0_43 = arith.constant 0 : index
    %c0_44 = arith.constant 0 : index
    %106 = vector.load %arg34[%c0_43, %c0_44] : memref<8x16xbf16, #tpu.memory_space<vmem>>, vector<8x16xbf16>
    %107 = arith.truncf %104 : vector<8x32xf32> to vector<8x32xbf16>
    %c0_45 = arith.constant 0 : index
    %c0_46 = arith.constant 0 : index
    %108 = vector.load %arg16[%c0_45, %c0_46] : memref<32x16xbf16, #tpu.memory_space<vmem>>, vector<32x16xbf16>
    %cst_47 = arith.constant dense<0.000000e+00> : vector<8x16xf32>
    %109 = tpu.matmul %107, %108, %cst_47 {dimension_numbers = #tpu.dot_dimension_numbers<[1], [0], [0], [1], [0, 0, 1, 1], [], []>} : vector<8x32xbf16>, vector<32x16xbf16>, vector<8x16xf32> -> vector<8x16xf32>
    %c0_48 = arith.constant 0 : index
    %c0_49 = arith.constant 0 : index
    %110 = vector.load %arg17[%c0_48, %c0_49] : memref<1x16xf32, #tpu.memory_space<vmem>>, vector<1x16xf32>
    %111 = vector.broadcast %110 : vector<1x16xf32> to vector<8x16xf32>
    %112 = arith.addf %109, %111 : vector<8x16xf32>
    %113 = arith.truncf %112 : vector<8x16xf32> to vector<8x16xbf16>
    %114 = vector.extract_strided_slice %113 {offsets = [0, 0], sizes = [8, 8], strides = [1, 1]} : vector<8x16xbf16> to vector<8x8xbf16>
    %115 = vector.extract_strided_slice %105 {offsets = [0, 0], sizes = [8, 8], strides = [1, 1]} : vector<8x16xbf16> to vector<8x8xbf16>
    %116 = vector.extract_strided_slice %106 {offsets = [0, 0], sizes = [8, 8], strides = [1, 1]} : vector<8x16xbf16> to vector<8x8xbf16>
    %cst_50 = arith.constant dense<0.000000e+00> : vector<8x8xf32>
    %117 = tpu.matmul %114, %115, %cst_50 {dimension_numbers = #tpu.dot_dimension_numbers<[1], [1], [0], [0], [0, 0, 1, 0], [], []>} : vector<8x8xbf16>, vector<8x8xbf16>, vector<8x8xf32> -> vector<8x8xf32>
    %cst_51 = arith.constant dense<0xFF800000> : vector<8xf32>
    %118 = vector.multi_reduction <maximumf>, %117, %cst_51 [1] : vector<8x8xf32> to vector<8xf32>
    %119 = vector.shape_cast %118 : vector<8xf32> to vector<8x1xf32>
    %120 = vector.broadcast %119 : vector<8x1xf32> to vector<8x8xf32>
    %121 = arith.subf %117, %120 : vector<8x8xf32>
    %122 = math.exp %121 : vector<8x8xf32>
    %cst_52 = arith.constant dense<0.000000e+00> : vector<8xf32>
    %123 = vector.multi_reduction <add>, %122, %cst_52 [1] : vector<8x8xf32> to vector<8xf32>
    %124 = vector.shape_cast %123 : vector<8xf32> to vector<8x1xf32>
    %125 = tpu.reciprocal %124 {approx = true} : vector<8x1xf32> -> vector<8x1xf32>
    %126 = arith.truncf %122 : vector<8x8xf32> to vector<8x8xbf16>
    %cst_53 = arith.constant dense<0.000000e+00> : vector<8x8xf32>
    %127 = tpu.matmul %126, %116, %cst_53 {dimension_numbers = #tpu.dot_dimension_numbers<[1], [0], [0], [1], [0, 0, 1, 1], [], []>} : vector<8x8xbf16>, vector<8x8xbf16>, vector<8x8xf32> -> vector<8x8xf32>
    %128 = vector.broadcast %125 : vector<8x1xf32> to vector<8x8xf32>
    %129 = arith.mulf %127, %128 : vector<8x8xf32>
    %130 = vector.extract_strided_slice %113 {offsets = [0, 8], sizes = [8, 8], strides = [1, 1]} : vector<8x16xbf16> to vector<8x8xbf16>
    %131 = vector.extract_strided_slice %105 {offsets = [0, 8], sizes = [8, 8], strides = [1, 1]} : vector<8x16xbf16> to vector<8x8xbf16>
    %132 = vector.extract_strided_slice %106 {offsets = [0, 8], sizes = [8, 8], strides = [1, 1]} : vector<8x16xbf16> to vector<8x8xbf16>
    %cst_54 = arith.constant dense<0.000000e+00> : vector<8x8xf32>
    %133 = tpu.matmul %130, %131, %cst_54 {dimension_numbers = #tpu.dot_dimension_numbers<[1], [1], [0], [0], [0, 0, 1, 0], [], []>} : vector<8x8xbf16>, vector<8x8xbf16>, vector<8x8xf32> -> vector<8x8xf32>
    %cst_55 = arith.constant dense<0xFF800000> : vector<8xf32>
    %134 = vector.multi_reduction <maximumf>, %133, %cst_55 [1] : vector<8x8xf32> to vector<8xf32>
    %135 = vector.shape_cast %134 : vector<8xf32> to vector<8x1xf32>
    %136 = vector.broadcast %135 : vector<8x1xf32> to vector<8x8xf32>
    %137 = arith.subf %133, %136 : vector<8x8xf32>
    %138 = math.exp %137 : vector<8x8xf32>
    %cst_56 = arith.constant dense<0.000000e+00> : vector<8xf32>
    %139 = vector.multi_reduction <add>, %138, %cst_56 [1] : vector<8x8xf32> to vector<8xf32>
    %140 = vector.shape_cast %139 : vector<8xf32> to vector<8x1xf32>
    %141 = tpu.reciprocal %140 {approx = true} : vector<8x1xf32> -> vector<8x1xf32>
    %142 = arith.truncf %138 : vector<8x8xf32> to vector<8x8xbf16>
    %cst_57 = arith.constant dense<0.000000e+00> : vector<8x8xf32>
    %143 = tpu.matmul %142, %132, %cst_57 {dimension_numbers = #tpu.dot_dimension_numbers<[1], [0], [0], [1], [0, 0, 1, 1], [], []>} : vector<8x8xbf16>, vector<8x8xbf16>, vector<8x8xf32> -> vector<8x8xf32>
    %144 = vector.broadcast %141 : vector<8x1xf32> to vector<8x8xf32>
    %145 = arith.mulf %143, %144 : vector<8x8xf32>
    %146 = tpu.concatenate %129, %145 in 1 : vector<8x8xf32>, vector<8x8xf32> -> vector<8x16xf32>
    %147 = arith.truncf %146 : vector<8x16xf32> to vector<8x16xbf16>
    %c0_58 = arith.constant 0 : index
    %c0_59 = arith.constant 0 : index
    %148 = vector.load %arg22[%c0_58, %c0_59] : memref<16x32xbf16, #tpu.memory_space<vmem>>, vector<16x32xbf16>
    %cst_60 = arith.constant dense<0.000000e+00> : vector<8x32xf32>
    %149 = tpu.matmul %147, %148, %cst_60 {dimension_numbers = #tpu.dot_dimension_numbers<[1], [0], [0], [1], [0, 0, 1, 1], [], []>} : vector<8x16xbf16>, vector<16x32xbf16>, vector<8x32xf32> -> vector<8x32xf32>
    %c0_61 = arith.constant 0 : index
    %c0_62 = arith.constant 0 : index
    %150 = vector.load %arg23[%c0_61, %c0_62] : memref<1x32xf32, #tpu.memory_space<vmem>>, vector<1x32xf32>
    %151 = vector.broadcast %150 : vector<1x32xf32> to vector<8x32xf32>
    %152 = arith.addf %149, %151 : vector<8x32xf32>
    %153 = arith.addf %80, %152 : vector<8x32xf32>
    %c0_63 = arith.constant 0 : index
    %c0_64 = arith.constant 0 : index
    %154 = vector.load %arg24[%c0_63, %c0_64] : memref<1x32xf32, #tpu.memory_space<vmem>>, vector<1x32xf32>
    %c0_65 = arith.constant 0 : index
    %c0_66 = arith.constant 0 : index
    %155 = vector.load %arg25[%c0_65, %c0_66] : memref<1x32xf32, #tpu.memory_space<vmem>>, vector<1x32xf32>
    %cst_67 = arith.constant dense<0.000000e+00> : vector<8xf32>
    %156 = vector.multi_reduction <add>, %153, %cst_67 [1] : vector<8x32xf32> to vector<8xf32>
    %157 = vector.shape_cast %156 : vector<8xf32> to vector<8x1xf32>
    %cst_68 = arith.constant 3.200000e+01 : f32
    %158 = vector.broadcast %cst_68 : f32 to vector<8x1xf32>
    %159 = arith.divf %157, %158 : vector<8x1xf32>
    %160 = vector.broadcast %159 : vector<8x1xf32> to vector<8x32xf32>
    %161 = arith.subf %153, %160 : vector<8x32xf32>
    %162 = arith.mulf %161, %161 : vector<8x32xf32>
    %cst_69 = arith.constant dense<0.000000e+00> : vector<8xf32>
    %163 = vector.multi_reduction <add>, %162, %cst_69 [1] : vector<8x32xf32> to vector<8xf32>
    %164 = vector.shape_cast %163 : vector<8xf32> to vector<8x1xf32>
    %cst_70 = arith.constant 3.200000e+01 : f32
    %165 = vector.broadcast %cst_70 : f32 to vector<8x1xf32>
    %166 = arith.divf %164, %165 : vector<8x1xf32>
    %167 = vector.broadcast %159 : vector<8x1xf32> to vector<8x32xf32>
    %168 = arith.subf %153, %167 : vector<8x32xf32>
    %cst_71 = arith.constant 9.99999974E-6 : f32
    %169 = vector.broadcast %cst_71 : f32 to vector<8x1xf32>
    %170 = arith.addf %166, %169 : vector<8x1xf32>
    %171 = math.rsqrt %170 : vector<8x1xf32>
    %172 = vector.broadcast %171 : vector<8x1xf32> to vector<8x32xf32>
    %173 = arith.mulf %168, %172 : vector<8x32xf32>
    %174 = vector.broadcast %154 : vector<1x32xf32> to vector<8x32xf32>
    %175 = arith.mulf %173, %174 : vector<8x32xf32>
    %176 = vector.broadcast %155 : vector<1x32xf32> to vector<8x32xf32>
    %177 = arith.addf %175, %176 : vector<8x32xf32>
    %178 = arith.truncf %177 : vector<8x32xf32> to vector<8x32xbf16>
    %cst_72 = arith.constant 0.000000e+00 : f32
    %179 = vector.broadcast %cst_72 : f32 to vector<8x32xf32>
    %c0_73 = arith.constant 0 : index
    %c0_74 = arith.constant 0 : index
    %180 = vector.load %arg26[%c0_73, %c0_74] : memref<32x128xbf16, #tpu.memory_space<vmem>>, vector<32x128xbf16>
    %cst_75 = arith.constant dense<0.000000e+00> : vector<8x128xf32>
    %181 = tpu.matmul %178, %180, %cst_75 {dimension_numbers = #tpu.dot_dimension_numbers<[1], [0], [0], [1], [0, 0, 1, 1], [], []>} : vector<8x32xbf16>, vector<32x128xbf16>, vector<8x128xf32> -> vector<8x128xf32>
    %c0_76 = arith.constant 0 : index
    %c0_77 = arith.constant 0 : index
    %182 = vector.load %arg27[%c0_76, %c0_77] : memref<1x128xf32, #tpu.memory_space<vmem>>, vector<1x128xf32>
    %183 = vector.broadcast %182 : vector<1x128xf32> to vector<8x128xf32>
    %184 = arith.addf %181, %183 : vector<8x128xf32>
    %cst_78 = arith.constant 0.000000e+00 : f32
    %185 = vector.broadcast %cst_78 : f32 to vector<8x128xf32>
    %186 = arith.maximumf %184, %185 : vector<8x128xf32>
    %187 = arith.truncf %186 : vector<8x128xf32> to vector<8x128xbf16>
    %c0_79 = arith.constant 0 : index
    %c0_80 = arith.constant 0 : index
    %188 = vector.load %arg28[%c0_79, %c0_80] : memref<128x32xbf16, #tpu.memory_space<vmem>>, vector<128x32xbf16>
    %cst_81 = arith.constant dense<0.000000e+00> : vector<8x32xf32>
    %189 = tpu.matmul %187, %188, %cst_81 {dimension_numbers = #tpu.dot_dimension_numbers<[1], [0], [0], [1], [0, 0, 1, 1], [], []>} : vector<8x128xbf16>, vector<128x32xbf16>, vector<8x32xf32> -> vector<8x32xf32>
    %190 = arith.addf %179, %189 : vector<8x32xf32>
    %191 = arith.addf %153, %190 : vector<8x32xf32>
    %c0_82 = arith.constant 0 : index
    %c0_83 = arith.constant 0 : index
    %192 = vector.load %arg29[%c0_82, %c0_83] : memref<1x32xf32, #tpu.memory_space<vmem>>, vector<1x32xf32>
    %193 = vector.broadcast %192 : vector<1x32xf32> to vector<8x32xf32>
    %194 = arith.addf %191, %193 : vector<8x32xf32>
    %c0_84 = arith.constant 0 : index
    %c0_85 = arith.constant 0 : index
    %c0_86 = arith.constant 0 : index
    %195 = vector.load %arg30[%c0_84, %c0_85, %c0_86] : memref<1x8x32xf32, #tpu.memory_space<vmem>>, vector<1x8x32xf32>
    %196 = vector.shape_cast %195 : vector<1x8x32xf32> to vector<8x32xf32>
    %197 = vector.shape_cast %194 : vector<8x32xf32> to vector<1x8x32xf32>
    tpu.vector_store %arg30[%c0_84, %c0_85, %c0_86], %197 {strides = array<i32>} : memref<1x8x32xf32, #tpu.memory_space<vmem>>, vector<1x8x32xf32>,
    return
  }
  func.func @transform_0(%arg0: i32, %arg1: i32) -> (i32, i32, i32) {
    %c0_i32 = arith.constant 0 : i32
    %c0_i32_0 = arith.constant 0 : i32
    %c0_i32_1 = arith.constant 0 : i32
    return %arg0, %c0_i32, %c0_i32_0 : i32, i32, i32
  }
  func.func @transform_1(%arg0: i32, %arg1: i32) -> (i32, i32, i32) {
    %c0_i32 = arith.constant 0 : i32
    %c0_i32_0 = arith.constant 0 : i32
    %c0_i32_1 = arith.constant 0 : i32
    return %arg0, %c0_i32, %c0_i32_0 : i32, i32, i32
  }
  func.func @transform_2(%arg0: i32, %arg1: i32) -> (i32, i32) {
    %c0_i32 = arith.constant 0 : i32
    %c0_i32_0 = arith.constant 0 : i32
    %c0_i32_1 = arith.constant 0 : i32
    return %c0_i32, %c0_i32_0 : i32, i32
  }
  func.func @transform_3(%arg0: i32, %arg1: i32) -> (i32, i32) {
    %c0_i32 = arith.constant 0 : i32
    %c0_i32_0 = arith.constant 0 : i32
    %c0_i32_1 = arith.constant 0 : i32
    return %c0_i32, %c0_i32_0 : i32, i32
  }
  func.func @transform_4(%arg0: i32, %arg1: i32) -> (i32, i32) {
    %c0_i32 = arith.constant 0 : i32
    %c0_i32_0 = arith.constant 0 : i32
    %c0_i32_1 = arith.constant 0 : i32
    return %c0_i32, %c0_i32_0 : i32, i32
  }
  func.func @transform_5(%arg0: i32, %arg1: i32) -> (i32, i32) {
    %c0_i32 = arith.constant 0 : i32
    %c0_i32_0 = arith.constant 0 : i32
    %c0_i32_1 = arith.constant 0 : i32
    return %c0_i32, %c0_i32_0 : i32, i32
  }
  func.func @transform_6(%arg0: i32, %arg1: i32) -> (i32, i32) {
    %c0_i32 = arith.constant 0 : i32
    %c0_i32_0 = arith.constant 0 : i32
    %c0_i32_1 = arith.constant 0 : i32
    return %c0_i32, %c0_i32_0 : i32, i32
  }
  func.func @transform_7(%arg0: i32, %arg1: i32) -> (i32, i32) {
    %c0_i32 = arith.constant 0 : i32
    %c0_i32_0 = arith.constant 0 : i32
    %c0_i32_1 = arith.constant 0 : i32
    return %c0_i32, %c0_i32_0 : i32, i32
  }
  func.func @transform_8(%arg0: i32, %arg1: i32) -> (i32, i32) {
    %c0_i32 = arith.constant 0 : i32
    %c0_i32_0 = arith.constant 0 : i32
    %c0_i32_1 = arith.constant 0 : i32
    return %c0_i32, %c0_i32_0 : i32, i32
  }
  func.func @transform_9(%arg0: i32, %arg1: i32) -> (i32, i32) {
    %c0_i32 = arith.constant 0 : i32
    %c0_i32_0 = arith.constant 0 : i32
    %c0_i32_1 = arith.constant 0 : i32
    return %c0_i32, %c0_i32_0 : i32, i32
  }
  func.func @transform_10(%arg0: i32, %arg1: i32) -> (i32, i32) {
    %c0_i32 = arith.constant 0 : i32
    %c0_i32_0 = arith.constant 0 : i32
    %c0_i32_1 = arith.constant 0 : i32
    return %c0_i32, %c0_i32_0 : i32, i32
  }
  func.func @transform_11(%arg0: i32, %arg1: i32) -> (i32, i32) {
    %c0_i32 = arith.constant 0 : i32
    %c0_i32_0 = arith.constant 0 : i32
    %c0_i32_1 = arith.constant 0 : i32
    return %c0_i32, %c0_i32_0 : i32, i32
  }
  func.func @transform_12(%arg0: i32, %arg1: i32) -> (i32, i32) {
    %c0_i32 = arith.constant 0 : i32
    %c0_i32_0 = arith.constant 0 : i32
    %c0_i32_1 = arith.constant 0 : i32
    return %c0_i32, %c0_i32_0 : i32, i32
  }
  func.func @transform_13(%arg0: i32, %arg1: i32) -> (i32, i32) {
    %c0_i32 = arith.constant 0 : i32
    %c0_i32_0 = arith.constant 0 : i32
    %c0_i32_1 = arith.constant 0 : i32
    return %c0_i32, %c0_i32_0 : i32, i32
  }
  func.func @transform_14(%arg0: i32, %arg1: i32) -> (i32, i32) {
    %c0_i32 = arith.constant 0 : i32
    %c0_i32_0 = arith.constant 0 : i32
    %c0_i32_1 = arith.constant 0 : i32
    return %c0_i32, %c0_i32_0 : i32, i32
  }
  func.func @transform_15(%arg0: i32, %arg1: i32) -> (i32, i32) {
    %c0_i32 = arith.constant 0 : i32
    %c0_i32_0 = arith.constant 0 : i32
    %c0_i32_1 = arith.constant 0 : i32
    return %c0_i32, %c0_i32_0 : i32, i32
  }
  func.func @transform_16(%arg0: i32, %arg1: i32) -> (i32, i32) {
    %c0_i32 = arith.constant 0 : i32
    %c0_i32_0 = arith.constant 0 : i32
    %c0_i32_1 = arith.constant 0 : i32
    return %c0_i32, %c0_i32_0 : i32, i32
  }
  func.func @transform_17(%arg0: i32, %arg1: i32) -> (i32, i32) {
    %c0_i32 = arith.constant 0 : i32
    %c0_i32_0 = arith.constant 0 : i32
    %c0_i32_1 = arith.constant 0 : i32
    return %c0_i32, %c0_i32_0 : i32, i32
  }
  func.func @transform_18(%arg0: i32, %arg1: i32) -> (i32, i32) {
    %c0_i32 = arith.constant 0 : i32
    %c0_i32_0 = arith.constant 0 : i32
    %c0_i32_1 = arith.constant 0 : i32
    return %c0_i32, %c0_i32_0 : i32, i32
  }
  func.func @transform_19(%arg0: i32, %arg1: i32) -> (i32, i32) {
    %c0_i32 = arith.constant 0 : i32
    %c0_i32_0 = arith.constant 0 : i32
    %c0_i32_1 = arith.constant 0 : i32
    return %c0_i32, %c0_i32_0 : i32, i32
  }
  func.func @transform_20(%arg0: i32, %arg1: i32) -> (i32, i32) {
    %c0_i32 = arith.constant 0 : i32
    %c0_i32_0 = arith.constant 0 : i32
    %c0_i32_1 = arith.constant 0 : i32
    return %c0_i32, %c0_i32_0 : i32, i32
  }
  func.func @transform_21(%arg0: i32, %arg1: i32) -> (i32, i32) {
    %c0_i32 = arith.constant 0 : i32
    %c0_i32_0 = arith.constant 0 : i32
    %c0_i32_1 = arith.constant 0 : i32
    return %c0_i32, %c0_i32_0 : i32, i32
  }
  func.func @transform_22(%arg0: i32, %arg1: i32) -> (i32, i32) {
    %c0_i32 = arith.constant 0 : i32
    %c0_i32_0 = arith.constant 0 : i32
    %c0_i32_1 = arith.constant 0 : i32
    return %c0_i32, %c0_i32_0 : i32, i32
  }
  func.func @transform_23(%arg0: i32, %arg1: i32) -> (i32, i32) {
    %c0_i32 = arith.constant 0 : i32
    %c0_i32_0 = arith.constant 0 : i32
    %c0_i32_1 = arith.constant 0 : i32
    return %c0_i32, %c0_i32_0 : i32, i32
  }
  func.func @transform_24(%arg0: i32, %arg1: i32) -> (i32, i32) {
    %c0_i32 = arith.constant 0 : i32
    %c0_i32_0 = arith.constant 0 : i32
    %c0_i32_1 = arith.constant 0 : i32
    return %c0_i32, %c0_i32_0 : i32, i32
  }
  func.func @transform_25(%arg0: i32, %arg1: i32) -> (i32, i32) {
    %c0_i32 = arith.constant 0 : i32
    %c0_i32_0 = arith.constant 0 : i32
    %c0_i32_1 = arith.constant 0 : i32
    return %c0_i32, %c0_i32_0 : i32, i32
  }
  func.func @transform_26(%arg0: i32, %arg1: i32) -> (i32, i32) {
    %c0_i32 = arith.constant 0 : i32
    %c0_i32_0 = arith.constant 0 : i32
    %c0_i32_1 = arith.constant 0 : i32
    return %c0_i32, %c0_i32_0 : i32, i32
  }
  func.func @transform_27(%arg0: i32, %arg1: i32) -> (i32, i32) {
    %c0_i32 = arith.constant 0 : i32
    %c0_i32_0 = arith.constant 0 : i32
    %c0_i32_1 = arith.constant 0 : i32
    return %c0_i32, %c0_i32_0 : i32, i32
  }
  func.func @transform_28(%arg0: i32, %arg1: i32) -> (i32, i32, i32) {
    %c0_i32 = arith.constant 0 : i32
    %c0_i32_0 = arith.constant 0 : i32
    return %arg0, %arg1, %c0_i32 : i32, i32, i32
  }
}

module attributes {stable_mosaic.version = 11 : i64} {
  func.func @kernel(%arg0: i32, %arg1: i32, %arg2: memref<1x16x32xf32, #tpu.memory_space<vmem>>, %arg3: memref<1x8x16xbf16, #tpu.memory_space<vmem>>, %arg4: memref<1x32xf32, #tpu.memory_space<vmem>>, %arg5: memref<1x32xf32, #tpu.memory_space<vmem>>, %arg6: memref<32x16xbf16, #tpu.memory_space<vmem>>, %arg7: memref<1x16xf32, #tpu.memory_space<vmem>>, %arg8: memref<32x16xbf16, #tpu.memory_space<vmem>>, %arg9: memref<1x16xf32, #tpu.memory_space<vmem>>, %arg10: memref<32x16xbf16, #tpu.memory_space<vmem>>, %arg11: memref<1x16xf32, #tpu.memory_space<vmem>>, %arg12: memref<16x32xbf16, #tpu.memory_space<vmem>>, %arg13: memref<1x32xf32, #tpu.memory_space<vmem>>, %arg14: memref<1x32xf32, #tpu.memory_space<vmem>>, %arg15: memref<1x32xf32, #tpu.memory_space<vmem>>, %arg16: memref<32x16xbf16, #tpu.memory_space<vmem>>, %arg17: memref<1x16xf32, #tpu.memory_space<vmem>>, %arg18: memref<16x16xbf16, #tpu.memory_space<vmem>>, %arg19: memref<1x16xf32, #tpu.memory_space<vmem>>, %arg20: memref<16x16xbf16, #tpu.memory_space<vmem>>, %arg21: memref<1x16xf32, #tpu.memory_space<vmem>>, %arg22: memref<16x32xbf16, #tpu.memory_space<vmem>>, %arg23: memref<1x32xf32, #tpu.memory_space<vmem>>, %arg24: memref<1x32xf32, #tpu.memory_space<vmem>>, %arg25: memref<1x32xf32, #tpu.memory_space<vmem>>, %arg26: memref<32x128xbf16, #tpu.memory_space<vmem>>, %arg27: memref<1x128xf32, #tpu.memory_space<vmem>>, %arg28: memref<128x32xbf16, #tpu.memory_space<vmem>>, %arg29: memref<1x32xf32, #tpu.memory_space<vmem>>, %arg30: memref<1x8x32xf32, #tpu.memory_space<vmem>>, %arg31: memref<16x16xbf16, #tpu.memory_space<vmem>>, %arg32: memref<16x16xbf16, #tpu.memory_space<vmem>>, %arg33: memref<8x16xbf16, #tpu.memory_space<vmem>>, %arg34: memref<8x16xbf16, #tpu.memory_space<vmem>>) attributes {dimension_semantics = [#tpu.dimension_semantics<parallel>, #tpu.dimension_semantics<arbitrary>], iteration_bounds = array<i64: 2, 2>, scalar_prefetch = 0 : i64, scratch_operands = 4 : i64, tpu.core_type = #tpu.core_type<tc>, window_params = [{transform_indices = @transform_0, window_bounds = array<i64: 1, 16, 32>}, {transform_indices = @transform_1, window_bounds = array<i64: 1, 8, 16>}, {pipeline_mode = #tpu.pipeline_mode<synchronous>, transform_indices = @transform_2, window_bounds = array<i64: 1, 32>}, {pipeline_mode = #tpu.pipeline_mode<synchronous>, transform_indices = @transform_3, window_bounds = array<i64: 1, 32>}, {pipeline_mode = #tpu.pipeline_mode<synchronous>, transform_indices = @transform_4, window_bounds = array<i64: 32, 16>}, {pipeline_mode = #tpu.pipeline_mode<synchronous>, transform_indices = @transform_5, window_bounds = array<i64: 1, 16>}, {pipeline_mode = #tpu.pipeline_mode<synchronous>, transform_indices = @transform_6, window_bounds = array<i64: 32, 16>}, {pipeline_mode = #tpu.pipeline_mode<synchronous>, transform_indices = @transform_7, window_bounds = array<i64: 1, 16>}, {pipeline_mode = #tpu.pipeline_mode<synchronous>, transform_indices = @transform_8, window_bounds = array<i64: 32, 16>}, {pipeline_mode = #tpu.pipeline_mode<synchronous>, transform_indices = @transform_9, window_bounds = array<i64: 1, 16>}, {pipeline_mode = #tpu.pipeline_mode<synchronous>, transform_indices = @transform_10, window_bounds = array<i64: 16, 32>}, {pipeline_mode = #tpu.pipeline_mode<synchronous>, transform_indices = @transform_11, window_bounds = array<i64: 1, 32>}, {pipeline_mode = #tpu.pipeline_mode<synchronous>, transform_indices = @transform_12, window_bounds = array<i64: 1, 32>}, {pipeline_mode = #tpu.pipeline_mode<synchronous>, transform_indices = @transform_13, window_bounds = array<i64: 1, 32>}, {pipeline_mode = #tpu.pipeline_mode<synchronous>, transform_indices = @transform_14, window_bounds = array<i64: 32, 16>}, {pipeline_mode = #tpu.pipeline_mode<synchronous>, transform_indices = @transform_15, window_bounds = array<i64: 1, 16>}, {pipeline_mode = #tpu.pipeline_mode<synchronous>, transform_indices = @transform_16, window_bounds = array<i64: 16, 16>}, {pipeline_mode = #tpu.pipeline_mode<synchronous>, transform_indices = @transform_17, window_bounds = array<i64: 1, 16>}, {pipeline_mode = #tpu.pipeline_mode<synchronous>, transform_indices = @transform_18, window_bounds = array<i64: 16, 16>}, {pipeline_mode = #tpu.pipeline_mode<synchronous>, transform_indices = @transform_19, window_bounds = array<i64: 1, 16>}, {pipeline_mode = #tpu.pipeline_mode<synchronous>, transform_indices = @transform_20, window_bounds = array<i64: 16, 32>}, {pipeline_mode = #tpu.pipeline_mode<synchronous>, transform_indices = @transform_21, window_bounds = array<i64: 1, 32>}, {pipeline_mode = #tpu.pipeline_mode<synchronous>, transform_indices = @transform_22, window_bounds = array<i64: 1, 32>}, {pipeline_mode = #tpu.pipeline_mode<synchronous>, transform_indices = @transform_23, window_bounds = array<i64: 1, 32>}, {pipeline_mode = #tpu.pipeline_mode<synchronous>, transform_indices = @transform_24, window_bounds = array<i64: 32, 128>}, {pipeline_mode = #tpu.pipeline_mode<synchronous>, transform_indices = @transform_25, window_bounds = array<i64: 1, 128>}, {pipeline_mode = #tpu.pipeline_mode<synchronous>, transform_indices = @transform_26, window_bounds = array<i64: 128, 32>}, {pipeline_mode = #tpu.pipeline_mode<synchronous>, transform_indices = @transform_27, window_bounds = array<i64: 1, 32>}, {transform_indices = @transform_28, window_bounds = array<i64: 1, 8, 32>}]} {
    %c0_i32 = arith.constant 0 : i32
    %0 = arith.cmpi eq, %arg1, %c0_i32 : i32
    %1 = arith.extui %0 : i1 to i32
    %c0_i32_0 = arith.constant 0 : i32
    %2 = arith.cmpi ne, %1, %c0_i32_0 : i32
    scf.if %2 {
      %c0_87 = arith.constant 0 : index
      %c0_88 = arith.constant 0 : index
      %c0_89 = arith.constant 0 : index
      %198 = vector.load %arg2[%c0_87, %c0_88, %c0_89] : memref<1x16x32xf32, #tpu.memory_space<vmem>>, vector<1x16x32xf32>
      %199 = vector.shape_cast %198 : vector<1x16x32xf32> to vector<16x32xf32>
      %c0_90 = arith.constant 0 : index
      %c0_91 = arith.constant 0 : index
      %200 = vector.load %arg4[%c0_90, %c0_91] : memref<1x32xf32, #tpu.memory_space<vmem>>, vector<1x32xf32>
      %c0_92 = arith.constant 0 : index
      %c0_93 = arith.constant 0 : index
      %201 = vector.load %arg5[%c0_92, %c0_93] : memref<1x32xf32, #tpu.memory_space<vmem>>, vector<1x32xf32>
      %cst_94 = arith.constant dense<0.000000e+00> : vector<16xf32>
      %202 = vector.multi_reduction <add>, %199, %cst_94 [1] : vector<16x32xf32> to vector<16xf32>
      %203 = vector.shape_cast %202 : vector<16xf32> to vector<16x1xf32>
      %cst_95 = arith.constant 3.200000e+01 : f32
      %204 = vector.broadcast %cst_95 : f32 to vector<16x1xf32>
      %205 = arith.divf %203, %204 : vector<16x1xf32>
      %206 = vector.broadcast %205 : vector<16x1xf32> to vector<16x32xf32>
      %207 = arith.subf %199, %206 : vector<16x32xf32>
      %208 = arith.mulf %207, %207 : vector<16x32xf32>
      %cst_96 = arith.constant dense<0.000000e+00> : vector<16xf32>
      %209 = vector.multi_reduction <add>, %208, %cst_96 [1] : vector<16x32xf32> to vector<16xf32>
      %210 = vector.shape_cast %209 : vector<16xf32> to vector<16x1xf32>
      %cst_97 = arith.constant 3.200000e+01 : f32
      %211 = vector.broadcast %cst_97 : f32 to vector<16x1xf32>
      %212 = arith.divf %210, %211 : vector<16x1xf32>
      %213 = vector.broadcast %205 : vector<16x1xf32> to vector<16x32xf32>
      %214 = arith.subf %199, %213 : vector<16x32xf32>
      %cst_98 = arith.constant 9.99999974E-6 : f32
      %215 = vector.broadcast %cst_98 : f32 to vector<16x1xf32>
      %216 = arith.addf %212, %215 : vector<16x1xf32>
      %217 = math.rsqrt %216 : vector<16x1xf32>
      %218 = vector.broadcast %217 : vector<16x1xf32> to vector<16x32xf32>
      %219 = arith.mulf %214, %218 : vector<16x32xf32>
      %220 = vector.broadcast %200 : vector<1x32xf32> to vector<16x32xf32>
      %221 = arith.mulf %219, %220 : vector<16x32xf32>
      %222 = vector.broadcast %201 : vector<1x32xf32> to vector<16x32xf32>
      %223 = arith.addf %221, %222 : vector<16x32xf32>
      %224 = arith.truncf %223 : vector<16x32xf32> to vector<16x32xbf16>
      %c0_99 = arith.constant 0 : index
      %c0_100 = arith.constant 0 : index
      %225 = vector.load %arg8[%c0_99, %c0_100] : memref<32x16xbf16, #tpu.memory_space<vmem>>, vector<32x16xbf16>
      %cst_101 = arith.constant dense<0.000000e+00> : vector<16x16xf32>
      %226 = tpu.matmul %224, %225, %cst_101 {dimension_numbers = #tpu.dot_dimension_numbers<[1], [0], [0], [1], [0, 0, 1, 1], [], []>} : vector<16x32xbf16>, vector<32x16xbf16>, vector<16x16xf32> -> vector<16x16xf32>
      %c0_102 = arith.constant 0 : index
      %c0_103 = arith.constant 0 : index
      %227 = vector.load %arg9[%c0_102, %c0_103] : memref<1x16xf32, #tpu.memory_space<vmem>>, vector<1x16xf32>
      %228 = vector.broadcast %227 : vector<1x16xf32> to vector<16x16xf32>
      %229 = arith.addf %226, %228 : vector<16x16xf32>
      %230 = arith.truncf %229 : vector<16x16xf32> to vector<16x16xbf16>
      %c0_104 = arith.constant 0 : index
      %c0_105 = arith.constant 0 : index
      %231 = vector.load %arg31[%c0_104, %c0_105] : memref<16x16xbf16, #tpu.memory_space<vmem>>, vector<16x16xbf16>
      tpu.vector_store %arg31[%c0_104, %c0_105], %230 {strides = array<i32>} : memref<16x16xbf16, #tpu.memory_space<vmem>>, vector<16x16xbf16>,
      %c0_106 = arith.constant 0 : index
      %c0_107 = arith.constant 0 : index
      %232 = vector.load %arg10[%c0_106, %c0_107] : memref<32x16xbf16, #tpu.memory_space<vmem>>, vector<32x16xbf16>
      %cst_108 = arith.constant dense<0.000000e+00> : vector<16x16xf32>
      %233 = tpu.matmul %224, %232, %cst_108 {dimension_numbers = #tpu.dot_dimension_numbers<[1], [0], [0], [1], [0, 0, 1, 1], [], []>} : vector<16x32xbf16>, vector<32x16xbf16>, vector<16x16xf32> -> vector<16x16xf32>
      %c0_109 = arith.constant 0 : index
      %c0_110 = arith.constant 0 : index
      %234 = vector.load %arg11[%c0_109, %c0_110] : memref<1x16xf32, #tpu.memory_space<vmem>>, vector<1x16xf32>
      %235 = vector.broadcast %234 : vector<1x16xf32> to vector<16x16xf32>
      %236 = arith.addf %233, %235 : vector<16x16xf32>
      %237 = arith.truncf %236 : vector<16x16xf32> to vector<16x16xbf16>
      %c0_111 = arith.constant 0 : index
      %c0_112 = arith.constant 0 : index
      %238 = vector.load %arg32[%c0_111, %c0_112] : memref<16x16xbf16, #tpu.memory_space<vmem>>, vector<16x16xbf16>
      tpu.vector_store %arg32[%c0_111, %c0_112], %237 {strides = array<i32>} : memref<16x16xbf16, #tpu.memory_space<vmem>>, vector<16x16xbf16>,
      %c0_113 = arith.constant 0 : index
      %c0_114 = arith.constant 0 : index
      %c0_115 = arith.constant 0 : index
      %239 = vector.load %arg3[%c0_113, %c0_114, %c0_115] : memref<1x8x16xbf16, #tpu.memory_space<vmem>>, vector<1x8x16xbf16>
      %240 = vector.shape_cast %239 : vector<1x8x16xbf16> to vector<8x16xbf16>
      %c0_116 = arith.constant 0 : index
      %c0_117 = arith.constant 0 : index
      %241 = vector.load %arg18[%c0_116, %c0_117] : memref<16x16xbf16, #tpu.memory_space<vmem>>, vector<16x16xbf16>
      %cst_118 = arith.constant dense<0.000000e+00> : vector<8x16xf32>
      %242 = tpu.matmul %240, %241, %cst_118 {dimension_numbers = #tpu.dot_dimension_numbers<[1], [0], [0], [1], [0, 0, 1, 1], [], []>} : vector<8x16xbf16>, vector<16x16xbf16>, vector<8x16xf32> -> vector<8x16xf32>
      %c0_119 = arith.constant 0 : index
      %c0_120 = arith.constant 0 : index
      %243 = vector.load %arg19[%c0_119, %c0_120] : memref<1x16xf32, #tpu.memory_space<vmem>>, vector<1x16xf32>
      %244 = vector.broadcast %243 : vector<1x16xf32> to vector<8x16xf32>
      %245 = arith.addf %242, %244 : vector<8x16xf32>
      %246 = arith.truncf %245 : vector<8x16xf32> to vector<8x16xbf16>
      %c0_121 = arith.constant 0 : index
      %c0_122 = arith.constant 0 : index
      %247 = vector.load %arg33[%c0_121, %c0_122] : memref<8x16xbf16, #tpu.memory_space<vmem>>, vector<8x16xbf16>
      tpu.vector_store %arg33[%c0_121, %c0_122], %246 {strides = array<i32>} : memref<8x16xbf16, #tpu.memory_space<vmem>>, vector<8x16xbf16>,
      %c0_123 = arith.constant 0 : index
      %c0_124 = arith.constant 0 : index
      %248 = vector.load %arg20[%c0_123, %c0_124] : memref<16x16xbf16, #tpu.memory_space<vmem>>, vector<16x16xbf16>
      %cst_125 = arith.constant dense<0.000000e+00> : vector<8x16xf32>
      %249 = tpu.matmul %240, %248, %cst_125 {dimension_numbers = #tpu.dot_dimension_numbers<[1], [0], [0], [1], [0, 0, 1, 1], [], []>} : vector<8x16xbf16>, vector<16x16xbf16>, vector<8x16xf32> -> vector<8x16xf32>
      %c0_126 = arith.constant 0 : index
      %c0_127 = arith.constant 0 : index
      %250 = vector.load %arg21[%c0_126, %c0_127] : memref<1x16xf32, #tpu.memory_space<vmem>>, vector<1x16xf32>
      %251 = vector.broadcast %250 : vector<1x16xf32> to vector<8x16xf32>
      %252 = arith.addf %249, %251 : vector<8x16xf32>
      %253 = arith.truncf %252 : vector<8x16xf32> to vector<8x16xbf16>
      %c0_128 = arith.constant 0 : index
      %c0_129 = arith.constant 0 : index
      %254 = vector.load %arg34[%c0_128, %c0_129] : memref<8x16xbf16, #tpu.memory_space<vmem>>, vector<8x16xbf16>
      tpu.vector_store %arg34[%c0_128, %c0_129], %253 {strides = array<i32>} : memref<8x16xbf16, #tpu.memory_space<vmem>>, vector<8x16xbf16>,
    } else {
    }
    %c8_i32 = arith.constant 8 : i32
    %3 = arith.muli %arg1, %c8_i32 : i32
    %4 = tpu.assume_multiple %3, 8 : i32
    %c0 = arith.constant 0 : index
    %5 = arith.index_cast %4 : i32 to index
    %c0_1 = arith.constant 0 : index
    %6 = vector.load %arg2[%c0, %5, %c0_1] : memref<1x16x32xf32, #tpu.memory_space<vmem>>, vector<1x8x32xf32>
    %7 = vector.shape_cast %6 : vector<1x8x32xf32> to vector<8x32xf32>
    %c0_2 = arith.constant 0 : index
    %c0_3 = arith.constant 0 : index
    %8 = vector.load %arg4[%c0_2, %c0_3] : memref<1x32xf32, #tpu.memory_space<vmem>>, vector<1x32xf32>
    %c0_4 = arith.constant 0 : index
    %c0_5 = arith.constant 0 : index
    %9 = vector.load %arg5[%c0_4, %c0_5] : memref<1x32xf32, #tpu.memory_space<vmem>>, vector<1x32xf32>
    %cst = arith.constant dense<0.000000e+00> : vector<8xf32>
    %10 = vector.multi_reduction <add>, %7, %cst [1] : vector<8x32xf32> to vector<8xf32>
    %11 = vector.shape_cast %10 : vector<8xf32> to vector<8x1xf32>
    %cst_6 = arith.constant 3.200000e+01 : f32
    %12 = vector.broadcast %cst_6 : f32 to vector<8x1xf32>
    %13 = arith.divf %11, %12 : vector<8x1xf32>
    %14 = vector.broadcast %13 : vector<8x1xf32> to vector<8x32xf32>
    %15 = arith.subf %7, %14 : vector<8x32xf32>
    %16 = arith.mulf %15, %15 : vector<8x32xf32>
    %cst_7 = arith.constant dense<0.000000e+00> : vector<8xf32>
    %17 = vector.multi_reduction <add>, %16, %cst_7 [1] : vector<8x32xf32> to vector<8xf32>
    %18 = vector.shape_cast %17 : vector<8xf32> to vector<8x1xf32>
    %cst_8 = arith.constant 3.200000e+01 : f32
    %19 = vector.broadcast %cst_8 : f32 to vector<8x1xf32>
    %20 = arith.divf %18, %19 : vector<8x1xf32>
    %21 = vector.broadcast %13 : vector<8x1xf32> to vector<8x32xf32>
    %22 = arith.subf %7, %21 : vector<8x32xf32>
    %cst_9 = arith.constant 9.99999974E-6 : f32
    %23 = vector.broadcast %cst_9 : f32 to vector<8x1xf32>
    %24 = arith.addf %20, %23 : vector<8x1xf32>
    %25 = math.rsqrt %24 : vector<8x1xf32>
    %26 = vector.broadcast %25 : vector<8x1xf32> to vector<8x32xf32>
    %27 = arith.mulf %22, %26 : vector<8x32xf32>
    %28 = vector.broadcast %8 : vector<1x32xf32> to vector<8x32xf32>
    %29 = arith.mulf %27, %28 : vector<8x32xf32>
    %30 = vector.broadcast %9 : vector<1x32xf32> to vector<8x32xf32>
    %31 = arith.addf %29, %30 : vector<8x32xf32>
    %c0_10 = arith.constant 0 : index
    %c0_11 = arith.constant 0 : index
    %32 = vector.load %arg31[%c0_10, %c0_11] : memref<16x16xbf16, #tpu.memory_space<vmem>>, vector<16x16xbf16>
    %c0_12 = arith.constant 0 : index
    %c0_13 = arith.constant 0 : index
    %33 = vector.load %arg32[%c0_12, %c0_13] : memref<16x16xbf16, #tpu.memory_space<vmem>>, vector<16x16xbf16>
    %34 = arith.truncf %31 : vector<8x32xf32> to vector<8x32xbf16>
    %c0_14 = arith.constant 0 : index
    %c0_15 = arith.constant 0 : index
    %35 = vector.load %arg6[%c0_14, %c0_15] : memref<32x16xbf16, #tpu.memory_space<vmem>>, vector<32x16xbf16>
    %cst_16 = arith.constant dense<0.000000e+00> : vector<8x16xf32>
    %36 = tpu.matmul %34, %35, %cst_16 {dimension_numbers = #tpu.dot_dimension_numbers<[1], [0], [0], [1], [0, 0, 1, 1], [], []>} : vector<8x32xbf16>, vector<32x16xbf16>, vector<8x16xf32> -> vector<8x16xf32>
    %c0_17 = arith.constant 0 : index
    %c0_18 = arith.constant 0 : index
    %37 = vector.load %arg7[%c0_17, %c0_18] : memref<1x16xf32, #tpu.memory_space<vmem>>, vector<1x16xf32>
    %38 = vector.broadcast %37 : vector<1x16xf32> to vector<8x16xf32>
    %39 = arith.addf %36, %38 : vector<8x16xf32>
    %40 = arith.truncf %39 : vector<8x16xf32> to vector<8x16xbf16>
    %41 = vector.extract_strided_slice %40 {offsets = [0, 0], sizes = [8, 8], strides = [1, 1]} : vector<8x16xbf16> to vector<8x8xbf16>
    %42 = vector.extract_strided_slice %32 {offsets = [0, 0], sizes = [16, 8], strides = [1, 1]} : vector<16x16xbf16> to vector<16x8xbf16>
    %43 = vector.extract_strided_slice %33 {offsets = [0, 0], sizes = [16, 8], strides = [1, 1]} : vector<16x16xbf16> to vector<16x8xbf16>
    %cst_19 = arith.constant dense<0.000000e+00> : vector<8x16xf32>
    %44 = tpu.matmul %41, %42, %cst_19 {dimension_numbers = #tpu.dot_dimension_numbers<[1], [1], [0], [0], [0, 0, 1, 0], [], []>} : vector<8x8xbf16>, vector<16x8xbf16>, vector<8x16xf32> -> vector<8x16xf32>
    %cst_20 = arith.constant dense<0xFF800000> : vector<8xf32>
    %45 = vector.multi_reduction <maximumf>, %44, %cst_20 [1] : vector<8x16xf32> to vector<8xf32>
    %46 = vector.shape_cast %45 : vector<8xf32> to vector<8x1xf32>
    %47 = vector.broadcast %46 : vector<8x1xf32> to vector<8x16xf32>
    %48 = arith.subf %44, %47 : vector<8x16xf32>
    %49 = math.exp %48 : vector<8x16xf32>
    %cst_21 = arith.constant dense<0.000000e+00> : vector<8xf32>
    %50 = vector.multi_reduction <add>, %49, %cst_21 [1] : vector<8x16xf32> to vector<8xf32>
    %51 = vector.shape_cast %50 : vector<8xf32> to vector<8x1xf32>
    %52 = tpu.reciprocal %51 {approx = true} : vector<8x1xf32> -> vector<8x1xf32>
    %53 = arith.truncf %49 : vector<8x16xf32> to vector<8x16xbf16>
    %cst_22 = arith.constant dense<0.000000e+00> : vector<8x8xf32>
    %54 = tpu.matmul %53, %43, %cst_22 {dimension_numbers = #tpu.dot_dimension_numbers<[1], [0], [0], [1], [0, 0, 1, 1], [], []>} : vector<8x16xbf16>, vector<16x8xbf16>, vector<8x8xf32> -> vector<8x8xf32>
    %55 = vector.broadcast %52 : vector<8x1xf32> to vector<8x8xf32>
    %56 = arith.mulf %54, %55 : vector<8x8xf32>
    %57 = vector.extract_strided_slice %40 {offsets = [0, 8], sizes = [8, 8], strides = [1, 1]} : vector<8x16xbf16> to vector<8x8xbf16>
    %58 = vector.extract_strided_slice %32 {offsets = [0, 8], sizes = [16, 8], strides = [1, 1]} : vector<16x16xbf16> to vector<16x8xbf16>
    %59 = vector.extract_strided_slice %33 {offsets = [0, 8], sizes = [16, 8], strides = [1, 1]} : vector<16x16xbf16> to vector<16x8xbf16>
    %cst_23 = arith.constant dense<0.000000e+00> : vector<8x16xf32>
    %60 = tpu.matmul %57, %58, %cst_23 {dimension_numbers = #tpu.dot_dimension_numbers<[1], [1], [0], [0], [0, 0, 1, 0], [], []>} : vector<8x8xbf16>, vector<16x8xbf16>, vector<8x16xf32> -> vector<8x16xf32>
    %cst_24 = arith.constant dense<0xFF800000> : vector<8xf32>
    %61 = vector.multi_reduction <maximumf>, %60, %cst_24 [1] : vector<8x16xf32> to vector<8xf32>
    %62 = vector.shape_cast %61 : vector<8xf32> to vector<8x1xf32>
    %63 = vector.broadcast %62 : vector<8x1xf32> to vector<8x16xf32>
    %64 = arith.subf %60, %63 : vector<8x16xf32>
    %65 = math.exp %64 : vector<8x16xf32>
    %cst_25 = arith.constant dense<0.000000e+00> : vector<8xf32>
    %66 = vector.multi_reduction <add>, %65, %cst_25 [1] : vector<8x16xf32> to vector<8xf32>
    %67 = vector.shape_cast %66 : vector<8xf32> to vector<8x1xf32>
    %68 = tpu.reciprocal %67 {approx = true} : vector<8x1xf32> -> vector<8x1xf32>
    %69 = arith.truncf %65 : vector<8x16xf32> to vector<8x16xbf16>
    %cst_26 = arith.constant dense<0.000000e+00> : vector<8x8xf32>
    %70 = tpu.matmul %69, %59, %cst_26 {dimension_numbers = #tpu.dot_dimension_numbers<[1], [0], [0], [1], [0, 0, 1, 1], [], []>} : vector<8x16xbf16>, vector<16x8xbf16>, vector<8x8xf32> -> vector<8x8xf32>
    %71 = vector.broadcast %68 : vector<8x1xf32> to vector<8x8xf32>
    %72 = arith.mulf %70, %71 : vector<8x8xf32>
    %73 = tpu.concatenate %56, %72 in 1 : vector<8x8xf32>, vector<8x8xf32> -> vector<8x16xf32>
    %74 = arith.truncf %73 : vector<8x16xf32> to vector<8x16xbf16>
    %c0_27 = arith.constant 0 : index
    %c0_28 = arith.constant 0 : index
    %75 = vector.load %arg12[%c0_27, %c0_28] : memref<16x32xbf16, #tpu.memory_space<vmem>>, vector<16x32xbf16>
    %cst_29 = arith.constant dense<0.000000e+00> : vector<8x32xf32>
    %76 = tpu.matmul %74, %75, %cst_29 {dimension_numbers = #tpu.dot_dimension_numbers<[1], [0], [0], [1], [0, 0, 1, 1], [], []>} : vector<8x16xbf16>, vector<16x32xbf16>, vector<8x32xf32> -> vector<8x32xf32>
    %c0_30 = arith.constant 0 : index
    %c0_31 = arith.constant 0 : index
    %77 = vector.load %arg13[%c0_30, %c0_31] : memref<1x32xf32, #tpu.memory_space<vmem>>, vector<1x32xf32>
    %78 = vector.broadcast %77 : vector<1x32xf32> to vector<8x32xf32>
    %79 = arith.addf %76, %78 : vector<8x32xf32>
    %80 = arith.addf %7, %79 : vector<8x32xf32>
    %c0_32 = arith.constant 0 : index
    %c0_33 = arith.constant 0 : index
    %81 = vector.load %arg14[%c0_32, %c0_33] : memref<1x32xf32, #tpu.memory_space<vmem>>, vector<1x32xf32>
    %c0_34 = arith.constant 0 : index
    %c0_35 = arith.constant 0 : index
    %82 = vector.load %arg15[%c0_34, %c0_35] : memref<1x32xf32, #tpu.memory_space<vmem>>, vector<1x32xf32>
    %cst_36 = arith.constant dense<0.000000e+00> : vector<8xf32>
    %83 = vector.multi_reduction <add>, %80, %cst_36 [1] : vector<8x32xf32> to vector<8xf32>
    %84 = vector.shape_cast %83 : vector<8xf32> to vector<8x1xf32>
    %cst_37 = arith.constant 3.200000e+01 : f32
    %85 = vector.broadcast %cst_37 : f32 to vector<8x1xf32>
    %86 = arith.divf %84, %85 : vector<8x1xf32>
    %87 = vector.broadcast %86 : vector<8x1xf32> to vector<8x32xf32>
    %88 = arith.subf %80, %87 : vector<8x32xf32>
    %89 = arith.mulf %88, %88 : vector<8x32xf32>
    %cst_38 = arith.constant dense<0.000000e+00> : vector<8xf32>
    %90 = vector.multi_reduction <add>, %89, %cst_38 [1] : vector<8x32xf32> to vector<8xf32>
    %91 = vector.shape_cast %90 : vector<8xf32> to vector<8x1xf32>
    %cst_39 = arith.constant 3.200000e+01 : f32
    %92 = vector.broadcast %cst_39 : f32 to vector<8x1xf32>
    %93 = arith.divf %91, %92 : vector<8x1xf32>
    %94 = vector.broadcast %86 : vector<8x1xf32> to vector<8x32xf32>
    %95 = arith.subf %80, %94 : vector<8x32xf32>
    %cst_40 = arith.constant 9.99999974E-6 : f32
    %96 = vector.broadcast %cst_40 : f32 to vector<8x1xf32>
    %97 = arith.addf %93, %96 : vector<8x1xf32>
    %98 = math.rsqrt %97 : vector<8x1xf32>
    %99 = vector.broadcast %98 : vector<8x1xf32> to vector<8x32xf32>
    %100 = arith.mulf %95, %99 : vector<8x32xf32>
    %101 = vector.broadcast %81 : vector<1x32xf32> to vector<8x32xf32>
    %102 = arith.mulf %100, %101 : vector<8x32xf32>
    %103 = vector.broadcast %82 : vector<1x32xf32> to vector<8x32xf32>
    %104 = arith.addf %102, %103 : vector<8x32xf32>
    %c0_41 = arith.constant 0 : index
    %c0_42 = arith.constant 0 : index
    %105 = vector.load %arg33[%c0_41, %c0_42] : memref<8x16xbf16, #tpu.memory_space<vmem>>, vector<8x16xbf16>
    %c0_43 = arith.constant 0 : index
    %c0_44 = arith.constant 0 : index
    %106 = vector.load %arg34[%c0_43, %c0_44] : memref<8x16xbf16, #tpu.memory_space<vmem>>, vector<8x16xbf16>
    %107 = arith.truncf %104 : vector<8x32xf32> to vector<8x32xbf16>
    %c0_45 = arith.constant 0 : index
    %c0_46 = arith.constant 0 : index
    %108 = vector.load %arg16[%c0_45, %c0_46] : memref<32x16xbf16, #tpu.memory_space<vmem>>, vector<32x16xbf16>
    %cst_47 = arith.constant dense<0.000000e+00> : vector<8x16xf32>
    %109 = tpu.matmul %107, %108, %cst_47 {dimension_numbers = #tpu.dot_dimension_numbers<[1], [0], [0], [1], [0, 0, 1, 1], [], []>} : vector<8x32xbf16>, vector<32x16xbf16>, vector<8x16xf32> -> vector<8x16xf32>
    %c0_48 = arith.constant 0 : index
    %c0_49 = arith.constant 0 : index
    %110 = vector.load %arg17[%c0_48, %c0_49] : memref<1x16xf32, #tpu.memory_space<vmem>>, vector<1x16xf32>
    %111 = vector.broadcast %110 : vector<1x16xf32> to vector<8x16xf32>
    %112 = arith.addf %109, %111 : vector<8x16xf32>
    %113 = arith.truncf %112 : vector<8x16xf32> to vector<8x16xbf16>
    %114 = vector.extract_strided_slice %113 {offsets = [0, 0], sizes = [8, 8], strides = [1, 1]} : vector<8x16xbf16> to vector<8x8xbf16>
    %115 = vector.extract_strided_slice %105 {offsets = [0, 0], sizes = [8, 8], strides = [1, 1]} : vector<8x16xbf16> to vector<8x8xbf16>
    %116 = vector.extract_strided_slice %106 {offsets = [0, 0], sizes = [8, 8], strides = [1, 1]} : vector<8x16xbf16> to vector<8x8xbf16>
    %cst_50 = arith.constant dense<0.000000e+00> : vector<8x8xf32>
    %117 = tpu.matmul %114, %115, %cst_50 {dimension_numbers = #tpu.dot_dimension_numbers<[1], [1], [0], [0], [0, 0, 1, 0], [], []>} : vector<8x8xbf16>, vector<8x8xbf16>, vector<8x8xf32> -> vector<8x8xf32>
    %cst_51 = arith.constant dense<0xFF800000> : vector<8xf32>
    %118 = vector.multi_reduction <maximumf>, %117, %cst_51 [1] : vector<8x8xf32> to vector<8xf32>
    %119 = vector.shape_cast %118 : vector<8xf32> to vector<8x1xf32>
    %120 = vector.broadcast %119 : vector<8x1xf32> to vector<8x8xf32>
    %121 = arith.subf %117, %120 : vector<8x8xf32>
    %122 = math.exp %121 : vector<8x8xf32>
    %cst_52 = arith.constant dense<0.000000e+00> : vector<8xf32>
    %123 = vector.multi_reduction <add>, %122, %cst_52 [1] : vector<8x8xf32> to vector<8xf32>
    %124 = vector.shape_cast %123 : vector<8xf32> to vector<8x1xf32>
    %125 = tpu.reciprocal %124 {approx = true} : vector<8x1xf32> -> vector<8x1xf32>
    %126 = arith.truncf %122 : vector<8x8xf32> to vector<8x8xbf16>
    %cst_53 = arith.constant dense<0.000000e+00> : vector<8x8xf32>
    %127 = tpu.matmul %126, %116, %cst_53 {dimension_numbers = #tpu.dot_dimension_numbers<[1], [0], [0], [1], [0, 0, 1, 1], [], []>} : vector<8x8xbf16>, vector<8x8xbf16>, vector<8x8xf32> -> vector<8x8xf32>
    %128 = vector.broadcast %125 : vector<8x1xf32> to vector<8x8xf32>
    %129 = arith.mulf %127, %128 : vector<8x8xf32>
    %130 = vector.extract_strided_slice %113 {offsets = [0, 8], sizes = [8, 8], strides = [1, 1]} : vector<8x16xbf16> to vector<8x8xbf16>
    %131 = vector.extract_strided_slice %105 {offsets = [0, 8], sizes = [8, 8], strides = [1, 1]} : vector<8x16xbf16> to vector<8x8xbf16>
    %132 = vector.extract_strided_slice %106 {offsets = [0, 8], sizes = [8, 8], strides = [1, 1]} : vector<8x16xbf16> to vector<8x8xbf16>
    %cst_54 = arith.constant dense<0.000000e+00> : vector<8x8xf32>
    %133 = tpu.matmul %130, %131, %cst_54 {dimension_numbers = #tpu.dot_dimension_numbers<[1], [1], [0], [0], [0, 0, 1, 0], [], []>} : vector<8x8xbf16>, vector<8x8xbf16>, vector<8x8xf32> -> vector<8x8xf32>
    %cst_55 = arith.constant dense<0xFF800000> : vector<8xf32>
    %134 = vector.multi_reduction <maximumf>, %133, %cst_55 [1] : vector<8x8xf32> to vector<8xf32>
    %135 = vector.shape_cast %134 : vector<8xf32> to vector<8x1xf32>
    %136 = vector.broadcast %135 : vector<8x1xf32> to vector<8x8xf32>
    %137 = arith.subf %133, %136 : vector<8x8xf32>
    %138 = math.exp %137 : vector<8x8xf32>
    %cst_56 = arith.constant dense<0.000000e+00> : vector<8xf32>
    %139 = vector.multi_reduction <add>, %138, %cst_56 [1] : vector<8x8xf32> to vector<8xf32>
    %140 = vector.shape_cast %139 : vector<8xf32> to vector<8x1xf32>
    %141 = tpu.reciprocal %140 {approx = true} : vector<8x1xf32> -> vector<8x1xf32>
    %142 = arith.truncf %138 : vector<8x8xf32> to vector<8x8xbf16>
    %cst_57 = arith.constant dense<0.000000e+00> : vector<8x8xf32>
    %143 = tpu.matmul %142, %132, %cst_57 {dimension_numbers = #tpu.dot_dimension_numbers<[1], [0], [0], [1], [0, 0, 1, 1], [], []>} : vector<8x8xbf16>, vector<8x8xbf16>, vector<8x8xf32> -> vector<8x8xf32>
    %144 = vector.broadcast %141 : vector<8x1xf32> to vector<8x8xf32>
    %145 = arith.mulf %143, %144 : vector<8x8xf32>
    %146 = tpu.concatenate %129, %145 in 1 : vector<8x8xf32>, vector<8x8xf32> -> vector<8x16xf32>
    %147 = arith.truncf %146 : vector<8x16xf32> to vector<8x16xbf16>
    %c0_58 = arith.constant 0 : index
    %c0_59 = arith.constant 0 : index
    %148 = vector.load %arg22[%c0_58, %c0_59] : memref<16x32xbf16, #tpu.memory_space<vmem>>, vector<16x32xbf16>
    %cst_60 = arith.constant dense<0.000000e+00> : vector<8x32xf32>
    %149 = tpu.matmul %147, %148, %cst_60 {dimension_numbers = #tpu.dot_dimension_numbers<[1], [0], [0], [1], [0, 0, 1, 1], [], []>} : vector<8x16xbf16>, vector<16x32xbf16>, vector<8x32xf32> -> vector<8x32xf32>
    %c0_61 = arith.constant 0 : index
    %c0_62 = arith.constant 0 : index
    %150 = vector.load %arg23[%c0_61, %c0_62] : memref<1x32xf32, #tpu.memory_space<vmem>>, vector<1x32xf32>
    %151 = vector.broadcast %150 : vector<1x32xf32> to vector<8x32xf32>
    %152 = arith.addf %149, %151 : vector<8x32xf32>
    %153 = arith.addf %80, %152 : vector<8x32xf32>
    %c0_63 = arith.constant 0 : index
    %c0_64 = arith.constant 0 : index
    %154 = vector.load %arg24[%c0_63, %c0_64] : memref<1x32xf32, #tpu.memory_space<vmem>>, vector<1x32xf32>
    %c0_65 = arith.constant 0 : index
    %c0_66 = arith.constant 0 : index
    %155 = vector.load %arg25[%c0_65, %c0_66] : memref<1x32xf32, #tpu.memory_space<vmem>>, vector<1x32xf32>
    %cst_67 = arith.constant dense<0.000000e+00> : vector<8xf32>
    %156 = vector.multi_reduction <add>, %153, %cst_67 [1] : vector<8x32xf32> to vector<8xf32>
    %157 = vector.shape_cast %156 : vector<8xf32> to vector<8x1xf32>
    %cst_68 = arith.constant 3.200000e+01 : f32
    %158 = vector.broadcast %cst_68 : f32 to vector<8x1xf32>
    %159 = arith.divf %157, %158 : vector<8x1xf32>
    %160 = vector.broadcast %159 : vector<8x1xf32> to vector<8x32xf32>
    %161 = arith.subf %153, %160 : vector<8x32xf32>
    %162 = arith.mulf %161, %161 : vector<8x32xf32>
    %cst_69 = arith.constant dense<0.000000e+00> : vector<8xf32>
    %163 = vector.multi_reduction <add>, %162, %cst_69 [1] : vector<8x32xf32> to vector<8xf32>
    %164 = vector.shape_cast %163 : vector<8xf32> to vector<8x1xf32>
    %cst_70 = arith.constant 3.200000e+01 : f32
    %165 = vector.broadcast %cst_70 : f32 to vector<8x1xf32>
    %166 = arith.divf %164, %165 : vector<8x1xf32>
    %167 = vector.broadcast %159 : vector<8x1xf32> to vector<8x32xf32>
    %168 = arith.subf %153, %167 : vector<8x32xf32>
    %cst_71 = arith.constant 9.99999974E-6 : f32
    %169 = vector.broadcast %cst_71 : f32 to vector<8x1xf32>
    %170 = arith.addf %166, %169 : vector<8x1xf32>
    %171 = math.rsqrt %170 : vector<8x1xf32>
    %172 = vector.broadcast %171 : vector<8x1xf32> to vector<8x32xf32>
    %173 = arith.mulf %168, %172 : vector<8x32xf32>
    %174 = vector.broadcast %154 : vector<1x32xf32> to vector<8x32xf32>
    %175 = arith.mulf %173, %174 : vector<8x32xf32>
    %176 = vector.broadcast %155 : vector<1x32xf32> to vector<8x32xf32>
    %177 = arith.addf %175, %176 : vector<8x32xf32>
    %178 = arith.truncf %177 : vector<8x32xf32> to vector<8x32xbf16>
    %cst_72 = arith.constant 0.000000e+00 : f32
    %179 = vector.broadcast %cst_72 : f32 to vector<8x32xf32>
    %c0_73 = arith.constant 0 : index
    %c0_74 = arith.constant 0 : index
    %180 = vector.load %arg26[%c0_73, %c0_74] : memref<32x128xbf16, #tpu.memory_space<vmem>>, vector<32x128xbf16>
    %cst_75 = arith.constant dense<0.000000e+00> : vector<8x128xf32>
    %181 = tpu.matmul %178, %180, %cst_75 {dimension_numbers = #tpu.dot_dimension_numbers<[1], [0], [0], [1], [0, 0, 1, 1], [], []>} : vector<8x32xbf16>, vector<32x128xbf16>, vector<8x128xf32> -> vector<8x128xf32>
    %c0_76 = arith.constant 0 : index
    %c0_77 = arith.constant 0 : index
    %182 = vector.load %arg27[%c0_76, %c0_77] : memref<1x128xf32, #tpu.memory_space<vmem>>, vector<1x128xf32>
    %183 = vector.broadcast %182 : vector<1x128xf32> to vector<8x128xf32>
    %184 = arith.addf %181, %183 : vector<8x128xf32>
    %cst_78 = arith.constant 0.000000e+00 : f32
    %185 = vector.broadcast %cst_78 : f32 to vector<8x128xf32>
    %186 = arith.maximumf %184, %185 : vector<8x128xf32>
    %187 = arith.truncf %186 : vector<8x128xf32> to vector<8x128xbf16>
    %c0_79 = arith.constant 0 : index
    %c0_80 = arith.constant 0 : index
    %188 = vector.load %arg28[%c0_79, %c0_80] : memref<128x32xbf16, #tpu.memory_space<vmem>>, vector<128x32xbf16>
    %cst_81 = arith.constant dense<0.000000e+00> : vector<8x32xf32>
    %189 = tpu.matmul %187, %188, %cst_81 {dimension_numbers = #tpu.dot_dimension_numbers<[1], [0], [0], [1], [0, 0, 1, 1], [], []>} : vector<8x128xbf16>, vector<128x32xbf16>, vector<8x32xf32> -> vector<8x32xf32>
    %190 = arith.addf %179, %189 : vector<8x32xf32>
    %191 = arith.addf %153, %190 : vector<8x32xf32>
    %c0_82 = arith.constant 0 : index
    %c0_83 = arith.constant 0 : index
    %192 = vector.load %arg29[%c0_82, %c0_83] : memref<1x32xf32, #tpu.memory_space<vmem>>, vector<1x32xf32>
    %193 = vector.broadcast %192 : vector<1x32xf32> to vector<8x32xf32>
    %194 = arith.addf %191, %193 : vector<8x32xf32>
    %c0_84 = arith.constant 0 : index
    %c0_85 = arith.constant 0 : index
    %c0_86 = arith.constant 0 : index
    %195 = vector.load %arg30[%c0_84, %c0_85, %c0_86] : memref<1x8x32xf32, #tpu.memory_space<vmem>>, vector<1x8x32xf32>
    %196 = vector.shape_cast %195 : vector<1x8x32xf32> to vector<8x32xf32>
    %197 = vector.shape_cast %194 : vector<8x32xf32> to vector<1x8x32xf32>
    tpu.vector_store %arg30[%c0_84, %c0_85, %c0_86], %197 {strides = array<i32>} : memref<1x8x32xf32, #tpu.memory_space<vmem>>, vector<1x8x32xf32>,
    return
  }
  func.func @transform_0(%arg0: i32, %arg1: i32) -> (i32, i32, i32) {
    %c0_i32 = arith.constant 0 : i32
    %c0_i32_0 = arith.constant 0 : i32
    %c0_i32_1 = arith.constant 0 : i32
    return %arg0, %c0_i32, %c0_i32_0 : i32, i32, i32
  }
  func.func @transform_1(%arg0: i32, %arg1: i32) -> (i32, i32, i32) {
    %c0_i32 = arith.constant 0 : i32
    %c0_i32_0 = arith.constant 0 : i32
    %c0_i32_1 = arith.constant 0 : i32
    return %arg0, %c0_i32, %c0_i32_0 : i32, i32, i32
  }
  func.func @transform_2(%arg0: i32, %arg1: i32) -> (i32, i32) {
    %c0_i32 = arith.constant 0 : i32
    %c0_i32_0 = arith.constant 0 : i32
    %c0_i32_1 = arith.constant 0 : i32
    return %c0_i32, %c0_i32_0 : i32, i32
  }
  func.func @transform_3(%arg0: i32, %arg1: i32) -> (i32, i32) {
    %c0_i32 = arith.constant 0 : i32
    %c0_i32_0 = arith.constant 0 : i32
    %c0_i32_1 = arith.constant 0 : i32
    return %c0_i32, %c0_i32_0 : i32, i32
  }
  func.func @transform_4(%arg0: i32, %arg1: i32) -> (i32, i32) {
    %c0_i32 = arith.constant 0 : i32
    %c0_i32_0 = arith.constant 0 : i32
    %c0_i32_1 = arith.constant 0 : i32
    return %c0_i32, %c0_i32_0 : i32, i32
  }
  func.func @transform_5(%arg0: i32, %arg1: i32) -> (i32, i32) {
    %c0_i32 = arith.constant 0 : i32
    %c0_i32_0 = arith.constant 0 : i32
    %c0_i32_1 = arith.constant 0 : i32
    return %c0_i32, %c0_i32_0 : i32, i32
  }
  func.func @transform_6(%arg0: i32, %arg1: i32) -> (i32, i32) {
    %c0_i32 = arith.constant 0 : i32
    %c0_i32_0 = arith.constant 0 : i32
    %c0_i32_1 = arith.constant 0 : i32
    return %c0_i32, %c0_i32_0 : i32, i32
  }
  func.func @transform_7(%arg0: i32, %arg1: i32) -> (i32, i32) {
    %c0_i32 = arith.constant 0 : i32
    %c0_i32_0 = arith.constant 0 : i32
    %c0_i32_1 = arith.constant 0 : i32
    return %c0_i32, %c0_i32_0 : i32, i32
  }
  func.func @transform_8(%arg0: i32, %arg1: i32) -> (i32, i32) {
    %c0_i32 = arith.constant 0 : i32
    %c0_i32_0 = arith.constant 0 : i32
    %c0_i32_1 = arith.constant 0 : i32
    return %c0_i32, %c0_i32_0 : i32, i32
  }
  func.func @transform_9(%arg0: i32, %arg1: i32) -> (i32, i32) {
    %c0_i32 = arith.constant 0 : i32
    %c0_i32_0 = arith.constant 0 : i32
    %c0_i32_1 = arith.constant 0 : i32
    return %c0_i32, %c0_i32_0 : i32, i32
  }
  func.func @transform_10(%arg0: i32, %arg1: i32) -> (i32, i32) {
    %c0_i32 = arith.constant 0 : i32
    %c0_i32_0 = arith.constant 0 : i32
    %c0_i32_1 = arith.constant 0 : i32
    return %c0_i32, %c0_i32_0 : i32, i32
  }
  func.func @transform_11(%arg0: i32, %arg1: i32) -> (i32, i32) {
    %c0_i32 = arith.constant 0 : i32
    %c0_i32_0 = arith.constant 0 : i32
    %c0_i32_1 = arith.constant 0 : i32
    return %c0_i32, %c0_i32_0 : i32, i32
  }
  func.func @transform_12(%arg0: i32, %arg1: i32) -> (i32, i32) {
    %c0_i32 = arith.constant 0 : i32
    %c0_i32_0 = arith.constant 0 : i32
    %c0_i32_1 = arith.constant 0 : i32
    return %c0_i32, %c0_i32_0 : i32, i32
  }
  func.func @transform_13(%arg0: i32, %arg1: i32) -> (i32, i32) {
    %c0_i32 = arith.constant 0 : i32
    %c0_i32_0 = arith.constant 0 : i32
    %c0_i32_1 = arith.constant 0 : i32
    return %c0_i32, %c0_i32_0 : i32, i32
  }
  func.func @transform_14(%arg0: i32, %arg1: i32) -> (i32, i32) {
    %c0_i32 = arith.constant 0 : i32
    %c0_i32_0 = arith.constant 0 : i32
    %c0_i32_1 = arith.constant 0 : i32
    return %c0_i32, %c0_i32_0 : i32, i32
  }
  func.func @transform_15(%arg0: i32, %arg1: i32) -> (i32, i32) {
    %c0_i32 = arith.constant 0 : i32
    %c0_i32_0 = arith.constant 0 : i32
    %c0_i32_1 = arith.constant 0 : i32
    return %c0_i32, %c0_i32_0 : i32, i32
  }
  func.func @transform_16(%arg0: i32, %arg1: i32) -> (i32, i32) {
    %c0_i32 = arith.constant 0 : i32
    %c0_i32_0 = arith.constant 0 : i32
    %c0_i32_1 = arith.constant 0 : i32
    return %c0_i32, %c0_i32_0 : i32, i32
  }
  func.func @transform_17(%arg0: i32, %arg1: i32) -> (i32, i32) {
    %c0_i32 = arith.constant 0 : i32
    %c0_i32_0 = arith.constant 0 : i32
    %c0_i32_1 = arith.constant 0 : i32
    return %c0_i32, %c0_i32_0 : i32, i32
  }
  func.func @transform_18(%arg0: i32, %arg1: i32) -> (i32, i32) {
    %c0_i32 = arith.constant 0 : i32
    %c0_i32_0 = arith.constant 0 : i32
    %c0_i32_1 = arith.constant 0 : i32
    return %c0_i32, %c0_i32_0 : i32, i32
  }
  func.func @transform_19(%arg0: i32, %arg1: i32) -> (i32, i32) {
    %c0_i32 = arith.constant 0 : i32
    %c0_i32_0 = arith.constant 0 : i32
    %c0_i32_1 = arith.constant 0 : i32
    return %c0_i32, %c0_i32_0 : i32, i32
  }
  func.func @transform_20(%arg0: i32, %arg1: i32) -> (i32, i32) {
    %c0_i32 = arith.constant 0 : i32
    %c0_i32_0 = arith.constant 0 : i32
    %c0_i32_1 = arith.constant 0 : i32
    return %c0_i32, %c0_i32_0 : i32, i32
  }
  func.func @transform_21(%arg0: i32, %arg1: i32) -> (i32, i32) {
    %c0_i32 = arith.constant 0 : i32
    %c0_i32_0 = arith.constant 0 : i32
    %c0_i32_1 = arith.constant 0 : i32
    return %c0_i32, %c0_i32_0 : i32, i32
  }
  func.func @transform_22(%arg0: i32, %arg1: i32) -> (i32, i32) {
    %c0_i32 = arith.constant 0 : i32
    %c0_i32_0 = arith.constant 0 : i32
    %c0_i32_1 = arith.constant 0 : i32
    return %c0_i32, %c0_i32_0 : i32, i32
  }
  func.func @transform_23(%arg0: i32, %arg1: i32) -> (i32, i32) {
    %c0_i32 = arith.constant 0 : i32
    %c0_i32_0 = arith.constant 0 : i32
    %c0_i32_1 = arith.constant 0 : i32
    return %c0_i32, %c0_i32_0 : i32, i32
  }
  func.func @transform_24(%arg0: i32, %arg1: i32) -> (i32, i32) {
    %c0_i32 = arith.constant 0 : i32
    %c0_i32_0 = arith.constant 0 : i32
    %c0_i32_1 = arith.constant 0 : i32
    return %c0_i32, %c0_i32_0 : i32, i32
  }
  func.func @transform_25(%arg0: i32, %arg1: i32) -> (i32, i32) {
    %c0_i32 = arith.constant 0 : i32
    %c0_i32_0 = arith.constant 0 : i32
    %c0_i32_1 = arith.constant 0 : i32
    return %c0_i32, %c0_i32_0 : i32, i32
  }
  func.func @transform_26(%arg0: i32, %arg1: i32) -> (i32, i32) {
    %c0_i32 = arith.constant 0 : i32
    %c0_i32_0 = arith.constant 0 : i32
    %c0_i32_1 = arith.constant 0 : i32
    return %c0_i32, %c0_i32_0 : i32, i32
  }
  func.func @transform_27(%arg0: i32, %arg1: i32) -> (i32, i32) {
    %c0_i32 = arith.constant 0 : i32
    %c0_i32_0 = arith.constant 0 : i32
    %c0_i32_1 = arith.constant 0 : i32
    return %c0_i32, %c0_i32_0 : i32, i32
  }
  func.func @transform_28(%arg0: i32, %arg1: i32) -> (i32, i32, i32) {
    %c0_i32 = arith.constant 0 : i32
    %c0_i32_0 = arith.constant 0 : i32
    return %arg0, %arg1, %c0_i32 : i32, i32, i32
  }
}

</mosaic_0001>

<llo_original>
// kernel: tpu_custom_call.1
$region0: #{tpu_custom_call.1}
  #allocation0 [shape = 'u32[]', space=smem, size = 0x4, offset = 0x4, fixed_abs, tag = 'smem constant byte address 0x4 - core index']
  #allocation1 [shape = 'u32[144,128]{1,0:T(1,128)}', space=vmem, size = 0x12000, scoped, tag = 'internal scratch']
  #allocation2 [shape = 'bf16[16,16]{1,0:T(16,128)(2,1)}', space=vmem, size = 0x1000, scoped, tag = 'scratch operand']
  #allocation3 [shape = 'bf16[16,16]{1,0:T(16,128)(2,1)}', space=vmem, size = 0x1000, scoped, tag = 'scratch operand']
  #allocation4 [shape = 'bf16[8,16]{1,0:T(8,128)(2,1)}', space=vmem, size = 0x800, scoped, tag = 'scratch operand']
  #allocation5 [shape = 'bf16[8,16]{1,0:T(8,128)(2,1)}', space=vmem, size = 0x800, scoped, tag = 'scratch operand']
  %s0 = inlined_call_operand.vmem [shape: f32[2,16,32], index: 0, kind: input, shape index: {}]
  %s1 = inlined_call_operand.vmem [shape: bf16[2,8,16], index: 1, kind: input, shape index: {}]
  %s2 = inlined_call_operand.vmem [shape: f32[1,32], index: 2, kind: input, shape index: {}]
  %s3 = inlined_call_operand.vmem [shape: f32[1,32], index: 3, kind: input, shape index: {}]
  %s4 = inlined_call_operand.vmem [shape: bf16[32,16], index: 4, kind: input, shape index: {}]
  %s5 = inlined_call_operand.vmem [shape: f32[1,16], index: 5, kind: input, shape index: {}]
  %s6 = inlined_call_operand.vmem [shape: bf16[32,16], index: 6, kind: input, shape index: {}]
  %s7 = inlined_call_operand.vmem [shape: f32[1,16], index: 7, kind: input, shape index: {}]
  %s8 = inlined_call_operand.vmem [shape: bf16[32,16], index: 8, kind: input, shape index: {}]
  %s9 = inlined_call_operand.vmem [shape: f32[1,16], index: 9, kind: input, shape index: {}]
  %s10 = inlined_call_operand.vmem [shape: bf16[16,32], index: 10, kind: input, shape index: {}]
  %s11 = inlined_call_operand.vmem [shape: f32[1,32], index: 11, kind: input, shape index: {}]
  %s12 = inlined_call_operand.vmem [shape: f32[1,32], index: 12, kind: input, shape index: {}]
  %s13 = inlined_call_operand.vmem [shape: f32[1,32], index: 13, kind: input, shape index: {}]
  %s14 = inlined_call_operand.vmem [shape: bf16[32,16], index: 14, kind: input, shape index: {}]
  %s15 = inlined_call_operand.vmem [shape: f32[1,16], index: 15, kind: input, shape index: {}]
  %s16 = inlined_call_operand.vmem [shape: bf16[16,16], index: 16, kind: input, shape index: {}]
  %s17 = inlined_call_operand.vmem [shape: f32[1,16], index: 17, kind: input, shape index: {}]
  %s18 = inlined_call_operand.vmem [shape: bf16[16,16], index: 18, kind: input, shape index: {}]
  %s19 = inlined_call_operand.vmem [shape: f32[1,16], index: 19, kind: input, shape index: {}]
  %s20 = inlined_call_operand.vmem [shape: bf16[16,32], index: 20, kind: input, shape index: {}]
  %s21 = inlined_call_operand.vmem [shape: f32[1,32], index: 21, kind: input, shape index: {}]
  %s22 = inlined_call_operand.vmem [shape: f32[1,32], index: 22, kind: input, shape index: {}]
  %s23 = inlined_call_operand.vmem [shape: f32[1,32], index: 23, kind: input, shape index: {}]
  %s24 = inlined_call_operand.vmem [shape: bf16[32,128], index: 24, kind: input, shape index: {}]
  %s25 = inlined_call_operand.vmem [shape: f32[1,128], index: 25, kind: input, shape index: {}]
  %s26 = inlined_call_operand.vmem [shape: bf16[128,32], index: 26, kind: input, shape index: {}]
  %s27 = inlined_call_operand.vmem [shape: f32[1,32], index: 27, kind: input, shape index: {}]
  %s28 = inlined_call_operand.hbm [shape: f32[2,16,32], index: 28, kind: output, shape index: {}]
  %s29 = sld [smem:[#allocation0]]
  $region149: #{tpu_custom_call.1} parent=0
    _
  %s31 = ssub.s32 1, %s29
  %s32 = scalar_select 0, %s31, %s29
  $region1: #{tpu_custom_call.1} parent=0
    #allocation6 [shape = 'u8[8192]{0}', space=vmem, size = 0x2000, scoped, tag = 'output window, operand 0']
    #allocation7 [shape = 's32[2]{0}', space=sflag, size = 0x8, scoped, tag = 'scoped memory for tpu_custom_call.1']
    %33 = vsyncpa [#allocation7], 0
    %s34 = scalar_lea.sflag [#allocation7], 1
    %35 = vsyncpa %s34, 0
    loop: start=0, step=1, limit=6
    $region2: #{tpu_custom_call.1} parent=1 // loop_pre_header
      _
    $region3: #{tpu_custom_call.1} parent=1 // loop_header
      %s37 = sphi 0, %s41
      %p38 = scmp.ge.s32.totalorder %s37, 6
      %s44 = sphi 0, %s56
      %s45 = sphi 0, %s52
      %s46 = sphi 0, %s44
      %s47 = sphi 0, %s45
      %s48 = sphi 0, %s46
      %s49 = sphi 0, %s47
      %s59 = sphi 0, %s61
      %s62 = sphi 0, %s59
      %s63 = sphi 0, %s62
      %s79 = sphi 0, %s63
      %s85 = sphi 0, %s87
      %s88 = sphi 0, %s85
      %s89 = sphi 0, %s88
      %s105 = sphi 0, %s89
      %s109 = sphi 0, %s109
      %s111 = sphi 0, %s109
      %s112 = sphi 0, %s111
      %s126 = sphi 0, %s112
      %s130 = sphi 0, %s130
      %s132 = sphi 0, %s130
      %s133 = sphi 0, %s132
      %s147 = sphi 0, %s133
      %s151 = sphi 0, %s151
      %s153 = sphi 0, %s151
      %s154 = sphi 0, %s153
      %s168 = sphi 0, %s154
      %s172 = sphi 0, %s172
      %s174 = sphi 0, %s172
      %s175 = sphi 0, %s174
      %s189 = sphi 0, %s175
      %s193 = sphi 0, %s193
      %s195 = sphi 0, %s193
      %s196 = sphi 0, %s195
      %s210 = sphi 0, %s196
      %s214 = sphi 0, %s214
      %s216 = sphi 0, %s214
      %s217 = sphi 0, %s216
      %s231 = sphi 0, %s217
      %s235 = sphi 0, %s235
      %s237 = sphi 0, %s235
      %s238 = sphi 0, %s237
      %s252 = sphi 0, %s238
      %s256 = sphi 0, %s256
      %s258 = sphi 0, %s256
      %s259 = sphi 0, %s258
      %s273 = sphi 0, %s259
      %s277 = sphi 0, %s277
      %s279 = sphi 0, %s277
      %s280 = sphi 0, %s279
      %s294 = sphi 0, %s280
      %s298 = sphi 0, %s298
      %s300 = sphi 0, %s298
      %s301 = sphi 0, %s300
      %s315 = sphi 0, %s301
      %s319 = sphi 0, %s319
      %s321 = sphi 0, %s319
      %s322 = sphi 0, %s321
      %s336 = sphi 0, %s322
      %s340 = sphi 0, %s340
      %s342 = sphi 0, %s340
      %s343 = sphi 0, %s342
      %s357 = sphi 0, %s343
      %s361 = sphi 0, %s361
      %s363 = sphi 0, %s361
      %s364 = sphi 0, %s363
      %s378 = sphi 0, %s364
      %s382 = sphi 0, %s382
      %s384 = sphi 0, %s382
      %s385 = sphi 0, %s384
      %s399 = sphi 0, %s385
      %s403 = sphi 0, %s403
      %s405 = sphi 0, %s403
      %s406 = sphi 0, %s405
      %s420 = sphi 0, %s406
      %s424 = sphi 0, %s424
      %s426 = sphi 0, %s424
      %s427 = sphi 0, %s426
      %s441 = sphi 0, %s427
      %s445 = sphi 0, %s445
      %s447 = sphi 0, %s445
      %s448 = sphi 0, %s447
      %s462 = sphi 0, %s448
      %s466 = sphi 0, %s466
      %s468 = sphi 0, %s466
      %s469 = sphi 0, %s468
      %s483 = sphi 0, %s469
      %s487 = sphi 0, %s487
      %s489 = sphi 0, %s487
      %s490 = sphi 0, %s489
      %s504 = sphi 0, %s490
      %s508 = sphi 0, %s508
      %s510 = sphi 0, %s508
      %s511 = sphi 0, %s510
      %s525 = sphi 0, %s511
      %s529 = sphi 0, %s529
      %s531 = sphi 0, %s529
      %s532 = sphi 0, %s531
      %s546 = sphi 0, %s532
      %s550 = sphi 0, %s550
      %s552 = sphi 0, %s550
      %s553 = sphi 0, %s552
      %s567 = sphi 0, %s553
      %s571 = sphi 0, %s571
      %s573 = sphi 0, %s571
      %s574 = sphi 0, %s573
      %s588 = sphi 0, %s574
      %s592 = sphi 0, %s592
      %s594 = sphi 0, %s592
      %s595 = sphi 0, %s594
      %s609 = sphi 0, %s595
      %s613 = sphi 0, %s613
      %s615 = sphi 0, %s613
      %s616 = sphi 0, %s615
      %s630 = sphi 0, %s616
      %s634 = sphi 0, %s634
      %s636 = sphi 0, %s634
      %s637 = sphi 0, %s636
      %s651 = sphi 0, %s637
      %s659 = sphi 0, %s661
      %s662 = sphi 0, %s659
      %s663 = sphi 0, %s662
      %s679 = sphi 0, %s663
    $region4: #{tpu_custom_call.1} parent=1 // loop_header_branch
      %40 = sbr.rel (%p38) target = $region8
    $region5: #{tpu_custom_call.1} parent=1 // loop_body
      %s42 = ssub.s32 %s37, 1
      %s43 = ssub.s32 %s37, 2
      %s50 = sadd.s32 1, %s45
      %p51 = scmp.ge.s32.totalorder %s50, 2
      %s52 = scalar_select %p51, 0, %s50
      %s53 = sadd.s32 1, %s44
      %s54 = scalar_select %p51, %s53, %s44
      %p55 = scmp.ge.s32.totalorder %s54, 2
      %s56 = scalar_select %p55, 0, %s54
      %s57 = ssub.s32 %s44, %s56
      %p58 = scmp.eq.s32.totalorder %s57, 0
      %s60 = sadd.s32 %s59, 1
      %s61 = scalar_select %p58, %s59, %s60
      %p64 = pneg %p58
      %p65 = scmp.eq.s32.totalorder %s37, 3
      %p66 = por %p64, %p65
      %p67 = scmp.ne.s32.totalorder %s59, %s62
      %p68 = scmp.eq.s32.totalorder %s37, 0
      %p69 = por %p67, %p68
      %p70 = scmp.ne.s32.totalorder %s59, %s62
      %p71 = scmp.eq.s32.totalorder %s42, 3
      %p72 = por %p70, %p71
      %p73 = scmp.ne.s32.totalorder %s62, %s63
      %p74 = scmp.eq.s32.totalorder %s42, 0
      %p75 = por %p73, %p74
      %p76 = scmp.ne.s32.totalorder %s62, %s63
      %p77 = scmp.eq.s32.totalorder %s43, 3
      %p78 = por %p76, %p77
      %p80 = scmp.ne.s32.totalorder %s63, %s79
      %p81 = scmp.eq.s32.totalorder %s43, 0
      %p82 = por %p80, %p81
      %s83 = ssub.s32 %s44, %s56
      %p84 = scmp.eq.s32.totalorder %s83, 0
      %s86 = sadd.s32 %s85, 1
      %s87 = scalar_select %p84, %s85, %s86
      %p90 = pneg %p84
      %p91 = scmp.eq.s32.totalorder %s37, 3
      %p92 = por %p90, %p91
      %p93 = scmp.ne.s32.totalorder %s85, %s88
      %p94 = scmp.eq.s32.totalorder %s37, 0
      %p95 = por %p93, %p94
      %p96 = scmp.ne.s32.totalorder %s85, %s88
      %p97 = scmp.eq.s32.totalorder %s42, 3
      %p98 = por %p96, %p97
      %p99 = scmp.ne.s32.totalorder %s88, %s89
      %p100 = scmp.eq.s32.totalorder %s42, 0
      %p101 = por %p99, %p100
      %p102 = scmp.ne.s32.totalorder %s88, %s89
      %p103 = scmp.eq.s32.totalorder %s43, 3
      %p104 = por %p102, %p103
      %p106 = scmp.ne.s32.totalorder %s89, %s105
      %p107 = scmp.eq.s32.totalorder %s43, 0
      %p108 = por %p106, %p107
      %s110 = sadd.s32 %s109, 1
      %p113 = scmp.eq.s32.totalorder %s37, 3
      %p114 = scmp.ne.s32.totalorder %s109, %s111
      %p115 = scmp.eq.s32.totalorder %s37, 0
      %p116 = por %p114, %p115
      %p117 = scmp.ne.s32.totalorder %s109, %s111
      %p118 = scmp.eq.s32.totalorder %s42, 3
      %p119 = por %p117, %p118
      %p120 = scmp.ne.s32.totalorder %s111, %s112
      %p121 = scmp.eq.s32.totalorder %s42, 0
      %p122 = por %p120, %p121
      %p123 = scmp.ne.s32.totalorder %s111, %s112
      %p124 = scmp.eq.s32.totalorder %s43, 3
      %p125 = por %p123, %p124
      %p127 = scmp.ne.s32.totalorder %s112, %s126
      %p128 = scmp.eq.s32.totalorder %s43, 0
      %p129 = por %p127, %p128
      %s131 = sadd.s32 %s130, 1
      %p134 = scmp.eq.s32.totalorder %s37, 3
      %p135 = scmp.ne.s32.totalorder %s130, %s132
      %p136 = scmp.eq.s32.totalorder %s37, 0
      %p137 = por %p135, %p136
      %p138 = scmp.ne.s32.totalorder %s130, %s132
      %p139 = scmp.eq.s32.totalorder %s42, 3
      %p140 = por %p138, %p139
      %p141 = scmp.ne.s32.totalorder %s132, %s133
      %p142 = scmp.eq.s32.totalorder %s42, 0
      %p143 = por %p141, %p142
      %p144 = scmp.ne.s32.totalorder %s132, %s133
      %p145 = scmp.eq.s32.totalorder %s43, 3
      %p146 = por %p144, %p145
      %p148 = scmp.ne.s32.totalorder %s133, %s147
      %p149 = scmp.eq.s32.totalorder %s43, 0
      %p150 = por %p148, %p149
      %s152 = sadd.s32 %s151, 1
      %p155 = scmp.eq.s32.totalorder %s37, 3
      %p156 = scmp.ne.s32.totalorder %s151, %s153
      %p157 = scmp.eq.s32.totalorder %s37, 0
      %p158 = por %p156, %p157
      %p159 = scmp.ne.s32.totalorder %s151, %s153
      %p160 = scmp.eq.s32.totalorder %s42, 3
      %p161 = por %p159, %p160
      %p162 = scmp.ne.s32.totalorder %s153, %s154
      %p163 = scmp.eq.s32.totalorder %s42, 0
      %p164 = por %p162, %p163
      %p165 = scmp.ne.s32.totalorder %s153, %s154
      %p166 = scmp.eq.s32.totalorder %s43, 3
      %p167 = por %p165, %p166
      %p169 = scmp.ne.s32.totalorder %s154, %s168
      %p170 = scmp.eq.s32.totalorder %s43, 0
      %p171 = por %p169, %p170
      %s173 = sadd.s32 %s172, 1
      %p176 = scmp.eq.s32.totalorder %s37, 3
      %p177 = scmp.ne.s32.totalorder %s172, %s174
      %p178 = scmp.eq.s32.totalorder %s37, 0
      %p179 = por %p177, %p178
      %p180 = scmp.ne.s32.totalorder %s172, %s174
      %p181 = scmp.eq.s32.totalorder %s42, 3
      %p182 = por %p180, %p181
      %p183 = scmp.ne.s32.totalorder %s174, %s175
      %p184 = scmp.eq.s32.totalorder %s42, 0
      %p185 = por %p183, %p184
      %p186 = scmp.ne.s32.totalorder %s174, %s175
      %p187 = scmp.eq.s32.totalorder %s43, 3
      %p188 = por %p186, %p187
      %p190 = scmp.ne.s32.totalorder %s175, %s189
      %p191 = scmp.eq.s32.totalorder %s43, 0
      %p192 = por %p190, %p191
      %s194 = sadd.s32 %s193, 1
      %p197 = scmp.eq.s32.totalorder %s37, 3
      %p198 = scmp.ne.s32.totalorder %s193, %s195
      %p199 = scmp.eq.s32.totalorder %s37, 0
      %p200 = por %p198, %p199
      %p201 = scmp.ne.s32.totalorder %s193, %s195
      %p202 = scmp.eq.s32.totalorder %s42, 3
      %p203 = por %p201, %p202
      %p204 = scmp.ne.s32.totalorder %s195, %s196
      %p205 = scmp.eq.s32.totalorder %s42, 0
      %p206 = por %p204, %p205
      %p207 = scmp.ne.s32.totalorder %s195, %s196
      %p208 = scmp.eq.s32.totalorder %s43, 3
      %p209 = por %p207, %p208
      %p211 = scmp.ne.s32.totalorder %s196, %s210
      %p212 = scmp.eq.s32.totalorder %s43, 0
      %p213 = por %p211, %p212
      %s215 = sadd.s32 %s214, 1
      %p218 = scmp.eq.s32.totalorder %s37, 3
      %p219 = scmp.ne.s32.totalorder %s214, %s216
      %p220 = scmp.eq.s32.totalorder %s37, 0
      %p221 = por %p219, %p220
      %p222 = scmp.ne.s32.totalorder %s214, %s216
      %p223 = scmp.eq.s32.totalorder %s42, 3
      %p224 = por %p222, %p223
      %p225 = scmp.ne.s32.totalorder %s216, %s217
      %p226 = scmp.eq.s32.totalorder %s42, 0
      %p227 = por %p225, %p226
      %p228 = scmp.ne.s32.totalorder %s216, %s217
      %p229 = scmp.eq.s32.totalorder %s43, 3
      %p230 = por %p228, %p229
      %p232 = scmp.ne.s32.totalorder %s217, %s231
      %p233 = scmp.eq.s32.totalorder %s43, 0
      %p234 = por %p232, %p233
      %s236 = sadd.s32 %s235, 1
      %p239 = scmp.eq.s32.totalorder %s37, 3
      %p240 = scmp.ne.s32.totalorder %s235, %s237
      %p241 = scmp.eq.s32.totalorder %s37, 0
      %p242 = por %p240, %p241
      %p243 = scmp.ne.s32.totalorder %s235, %s237
      %p244 = scmp.eq.s32.totalorder %s42, 3
      %p245 = por %p243, %p244
      %p246 = scmp.ne.s32.totalorder %s237, %s238
      %p247 = scmp.eq.s32.totalorder %s42, 0
      %p248 = por %p246, %p247
      %p249 = scmp.ne.s32.totalorder %s237, %s238
      %p250 = scmp.eq.s32.totalorder %s43, 3
      %p251 = por %p249, %p250
      %p253 = scmp.ne.s32.totalorder %s238, %s252
      %p254 = scmp.eq.s32.totalorder %s43, 0
      %p255 = por %p253, %p254
      %s257 = sadd.s32 %s256, 1
      %p260 = scmp.eq.s32.totalorder %s37, 3
      %p261 = scmp.ne.s32.totalorder %s256, %s258
      %p262 = scmp.eq.s32.totalorder %s37, 0
      %p263 = por %p261, %p262
      %p264 = scmp.ne.s32.totalorder %s256, %s258
      %p265 = scmp.eq.s32.totalorder %s42, 3
      %p266 = por %p264, %p265
      %p267 = scmp.ne.s32.totalorder %s258, %s259
      %p268 = scmp.eq.s32.totalorder %s42, 0
      %p269 = por %p267, %p268
      %p270 = scmp.ne.s32.totalorder %s258, %s259
      %p271 = scmp.eq.s32.totalorder %s43, 3
      %p272 = por %p270, %p271
      %p274 = scmp.ne.s32.totalorder %s259, %s273
      %p275 = scmp.eq.s32.totalorder %s43, 0
      %p276 = por %p274, %p275
      %s278 = sadd.s32 %s277, 1
      %p281 = scmp.eq.s32.totalorder %s37, 3
      %p282 = scmp.ne.s32.totalorder %s277, %s279
      %p283 = scmp.eq.s32.totalorder %s37, 0
      %p284 = por %p282, %p283
      %p285 = scmp.ne.s32.totalorder %s277, %s279
      %p286 = scmp.eq.s32.totalorder %s42, 3
      %p287 = por %p285, %p286
      %p288 = scmp.ne.s32.totalorder %s279, %s280
      %p289 = scmp.eq.s32.totalorder %s42, 0
      %p290 = por %p288, %p289
      %p291 = scmp.ne.s32.totalorder %s279, %s280
      %p292 = scmp.eq.s32.totalorder %s43, 3
      %p293 = por %p291, %p292
      %p295 = scmp.ne.s32.totalorder %s280, %s294
      %p296 = scmp.eq.s32.totalorder %s43, 0
      %p297 = por %p295, %p296
      %s299 = sadd.s32 %s298, 1
      %p302 = scmp.eq.s32.totalorder %s37, 3
      %p303 = scmp.ne.s32.totalorder %s298, %s300
      %p304 = scmp.eq.s32.totalorder %s37, 0
      %p305 = por %p303, %p304
      %p306 = scmp.ne.s32.totalorder %s298, %s300
      %p307 = scmp.eq.s32.totalorder %s42, 3
      %p308 = por %p306, %p307
      %p309 = scmp.ne.s32.totalorder %s300, %s301
      %p310 = scmp.eq.s32.totalorder %s42, 0
      %p311 = por %p309, %p310
      %p312 = scmp.ne.s32.totalorder %s300, %s301
      %p313 = scmp.eq.s32.totalorder %s43, 3
      %p314 = por %p312, %p313
      %p316 = scmp.ne.s32.totalorder %s301, %s315
      %p317 = scmp.eq.s32.totalorder %s43, 0
      %p318 = por %p316, %p317
      %s320 = sadd.s32 %s319, 1
      %p323 = scmp.eq.s32.totalorder %s37, 3
      %p324 = scmp.ne.s32.totalorder %s319, %s321
      %p325 = scmp.eq.s32.totalorder %s37, 0
      %p326 = por %p324, %p325
      %p327 = scmp.ne.s32.totalorder %s319, %s321
      %p328 = scmp.eq.s32.totalorder %s42, 3
      %p329 = por %p327, %p328
      %p330 = scmp.ne.s32.totalorder %s321, %s322
      %p331 = scmp.eq.s32.totalorder %s42, 0
      %p332 = por %p330, %p331
      %p333 = scmp.ne.s32.totalorder %s321, %s322
      %p334 = scmp.eq.s32.totalorder %s43, 3
      %p335 = por %p333, %p334
      %p337 = scmp.ne.s32.totalorder %s322, %s336
      %p338 = scmp.eq.s32.totalorder %s43, 0
      %p339 = por %p337, %p338
      %s341 = sadd.s32 %s340, 1
      %p344 = scmp.eq.s32.totalorder %s37, 3
      %p345 = scmp.ne.s32.totalorder %s340, %s342
      %p346 = scmp.eq.s32.totalorder %s37, 0
      %p347 = por %p345, %p346
      %p348 = scmp.ne.s32.totalorder %s340, %s342
      %p349 = scmp.eq.s32.totalorder %s42, 3
      %p350 = por %p348, %p349
      %p351 = scmp.ne.s32.totalorder %s342, %s343
      %p352 = scmp.eq.s32.totalorder %s42, 0
      %p353 = por %p351, %p352
      %p354 = scmp.ne.s32.totalorder %s342, %s343
      %p355 = scmp.eq.s32.totalorder %s43, 3
      %p356 = por %p354, %p355
      %p358 = scmp.ne.s32.totalorder %s343, %s357
      %p359 = scmp.eq.s32.totalorder %s43, 0
      %p360 = por %p358, %p359
      %s362 = sadd.s32 %s361, 1
      %p365 = scmp.eq.s32.totalorder %s37, 3
      %p366 = scmp.ne.s32.totalorder %s361, %s363
      %p367 = scmp.eq.s32.totalorder %s37, 0
      %p368 = por %p366, %p367
      %p369 = scmp.ne.s32.totalorder %s361, %s363
      %p370 = scmp.eq.s32.totalorder %s42, 3
      %p371 = por %p369, %p370
      %p372 = scmp.ne.s32.totalorder %s363, %s364
      %p373 = scmp.eq.s32.totalorder %s42, 0
      %p374 = por %p372, %p373
      %p375 = scmp.ne.s32.totalorder %s363, %s364
      %p376 = scmp.eq.s32.totalorder %s43, 3
      %p377 = por %p375, %p376
      %p379 = scmp.ne.s32.totalorder %s364, %s378
      %p380 = scmp.eq.s32.totalorder %s43, 0
      %p381 = por %p379, %p380
      %s383 = sadd.s32 %s382, 1
      %p386 = scmp.eq.s32.totalorder %s37, 3
      %p387 = scmp.ne.s32.totalorder %s382, %s384
      %p388 = scmp.eq.s32.totalorder %s37, 0
      %p389 = por %p387, %p388
      %p390 = scmp.ne.s32.totalorder %s382, %s384
      %p391 = scmp.eq.s32.totalorder %s42, 3
      %p392 = por %p390, %p391
      %p393 = scmp.ne.s32.totalorder %s384, %s385
      %p394 = scmp.eq.s32.totalorder %s42, 0
      %p395 = por %p393, %p394
      %p396 = scmp.ne.s32.totalorder %s384, %s385
      %p397 = scmp.eq.s32.totalorder %s43, 3
      %p398 = por %p396, %p397
      %p400 = scmp.ne.s32.totalorder %s385, %s399
      %p401 = scmp.eq.s32.totalorder %s43, 0
      %p402 = por %p400, %p401
      %s404 = sadd.s32 %s403, 1
      %p407 = scmp.eq.s32.totalorder %s37, 3
      %p408 = scmp.ne.s32.totalorder %s403, %s405
      %p409 = scmp.eq.s32.totalorder %s37, 0
      %p410 = por %p408, %p409
      %p411 = scmp.ne.s32.totalorder %s403, %s405
      %p412 = scmp.eq.s32.totalorder %s42, 3
      %p413 = por %p411, %p412
      %p414 = scmp.ne.s32.totalorder %s405, %s406
      %p415 = scmp.eq.s32.totalorder %s42, 0
      %p416 = por %p414, %p415
      %p417 = scmp.ne.s32.totalorder %s405, %s406
      %p418 = scmp.eq.s32.totalorder %s43, 3
      %p419 = por %p417, %p418
      %p421 = scmp.ne.s32.totalorder %s406, %s420
      %p422 = scmp.eq.s32.totalorder %s43, 0
      %p423 = por %p421, %p422
      %s425 = sadd.s32 %s424, 1
      %p428 = scmp.eq.s32.totalorder %s37, 3
      %p429 = scmp.ne.s32.totalorder %s424, %s426
      %p430 = scmp.eq.s32.totalorder %s37, 0
      %p431 = por %p429, %p430
      %p432 = scmp.ne.s32.totalorder %s424, %s426
      %p433 = scmp.eq.s32.totalorder %s42, 3
      %p434 = por %p432, %p433
      %p435 = scmp.ne.s32.totalorder %s426, %s427
      %p436 = scmp.eq.s32.totalorder %s42, 0
      %p437 = por %p435, %p436
      %p438 = scmp.ne.s32.totalorder %s426, %s427
      %p439 = scmp.eq.s32.totalorder %s43, 3
      %p440 = por %p438, %p439
      %p442 = scmp.ne.s32.totalorder %s427, %s441
      %p443 = scmp.eq.s32.totalorder %s43, 0
      %p444 = por %p442, %p443
      %s446 = sadd.s32 %s445, 1
      %p449 = scmp.eq.s32.totalorder %s37, 3
      %p450 = scmp.ne.s32.totalorder %s445, %s447
      %p451 = scmp.eq.s32.totalorder %s37, 0
      %p452 = por %p450, %p451
      %p453 = scmp.ne.s32.totalorder %s445, %s447
      %p454 = scmp.eq.s32.totalorder %s42, 3
      %p455 = por %p453, %p454
      %p456 = scmp.ne.s32.totalorder %s447, %s448
      %p457 = scmp.eq.s32.totalorder %s42, 0
      %p458 = por %p456, %p457
      %p459 = scmp.ne.s32.totalorder %s447, %s448
      %p460 = scmp.eq.s32.totalorder %s43, 3
      %p461 = por %p459, %p460
      %p463 = scmp.ne.s32.totalorder %s448, %s462
      %p464 = scmp.eq.s32.totalorder %s43, 0
      %p465 = por %p463, %p464
      %s467 = sadd.s32 %s466, 1
      %p470 = scmp.eq.s32.totalorder %s37, 3
      %p471 = scmp.ne.s32.totalorder %s466, %s468
      %p472 = scmp.eq.s32.totalorder %s37, 0
      %p473 = por %p471, %p472
      %p474 = scmp.ne.s32.totalorder %s466, %s468
      %p475 = scmp.eq.s32.totalorder %s42, 3
      %p476 = por %p474, %p475
      %p477 = scmp.ne.s32.totalorder %s468, %s469
      %p478 = scmp.eq.s32.totalorder %s42, 0
      %p479 = por %p477, %p478
      %p480 = scmp.ne.s32.totalorder %s468, %s469
      %p481 = scmp.eq.s32.totalorder %s43, 3
      %p482 = por %p480, %p481
      %p484 = scmp.ne.s32.totalorder %s469, %s483
      %p485 = scmp.eq.s32.totalorder %s43, 0
      %p486 = por %p484, %p485
      %s488 = sadd.s32 %s487, 1
      %p491 = scmp.eq.s32.totalorder %s37, 3
      %p492 = scmp.ne.s32.totalorder %s487, %s489
      %p493 = scmp.eq.s32.totalorder %s37, 0
      %p494 = por %p492, %p493
      %p495 = scmp.ne.s32.totalorder %s487, %s489
      %p496 = scmp.eq.s32.totalorder %s42, 3
      %p497 = por %p495, %p496
      %p498 = scmp.ne.s32.totalorder %s489, %s490
      %p499 = scmp.eq.s32.totalorder %s42, 0
      %p500 = por %p498, %p499
      %p501 = scmp.ne.s32.totalorder %s489, %s490
      %p502 = scmp.eq.s32.totalorder %s43, 3
      %p503 = por %p501, %p502
      %p505 = scmp.ne.s32.totalorder %s490, %s504
      %p506 = scmp.eq.s32.totalorder %s43, 0
      %p507 = por %p505, %p506
      %s509 = sadd.s32 %s508, 1
      %p512 = scmp.eq.s32.totalorder %s37, 3
      %p513 = scmp.ne.s32.totalorder %s508, %s510
      %p514 = scmp.eq.s32.totalorder %s37, 0
      %p515 = por %p513, %p514
      %p516 = scmp.ne.s32.totalorder %s508, %s510
      %p517 = scmp.eq.s32.totalorder %s42, 3
      %p518 = por %p516, %p517
      %p519 = scmp.ne.s32.totalorder %s510, %s511
      %p520 = scmp.eq.s32.totalorder %s42, 0
      %p521 = por %p519, %p520
      %p522 = scmp.ne.s32.totalorder %s510, %s511
      %p523 = scmp.eq.s32.totalorder %s43, 3
      %p524 = por %p522, %p523
      %p526 = scmp.ne.s32.totalorder %s511, %s525
      %p527 = scmp.eq.s32.totalorder %s43, 0
      %p528 = por %p526, %p527
      %s530 = sadd.s32 %s529, 1
      %p533 = scmp.eq.s32.totalorder %s37, 3
      %p534 = scmp.ne.s32.totalorder %s529, %s531
      %p535 = scmp.eq.s32.totalorder %s37, 0
      %p536 = por %p534, %p535
      %p537 = scmp.ne.s32.totalorder %s529, %s531
      %p538 = scmp.eq.s32.totalorder %s42, 3
      %p539 = por %p537, %p538
      %p540 = scmp.ne.s32.totalorder %s531, %s532
      %p541 = scmp.eq.s32.totalorder %s42, 0
      %p542 = por %p540, %p541
      %p543 = scmp.ne.s32.totalorder %s531, %s532
      %p544 = scmp.eq.s32.totalorder %s43, 3
      %p545 = por %p543, %p544
      %p547 = scmp.ne.s32.totalorder %s532, %s546
      %p548 = scmp.eq.s32.totalorder %s43, 0
      %p549 = por %p547, %p548
      %s551 = sadd.s32 %s550, 1
      %p554 = scmp.eq.s32.totalorder %s37, 3
      %p555 = scmp.ne.s32.totalorder %s550, %s552
      %p556 = scmp.eq.s32.totalorder %s37, 0
      %p557 = por %p555, %p556
      %p558 = scmp.ne.s32.totalorder %s550, %s552
      %p559 = scmp.eq.s32.totalorder %s42, 3
      %p560 = por %p558, %p559
      %p561 = scmp.ne.s32.totalorder %s552, %s553
      %p562 = scmp.eq.s32.totalorder %s42, 0
      %p563 = por %p561, %p562
      %p564 = scmp.ne.s32.totalorder %s552, %s553
      %p565 = scmp.eq.s32.totalorder %s43, 3
      %p566 = por %p564, %p565
      %p568 = scmp.ne.s32.totalorder %s553, %s567
      %p569 = scmp.eq.s32.totalorder %s43, 0
      %p570 = por %p568, %p569
      %s572 = sadd.s32 %s571, 1
      %p575 = scmp.eq.s32.totalorder %s37, 3
      %p576 = scmp.ne.s32.totalorder %s571, %s573
      %p577 = scmp.eq.s32.totalorder %s37, 0
      %p578 = por %p576, %p577
      %p579 = scmp.ne.s32.totalorder %s571, %s573
      %p580 = scmp.eq.s32.totalorder %s42, 3
      %p581 = por %p579, %p580
      %p582 = scmp.ne.s32.totalorder %s573, %s574
      %p583 = scmp.eq.s32.totalorder %s42, 0
      %p584 = por %p582, %p583
      %p585 = scmp.ne.s32.totalorder %s573, %s574
      %p586 = scmp.eq.s32.totalorder %s43, 3
      %p587 = por %p585, %p586
      %p589 = scmp.ne.s32.totalorder %s574, %s588
      %p590 = scmp.eq.s32.totalorder %s43, 0
      %p591 = por %p589, %p590
      %s593 = sadd.s32 %s592, 1
      %p596 = scmp.eq.s32.totalorder %s37, 3
      %p597 = scmp.ne.s32.totalorder %s592, %s594
      %p598 = scmp.eq.s32.totalorder %s37, 0
      %p599 = por %p597, %p598
      %p600 = scmp.ne.s32.totalorder %s592, %s594
      %p601 = scmp.eq.s32.totalorder %s42, 3
      %p602 = por %p600, %p601
      %p603 = scmp.ne.s32.totalorder %s594, %s595
      %p604 = scmp.eq.s32.totalorder %s42, 0
      %p605 = por %p603, %p604
      %p606 = scmp.ne.s32.totalorder %s594, %s595
      %p607 = scmp.eq.s32.totalorder %s43, 3
      %p608 = por %p606, %p607
      %p610 = scmp.ne.s32.totalorder %s595, %s609
      %p611 = scmp.eq.s32.totalorder %s43, 0
      %p612 = por %p610, %p611
      %s614 = sadd.s32 %s613, 1
      %p617 = scmp.eq.s32.totalorder %s37, 3
      %p618 = scmp.ne.s32.totalorder %s613, %s615
      %p619 = scmp.eq.s32.totalorder %s37, 0
      %p620 = por %p618, %p619
      %p621 = scmp.ne.s32.totalorder %s613, %s615
      %p622 = scmp.eq.s32.totalorder %s42, 3
      %p623 = por %p621, %p622
      %p624 = scmp.ne.s32.totalorder %s615, %s616
      %p625 = scmp.eq.s32.totalorder %s42, 0
      %p626 = por %p624, %p625
      %p627 = scmp.ne.s32.totalorder %s615, %s616
      %p628 = scmp.eq.s32.totalorder %s43, 3
      %p629 = por %p627, %p628
      %p631 = scmp.ne.s32.totalorder %s616, %s630
      %p632 = scmp.eq.s32.totalorder %s43, 0
      %p633 = por %p631, %p632
      %s635 = sadd.s32 %s634, 1
      %p638 = scmp.eq.s32.totalorder %s37, 3
      %p639 = scmp.ne.s32.totalorder %s634, %s636
      %p640 = scmp.eq.s32.totalorder %s37, 0
      %p641 = por %p639, %p640
      %p642 = scmp.ne.s32.totalorder %s634, %s636
      %p643 = scmp.eq.s32.totalorder %s42, 3
      %p644 = por %p642, %p643
      %p645 = scmp.ne.s32.totalorder %s636, %s637
      %p646 = scmp.eq.s32.totalorder %s42, 0
      %p647 = por %p645, %p646
      %p648 = scmp.ne.s32.totalorder %s636, %s637
      %p649 = scmp.eq.s32.totalorder %s43, 3
      %p650 = por %p648, %p649
      %p652 = scmp.ne.s32.totalorder %s637, %s651
      %p653 = scmp.eq.s32.totalorder %s43, 0
      %p654 = por %p652, %p653
      %s655 = ssub.s32 %s44, %s56
      %s656 = ssub.s32 %s45, %s52
      %s657 = sor.u32 %s655, %s656
      %p658 = scmp.eq.s32.totalorder %s657, 0
      %s660 = sadd.s32 %s659, 1
      %s661 = scalar_select %p658, %s659, %s660
      %p664 = pneg %p658
      %p665 = scmp.eq.s32.totalorder %s37, 3
      %p666 = por %p664, %p665
      %p667 = scmp.ne.s32.totalorder %s659, %s662
      %p668 = scmp.eq.s32.totalorder %s37, 0
      %p669 = por %p667, %p668
      %p670 = scmp.ne.s32.totalorder %s659, %s662
      %p671 = scmp.eq.s32.totalorder %s42, 3
      %p672 = por %p670, %p671
      %p673 = scmp.ne.s32.totalorder %s662, %s663
      %p674 = scmp.eq.s32.totalorder %s42, 0
      %p675 = por %p673, %p674
      %p676 = scmp.ne.s32.totalorder %s662, %s663
      %p677 = scmp.eq.s32.totalorder %s43, 3
      %p678 = por %p676, %p677
      %p680 = scmp.ne.s32.totalorder %s663, %s679
      %p681 = scmp.eq.s32.totalorder %s43, 0
      %p682 = por %p680, %p681
      %p683 = scmp.le.s32.totalorder 1, %s37
      %p684 = scmp.lt.s32.totalorder %s37, 5
      %p685 = pnand %p683, %p684
      %p686 = pneg %p685
      // Predicated region
      $region9: #{tpu_custom_call.1} parent=5 // pred_check
        _
      $region10: #{tpu_custom_call.1} parent=5 // pred_check_branch
        %688 = sbr.rel (%p685) target = $region12
      $region11: #{tpu_custom_call.1} parent=5 // pred_region
        %s689 = ssub.s32 %s37, 1
        // Predicated region
        $region13: #{tpu_custom_call.1} parent=11 // pred_check
          %p690 = pneg %p122
        $region14: #{tpu_custom_call.1} parent=11 // pred_check_branch
          %692 = sbr.rel (%p690) target = $region16
        $region15: #{tpu_custom_call.1} parent=11 // pred_region
          _
        $region16: #{tpu_custom_call.1} parent=11 // pred_fallthru
          _
        // Predicated region
        $region17: #{tpu_custom_call.1} parent=11 // pred_check
          %p693 = pneg %p143
        $region18: #{tpu_custom_call.1} parent=11 // pred_check_branch
          %695 = sbr.rel (%p693) target = $region20
        $region19: #{tpu_custom_call.1} parent=11 // pred_region
          _
        $region20: #{tpu_custom_call.1} parent=11 // pred_fallthru
          _
        // Predicated region
        $region21: #{tpu_custom_call.1} parent=11 // pred_check
          %p696 = pneg %p164
        $region22: #{tpu_custom_call.1} parent=11 // pred_check_branch
          %698 = sbr.rel (%p696) target = $region24
        $region23: #{tpu_custom_call.1} parent=11 // pred_region
          _
        $region24: #{tpu_custom_call.1} parent=11 // pred_fallthru
          _
        // Predicated region
        $region25: #{tpu_custom_call.1} parent=11 // pred_check
          %p699 = pneg %p185
        $region26: #{tpu_custom_call.1} parent=11 // pred_check_branch
          %701 = sbr.rel (%p699) target = $region28
        $region27: #{tpu_custom_call.1} parent=11 // pred_region
          _
        $region28: #{tpu_custom_call.1} parent=11 // pred_fallthru
          _
        // Predicated region
        $region29: #{tpu_custom_call.1} parent=11 // pred_check
          %p702 = pneg %p206
        $region30: #{tpu_custom_call.1} parent=11 // pred_check_branch
          %704 = sbr.rel (%p702) target = $region32
        $region31: #{tpu_custom_call.1} parent=11 // pred_region
          _
        $region32: #{tpu_custom_call.1} parent=11 // pred_fallthru
          _
        // Predicated region
        $region33: #{tpu_custom_call.1} parent=11 // pred_check
          %p705 = pneg %p227
        $region34: #{tpu_custom_call.1} parent=11 // pred_check_branch
          %707 = sbr.rel (%p705) target = $region36
        $region35: #{tpu_custom_call.1} parent=11 // pred_region
          _
        $region36: #{tpu_custom_call.1} parent=11 // pred_fallthru
          _
        // Predicated region
        $region37: #{tpu_custom_call.1} parent=11 // pred_check
          %p708 = pneg %p248
        $region38: #{tpu_custom_call.1} parent=11 // pred_check_branch
          %710 = sbr.rel (%p708) target = $region40
        $region39: #{tpu_custom_call.1} parent=11 // pred_region
          _
        $region40: #{tpu_custom_call.1} parent=11 // pred_fallthru
          _
        // Predicated region
        $region41: #{tpu_custom_call.1} parent=11 // pred_check
          %p711 = pneg %p269
        $region42: #{tpu_custom_call.1} parent=11 // pred_check_branch
          %713 = sbr.rel (%p711) target = $region44
        $region43: #{tpu_custom_call.1} parent=11 // pred_region
          _
        $region44: #{tpu_custom_call.1} parent=11 // pred_fallthru
          _
        // Predicated region
        $region45: #{tpu_custom_call.1} parent=11 // pred_check
          %p714 = pneg %p290
        $region46: #{tpu_custom_call.1} parent=11 // pred_check_branch
          %716 = sbr.rel (%p714) target = $region48
        $region47: #{tpu_custom_call.1} parent=11 // pred_region
          _
        $region48: #{tpu_custom_call.1} parent=11 // pred_fallthru
          _
        // Predicated region
        $region49: #{tpu_custom_call.1} parent=11 // pred_check
          %p717 = pneg %p311
        $region50: #{tpu_custom_call.1} parent=11 // pred_check_branch
          %719 = sbr.rel (%p717) target = $region52
        $region51: #{tpu_custom_call.1} parent=11 // pred_region
          _
        $region52: #{tpu_custom_call.1} parent=11 // pred_fallthru
          _
        // Predicated region
        $region53: #{tpu_custom_call.1} parent=11 // pred_check
          %p720 = pneg %p332
        $region54: #{tpu_custom_call.1} parent=11 // pred_check_branch
          %722 = sbr.rel (%p720) target = $region56
        $region55: #{tpu_custom_call.1} parent=11 // pred_region
          _
        $region56: #{tpu_custom_call.1} parent=11 // pred_fallthru
          _
        // Predicated region
        $region57: #{tpu_custom_call.1} parent=11 // pred_check
          %p723 = pneg %p353
        $region58: #{tpu_custom_call.1} parent=11 // pred_check_branch
          %725 = sbr.rel (%p723) target = $region60
        $region59: #{tpu_custom_call.1} parent=11 // pred_region
          _
        $region60: #{tpu_custom_call.1} parent=11 // pred_fallthru
          _
        // Predicated region
        $region61: #{tpu_custom_call.1} parent=11 // pred_check
          %p726 = pneg %p374
        $region62: #{tpu_custom_call.1} parent=11 // pred_check_branch
          %728 = sbr.rel (%p726) target = $region64
        $region63: #{tpu_custom_call.1} parent=11 // pred_region
          _
        $region64: #{tpu_custom_call.1} parent=11 // pred_fallthru
          _
        // Predicated region
        $region65: #{tpu_custom_call.1} parent=11 // pred_check
          %p729 = pneg %p395
        $region66: #{tpu_custom_call.1} parent=11 // pred_check_branch
          %731 = sbr.rel (%p729) target = $region68
        $region67: #{tpu_custom_call.1} parent=11 // pred_region
          _
        $region68: #{tpu_custom_call.1} parent=11 // pred_fallthru
          _
        // Predicated region
        $region69: #{tpu_custom_call.1} parent=11 // pred_check
          %p732 = pneg %p416
        $region70: #{tpu_custom_call.1} parent=11 // pred_check_branch
          %734 = sbr.rel (%p732) target = $region72
        $region71: #{tpu_custom_call.1} parent=11 // pred_region
          _
        $region72: #{tpu_custom_call.1} parent=11 // pred_fallthru
          _
        // Predicated region
        $region73: #{tpu_custom_call.1} parent=11 // pred_check
          %p735 = pneg %p437
        $region74: #{tpu_custom_call.1} parent=11 // pred_check_branch
          %737 = sbr.rel (%p735) target = $region76
        $region75: #{tpu_custom_call.1} parent=11 // pred_region
          _
        $region76: #{tpu_custom_call.1} parent=11 // pred_fallthru
          _
        // Predicated region
        $region77: #{tpu_custom_call.1} parent=11 // pred_check
          %p738 = pneg %p458
        $region78: #{tpu_custom_call.1} parent=11 // pred_check_branch
          %740 = sbr.rel (%p738) target = $region80
        $region79: #{tpu_custom_call.1} parent=11 // pred_region
          _
        $region80: #{tpu_custom_call.1} parent=11 // pred_fallthru
          _
        // Predicated region
        $region81: #{tpu_custom_call.1} parent=11 // pred_check
          %p741 = pneg %p479
        $region82: #{tpu_custom_call.1} parent=11 // pred_check_branch
          %743 = sbr.rel (%p741) target = $region84
        $region83: #{tpu_custom_call.1} parent=11 // pred_region
          _
        $region84: #{tpu_custom_call.1} parent=11 // pred_fallthru
          _
        // Predicated region
        $region85: #{tpu_custom_call.1} parent=11 // pred_check
          %p744 = pneg %p500
        $region86: #{tpu_custom_call.1} parent=11 // pred_check_branch
          %746 = sbr.rel (%p744) target = $region88
        $region87: #{tpu_custom_call.1} parent=11 // pred_region
          _
        $region88: #{tpu_custom_call.1} parent=11 // pred_fallthru
          _
        // Predicated region
        $region89: #{tpu_custom_call.1} parent=11 // pred_check
          %p747 = pneg %p521
        $region90: #{tpu_custom_call.1} parent=11 // pred_check_branch
          %749 = sbr.rel (%p747) target = $region92
        $region91: #{tpu_custom_call.1} parent=11 // pred_region
          _
        $region92: #{tpu_custom_call.1} parent=11 // pred_fallthru
          _
        // Predicated region
        $region93: #{tpu_custom_call.1} parent=11 // pred_check
          %p750 = pneg %p542
        $region94: #{tpu_custom_call.1} parent=11 // pred_check_branch
          %752 = sbr.rel (%p750) target = $region96
        $region95: #{tpu_custom_call.1} parent=11 // pred_region
          _
        $region96: #{tpu_custom_call.1} parent=11 // pred_fallthru
          _
        // Predicated region
        $region97: #{tpu_custom_call.1} parent=11 // pred_check
          %p753 = pneg %p563
        $region98: #{tpu_custom_call.1} parent=11 // pred_check_branch
          %755 = sbr.rel (%p753) target = $region100
        $region99: #{tpu_custom_call.1} parent=11 // pred_region
          _
        $region100: #{tpu_custom_call.1} parent=11 // pred_fallthru
          _
        // Predicated region
        $region101: #{tpu_custom_call.1} parent=11 // pred_check
          %p756 = pneg %p584
        $region102: #{tpu_custom_call.1} parent=11 // pred_check_branch
          %758 = sbr.rel (%p756) target = $region104
        $region103: #{tpu_custom_call.1} parent=11 // pred_region
          _
        $region104: #{tpu_custom_call.1} parent=11 // pred_fallthru
          _
        // Predicated region
        $region105: #{tpu_custom_call.1} parent=11 // pred_check
          %p759 = pneg %p605
        $region106: #{tpu_custom_call.1} parent=11 // pred_check_branch
          %761 = sbr.rel (%p759) target = $region108
        $region107: #{tpu_custom_call.1} parent=11 // pred_region
          _
        $region108: #{tpu_custom_call.1} parent=11 // pred_fallthru
          _
        // Predicated region
        $region109: #{tpu_custom_call.1} parent=11 // pred_check
          %p762 = pneg %p626
        $region110: #{tpu_custom_call.1} parent=11 // pred_check_branch
          %764 = sbr.rel (%p762) target = $region112
        $region111: #{tpu_custom_call.1} parent=11 // pred_region
          _
        $region112: #{tpu_custom_call.1} parent=11 // pred_fallthru
          _
        // Predicated region
        $region113: #{tpu_custom_call.1} parent=11 // pred_check
          %p765 = pneg %p647
        $region114: #{tpu_custom_call.1} parent=11 // pred_check_branch
          %767 = sbr.rel (%p765) target = $region116
        $region115: #{tpu_custom_call.1} parent=11 // pred_region
          _
        $region116: #{tpu_custom_call.1} parent=11 // pred_fallthru
          _
      $region12: #{tpu_custom_call.1} parent=5 // pred_fallthru
        _
      %p768 = scmp.lt.s32.totalorder %s37, 4
      // Predicated region
      $region117: #{tpu_custom_call.1} parent=5 // pred_check
        %p769 = pneg %p768
      $region118: #{tpu_custom_call.1} parent=5 // pred_check_branch
        %771 = sbr.rel (%p769) target = $region120
      $region119: #{tpu_custom_call.1} parent=5 // pred_region
        // Predicated region
        $region121: #{tpu_custom_call.1} parent=119 // pred_check
          %p772 = pneg %p69
        $region122: #{tpu_custom_call.1} parent=119 // pred_check_branch
          %774 = sbr.rel (%p772) target = $region124
        $region123: #{tpu_custom_call.1} parent=119 // pred_region
          %p775 = scmp.lt.s32.totalorder %s44, 1
          %s776 = scalar_select %p775, %s44, 1
          %s777 = smul.addr %s776, 2
          %s778 = smul.addr %s777, 8
          %s779 = scalar_lea.vmem %s0, %s778
        $region124: #{tpu_custom_call.1} parent=119 // pred_fallthru
          _
        // Predicated region
        $region125: #{tpu_custom_call.1} parent=119 // pred_check
          %p780 = pneg %p95
        $region126: #{tpu_custom_call.1} parent=119 // pred_check_branch
          %782 = sbr.rel (%p780) target = $region128
        $region127: #{tpu_custom_call.1} parent=119 // pred_region
          %p783 = scmp.lt.s32.totalorder %s44, 1
          %s784 = scalar_select %p783, %s44, 1
          %s785 = smul.addr %s784, 4
          %s786 = scalar_lea.vmem %s1, %s785
        $region128: #{tpu_custom_call.1} parent=119 // pred_fallthru
          _
      $region120: #{tpu_custom_call.1} parent=5 // pred_fallthru
        _
      %p787 = scmp.le.s32.totalorder 1, %s37
      %p788 = scmp.lt.s32.totalorder %s37, 5
      %p789 = pnand %p787, %p788
      %p790 = pneg %p789
      // Predicated region
      $region129: #{tpu_custom_call.1} parent=5 // pred_check
        _
      $region130: #{tpu_custom_call.1} parent=5 // pred_check_branch
        %792 = sbr.rel (%p789) target = $region132
      $region131: #{tpu_custom_call.1} parent=5 // pred_region
        %s793 = ssub.s32 %s37, 1
        %p794 = scmp.lt.s32.totalorder %s46, 1
        %s795 = scalar_select %p794, %s46, 1
        %s796 = smul.addr %s795, 2
        %s797 = smul.addr %s796, 8
        %s798 = scalar_lea.vmem %s0, %s797
        %p799 = pneg %p75
        %p800 = pneg %p72
        %p801 = scmp.lt.s32.totalorder %s46, 1
        %s802 = scalar_select %p801, %s46, 1
        %s803 = smul.addr %s802, 4
        %s804 = scalar_lea.vmem %s1, %s803
        %p805 = pneg %p101
        %p806 = pneg %p98
        %p807 = pneg %p122
        %p808 = pneg %p119
        %p809 = pneg %p143
        %p810 = pneg %p140
        %p811 = pneg %p164
        %p812 = pneg %p161
        %p813 = pneg %p185
        %p814 = pneg %p182
        %p815 = pneg %p206
        %p816 = pneg %p203
        %p817 = pneg %p227
        %p818 = pneg %p224
        %p819 = pneg %p248
        %p820 = pneg %p245
        %p821 = pneg %p269
        %p822 = pneg %p266
        %p823 = pneg %p290
        %p824 = pneg %p287
        %p825 = pneg %p311
        %p826 = pneg %p308
        %p827 = pneg %p332
        %p828 = pneg %p329
        %p829 = pneg %p353
        %p830 = pneg %p350
        %p831 = pneg %p374
        %p832 = pneg %p371
        %p833 = pneg %p395
        %p834 = pneg %p392
        %p835 = pneg %p416
        %p836 = pneg %p413
        %p837 = pneg %p437
        %p838 = pneg %p434
        %p839 = pneg %p458
        %p840 = pneg %p455
        %p841 = pneg %p479
        %p842 = pneg %p476
        %p843 = pneg %p500
        %p844 = pneg %p497
        %p845 = pneg %p521
        %p846 = pneg %p518
        %p847 = pneg %p542
        %p848 = pneg %p539
        %p849 = pneg %p563
        %p850 = pneg %p560
        %p851 = pneg %p584
        %p852 = pneg %p581
        %p853 = pneg %p605
        %p854 = pneg %p602
        %p855 = pneg %p626
        %p856 = pneg %p623
        %p857 = pneg %p647
        %p858 = pneg %p644
        %p859 = pneg %p675
        %p860 = pneg %p672
        %s861 = sand.u32 %s662, 1
        %s862 = scalar_lea.sflag [#allocation7], %s861
        %s863 = sand.u32 %s662, 1
        %s864 = smul.addr %s863, 8
        %s865 = scalar_lea.vmem [#allocation6], %s864
        %p866 = scmp.lt.s32.totalorder %s46, 1
        %s867 = scalar_select %p866, %s46, 1
        %s868 = smul.addr %s867, 2
        %s869 = smul.addr %s868, 8
        %s870 = scalar_lea.vmem %s0, %s869
        %p871 = scmp.lt.s32.totalorder %s46, 1
        %s872 = scalar_select %p871, %s46, 1
        %s873 = smul.addr %s872, 4
        %s874 = scalar_lea.vmem %s1, %s873
        %p876 = scmp.eq.s32.totalorder %s47, 0
        // Predicated region
        $region133: #{tpu_custom_call.1} parent=131 // pred_check
          %p877 = pneg %p876
        $region134: #{tpu_custom_call.1} parent=131 // pred_check_branch
          %879 = sbr.rel (%p877) target = $region136
        $region135: #{tpu_custom_call.1} parent=131 // pred_region
          %v880 = vld [vmem:[%s870] sm:$0xff]
          %v881 = vld [vmem:[%s870 + $0x8] sm:$0xff]
          %v882 = vld [vmem:[%s2] sm:$0x1]
          %v883 = vld [vmem:[%s3] sm:$0x1]
          %vm884 = vcmask 261120
          %v885 = vsel %vm884, %v880, 0.0
          %886 = vadd.xlane.f32.xlu0 %v885
          %v887 = vpop.xlane.xlu0 %886
          %v888 = vsel %vm884, %v881, 0.0
          %889 = vadd.xlane.f32.xlu0 %v888
          %v890 = vpop.xlane.xlu0 %889
          %v891 = vrcp.pop 32.0
          %v892 = vmul.f32 %v887, %v891
          %v893 = vmul.f32 %v890, %v891
          %v894 = vsub.f32 %v880, %v892
          %v895 = vsub.f32 %v881, %v893
          %v896 = vmul.f32 %v894, %v894
          %v897 = vmul.f32 %v895, %v895
          %v898 = vsel %vm884, %v896, 0.0
          %899 = vadd.xlane.f32.xlu0 %v898
          %v900 = vpop.xlane.xlu0 %899
          %v901 = vsel %vm884, %v897, 0.0
          %902 = vadd.xlane.f32.xlu0 %v901
          %v903 = vpop.xlane.xlu0 %902
          %v904 = vmul.f32 %v900, %v891
          %v905 = vmul.f32 %v903, %v891
          %v906 = vadd.f32 %v904, 1e-05
          %v907 = vadd.f32 %v905, 1e-05
          %v908 = vrsqrt.pop %v906
          %v909 = vrsqrt.pop %v907
          %v910 = vmul.f32 %v894, %v908
          %v911 = vmul.f32 %v895, %v909
          %v913 = vlaneseq
          %v914 = vshrl.u32 %v913, 7
          %v915 = vsub.s32 0, %v914
          %v916 = vrot.slane %v882, %v915
          %v918 = vmul.f32 %v910, %v916
          %v919 = vmul.f32 %v911, %v916
          %v921 = vlaneseq
          %v922 = vshrl.u32 %v921, 7
          %v923 = vsub.s32 0, %v922
          %v924 = vrot.slane %v883, %v923
          %v926 = vadd.f32 %v918, %v924
          %v927 = vadd.f32 %v919, %v924
          %v928 = vpack.c.bf16 %v927, %v926
          %v929 = vld [vmem:[%s6] sm:$0xf]
          %v930 = vld [vmem:[%s6 + $0x4] sm:$0xf]
          %v931 = vld [vmem:[%s6 + $0x8] sm:$0xf]
          %v932 = vld [vmem:[%s6 + $0xc] sm:$0xf]
          %v933 = vld [vmem:[%s7] sm:$0x1]
          %v935 = vlaneseq
          %v936 = vshrl.u32 %v935, 7
          %v937 = vsub.s32 0, %v936
          %v938 = vrot.slane %v933, %v937
          %v944 = vunpack.c.l.b16 %v929
          %v945 = vunpack.c.l.b16 %v930
          %v946 = vunpack.c.l.b16 %v931
          %v947 = vunpack.c.l.b16 %v932
          %v948 = vpack.c.b16 %v945, %v944
          %v949 = vpack.c.b16 %v947, %v946
          %v953 = vsel %vm884, %v928, 0
          %955 = vmatprep.subr.bf16.mxu0 0
          %956 = vmatpush1.bf16.msra.mxu0 %v948
          %957 = vmatprep.subr.bf16.mxu0 0
          %958 = vmatpush1.bf16.msra.mxu0 %v949
          %959 = vmatprep.subr.bf16.mxu0 0
          %960 = vmatpush1.bf16.msra.mxu0 0
          %961 = vmatprep.subr.bf16.mxu0 0
          %962 = vmatpush1.bf16.msra.mxu0 0
          %963 = vmatprep.subr.bf16.mxu0 0
          %964 = vmatpush1.bf16.msra.mxu0 0
          %965 = vmatprep.subr.bf16.mxu0 0
          %966 = vmatpush1.bf16.msra.mxu0 0
          %967 = vmatprep.subr.bf16.mxu0 0
          %968 = vmatpush1.bf16.msra.mxu0 0
          %969 = vmatprep.subr.bf16.mxu0 0
          %970 = vmatpush1.bf16.msra.mxu0 0
          %971 = vmatprep.subr.bf16.mxu0 0
          %972 = vmatpush1.bf16.msra.mxu0 0
          %973 = vmatprep.subr.bf16.mxu0 0
          %974 = vmatpush1.bf16.msra.mxu0 0
          %975 = vmatprep.subr.bf16.mxu0 0
          %976 = vmatpush1.bf16.msra.mxu0 0
          %977 = vmatprep.subr.bf16.mxu0 0
          %978 = vmatpush1.bf16.msra.mxu0 0
          %979 = vmatprep.subr.bf16.mxu0 0
          %980 = vmatpush1.bf16.msra.mxu0 0
          %981 = vmatprep.subr.bf16.mxu0 0
          %982 = vmatpush1.bf16.msra.mxu0 0
          %983 = vmatprep.subr.bf16.mxu0 0
          %984 = vmatpush1.bf16.msra.mxu0 0
          %985 = vmatprep.subr.bf16.mxu0 0
          %986 = vmatpush1.bf16.msra.mxu0 0
          %987 = vmatprep.mubr.bf16.mxu0 0
          %988 = vmatmul.mubr.bf16.gmra.mrb[0].mxu0 %v953
          %v989 = vpop.f32.mrb[0].mxu0
          %v990 = vadd.f32 %v938, %v989
          %v991 = vpop.f32.mrb[0].mxu0
          %v992 = vpop.f32.mrb[0].mxu0
          %v993 = vadd.f32 %v938, %v992
          %v994 = vpop.f32.mrb[0].mxu0
          %995 = vdwg.mxu0
          %v996 = vpack.c.bf16 %v993, %v990
          %vm997 = vcmask 130048
          %998 = vst.msk [vmem:[#allocation2] sm:$0xff] %vm997, %v996
          %v999 = vld [vmem:[%s8] sm:$0xf]
          %v1000 = vld [vmem:[%s8 + $0x4] sm:$0xf]
          %v1001 = vld [vmem:[%s8 + $0x8] sm:$0xf]
          %v1002 = vld [vmem:[%s8 + $0xc] sm:$0xf]
          %v1003 = vld [vmem:[%s9] sm:$0x1]
          %v1005 = vlaneseq
          %v1006 = vshrl.u32 %v1005, 7
          %v1007 = vsub.s32 0, %v1006
          %v1008 = vrot.slane %v1003, %v1007
          %v1014 = vunpack.c.l.b16 %v999
          %v1015 = vunpack.c.l.b16 %v1000
          %v1016 = vunpack.c.l.b16 %v1001
          %v1017 = vunpack.c.l.b16 %v1002
          %v1018 = vpack.c.b16 %v1015, %v1014
          %v1019 = vpack.c.b16 %v1017, %v1016
          %1022 = vmatprep.subr.bf16.mxu0 0
          %1023 = vmatpush1.bf16.msra.mxu0 %v1018
          %1024 = vmatprep.subr.bf16.mxu0 0
          %1025 = vmatpush1.bf16.msra.mxu0 %v1019
          %1026 = vmatprep.subr.bf16.mxu0 0
          %1027 = vmatpush1.bf16.msra.mxu0 0
          %1028 = vmatprep.subr.bf16.mxu0 0
          %1029 = vmatpush1.bf16.msra.mxu0 0
          %1030 = vmatprep.subr.bf16.mxu0 0
          %1031 = vmatpush1.bf16.msra.mxu0 0
          %1032 = vmatprep.subr.bf16.mxu0 0
          %1033 = vmatpush1.bf16.msra.mxu0 0
          %1034 = vmatprep.subr.bf16.mxu0 0
          %1035 = vmatpush1.bf16.msra.mxu0 0
          %1036 = vmatprep.subr.bf16.mxu0 0
          %1037 = vmatpush1.bf16.msra.mxu0 0
          %1038 = vmatprep.subr.bf16.mxu0 0
          %1039 = vmatpush1.bf16.msra.mxu0 0
          %1040 = vmatprep.subr.bf16.mxu0 0
          %1041 = vmatpush1.bf16.msra.mxu0 0
          %1042 = vmatprep.subr.bf16.mxu0 0
          %1043 = vmatpush1.bf16.msra.mxu0 0
          %1044 = vmatprep.subr.bf16.mxu0 0
          %1045 = vmatpush1.bf16.msra.mxu0 0
          %1046 = vmatprep.subr.bf16.mxu0 0
          %1047 = vmatpush1.bf16.msra.mxu0 0
          %1048 = vmatprep.subr.bf16.mxu0 0
          %1049 = vmatpush1.bf16.msra.mxu0 0
          %1050 = vmatprep.subr.bf16.mxu0 0
          %1051 = vmatpush1.bf16.msra.mxu0 0
          %1052 = vmatprep.subr.bf16.mxu0 0
          %1053 = vmatpush1.bf16.msra.mxu0 0
          %1054 = vmatprep.mubr.bf16.mxu0 0
          %1055 = vmatmul.mubr.bf16.gmra.mrb[0].mxu0 %v953
          %v1056 = vpop.f32.mrb[0].mxu0
          %v1057 = vadd.f32 %v1008, %v1056
          %v1058 = vpop.f32.mrb[0].mxu0
          %v1059 = vpop.f32.mrb[0].mxu0
          %v1060 = vadd.f32 %v1008, %v1059
          %v1061 = vpop.f32.mrb[0].mxu0
          %1062 = vdwg.mxu0
          %v1063 = vpack.c.bf16 %v1060, %v1057
          %1064 = vst.msk [vmem:[#allocation3] sm:$0xff] %vm997, %v1063
          %v1065 = vld [vmem:[%s874] sm:$0xf]
          %v1066 = vld [vmem:[%s16] sm:$0xf]
          %v1067 = vld [vmem:[%s16 + $0x4] sm:$0xf]
          %v1068 = vld [vmem:[%s17] sm:$0x1]
          %v1070 = vlaneseq
          %v1071 = vshrl.u32 %v1070, 7
          %v1072 = vsub.s32 0, %v1071
          %v1073 = vrot.slane %v1068, %v1072
          %v1077 = vunpack.c.l.b16 %v1066
          %v1078 = vunpack.c.l.b16 %v1067
          %v1079 = vpack.c.b16 %v1078, %v1077
          %v1082 = vsel %vm997, %v1065, 0
          %1084 = vmatprep.subr.bf16.mxu0 0
          %1085 = vmatpush1.bf16.msra.mxu0 %v1079
          %1086 = vmatprep.subr.bf16.mxu0 0
          %1087 = vmatpush1.bf16.msra.mxu0 0
          %1088 = vmatprep.subr.bf16.mxu0 0
          %1089 = vmatpush1.bf16.msra.mxu0 0
          %1090 = vmatprep.subr.bf16.mxu0 0
          %1091 = vmatpush1.bf16.msra.mxu0 0
          %1092 = vmatprep.subr.bf16.mxu0 0
          %1093 = vmatpush1.bf16.msra.mxu0 0
          %1094 = vmatprep.subr.bf16.mxu0 0
          %1095 = vmatpush1.bf16.msra.mxu0 0
          %1096 = vmatprep.subr.bf16.mxu0 0
          %1097 = vmatpush1.bf16.msra.mxu0 0
          %1098 = vmatprep.subr.bf16.mxu0 0
          %1099 = vmatpush1.bf16.msra.mxu0 0
          %1100 = vmatprep.subr.bf16.mxu0 0
          %1101 = vmatpush1.bf16.msra.mxu0 0
          %1102 = vmatprep.subr.bf16.mxu0 0
          %1103 = vmatpush1.bf16.msra.mxu0 0
          %1104 = vmatprep.subr.bf16.mxu0 0
          %1105 = vmatpush1.bf16.msra.mxu0 0
          %1106 = vmatprep.subr.bf16.mxu0 0
          %1107 = vmatpush1.bf16.msra.mxu0 0
          %1108 = vmatprep.subr.bf16.mxu0 0
          %1109 = vmatpush1.bf16.msra.mxu0 0
          %1110 = vmatprep.subr.bf16.mxu0 0
          %1111 = vmatpush1.bf16.msra.mxu0 0
          %1112 = vmatprep.subr.bf16.mxu0 0
          %1113 = vmatpush1.bf16.msra.mxu0 0
          %1114 = vmatprep.subr.bf16.mxu0 0
          %1115 = vmatpush1.bf16.msra.mxu0 0
          %1116 = vmatprep.mubr.bf16.mxu0 0
          %1117 = vmatmul.mubr.bf16.gmra.mrb[0].mxu0 %v1082
          %v1118 = vpop.f32.mrb[0].mxu0
          %v1119 = vadd.f32 %v1073, %v1118
          %v1120 = vpop.f32.mrb[0].mxu0
          %v1121 = vpop.f32.mrb[0].mxu0
          %v1122 = vpop.f32.mrb[0].mxu0
          %1123 = vdwg.mxu0
          %v1124 = vpack.c.bf16 %v1119, %v1119
          %vm1125 = vcmask 125952
          %1126 = vst.msk [vmem:[#allocation4] sm:$0xf] %vm1125, %v1124
          %v1127 = vld [vmem:[%s18] sm:$0xf]
          %v1128 = vld [vmem:[%s18 + $0x4] sm:$0xf]
          %v1129 = vld [vmem:[%s19] sm:$0x1]
          %v1131 = vlaneseq
          %v1132 = vshrl.u32 %v1131, 7
          %v1133 = vsub.s32 0, %v1132
          %v1134 = vrot.slane %v1129, %v1133
          %v1138 = vunpack.c.l.b16 %v1127
          %v1139 = vunpack.c.l.b16 %v1128
          %v1140 = vpack.c.b16 %v1139, %v1138
          %1142 = vmatprep.subr.bf16.mxu0 0
          %1143 = vmatpush1.bf16.msra.mxu0 %v1140
          %1144 = vmatprep.subr.bf16.mxu0 0
          %1145 = vmatpush1.bf16.msra.mxu0 0
          %1146 = vmatprep.subr.bf16.mxu0 0
          %1147 = vmatpush1.bf16.msra.mxu0 0
          %1148 = vmatprep.subr.bf16.mxu0 0
          %1149 = vmatpush1.bf16.msra.mxu0 0
          %1150 = vmatprep.subr.bf16.mxu0 0
          %1151 = vmatpush1.bf16.msra.mxu0 0
          %1152 = vmatprep.subr.bf16.mxu0 0
          %1153 = vmatpush1.bf16.msra.mxu0 0
          %1154 = vmatprep.subr.bf16.mxu0 0
          %1155 = vmatpush1.bf16.msra.mxu0 0
          %1156 = vmatprep.subr.bf16.mxu0 0
          %1157 = vmatpush1.bf16.msra.mxu0 0
          %1158 = vmatprep.subr.bf16.mxu0 0
          %1159 = vmatpush1.bf16.msra.mxu0 0
          %1160 = vmatprep.subr.bf16.mxu0 0
          %1161 = vmatpush1.bf16.msra.mxu0 0
          %1162 = vmatprep.subr.bf16.mxu0 0
          %1163 = vmatpush1.bf16.msra.mxu0 0
          %1164 = vmatprep.subr.bf16.mxu0 0
          %1165 = vmatpush1.bf16.msra.mxu0 0
          %1166 = vmatprep.subr.bf16.mxu0 0
          %1167 = vmatpush1.bf16.msra.mxu0 0
          %1168 = vmatprep.subr.bf16.mxu0 0
          %1169 = vmatpush1.bf16.msra.mxu0 0
          %1170 = vmatprep.subr.bf16.mxu0 0
          %1171 = vmatpush1.bf16.msra.mxu0 0
          %1172 = vmatprep.subr.bf16.mxu0 0
          %1173 = vmatpush1.bf16.msra.mxu0 0
          %1174 = vmatprep.mubr.bf16.mxu0 0
          %1175 = vmatmul.mubr.bf16.gmra.mrb[0].mxu0 %v1082
          %v1176 = vpop.f32.mrb[0].mxu0
          %v1177 = vadd.f32 %v1134, %v1176
          %v1178 = vpop.f32.mrb[0].mxu0
          %v1179 = vpop.f32.mrb[0].mxu0
          %v1180 = vpop.f32.mrb[0].mxu0
          %1181 = vdwg.mxu0
          %v1182 = vpack.c.bf16 %v1177, %v1177
          %1183 = vst.msk [vmem:[#allocation5] sm:$0xf] %vm1125, %v1182
        $region136: #{tpu_custom_call.1} parent=131 // pred_fallthru
          _
        %s1184 = smul.u32 %s47, 8
        %s1185 = scalar_lea.vmem %s870, %s1184
        %v1186 = vld [vmem:[%s1185] sm:$0xff]
        %v1187 = vld [vmem:[%s2] sm:$0x1]
        %v1188 = vld [vmem:[%s3] sm:$0x1]
        %vm1189 = vcmask 261120
        %v1190 = vsel %vm1189, %v1186, 0.0
        %1191 = vadd.xlane.f32.xlu0 %v1190
        %v1192 = vpop.xlane.xlu0 %1191
        %v1193 = vrcp.pop 32.0
        %v1194 = vmul.f32 %v1192, %v1193
        %v1195 = vsub.f32 %v1186, %v1194
        %v1196 = vmul.f32 %v1195, %v1195
        %v1197 = vsel %vm1189, %v1196, 0.0
        %1198 = vadd.xlane.f32.xlu0 %v1197
        %v1199 = vpop.xlane.xlu0 %1198
        %v1200 = vmul.f32 %v1199, %v1193
        %v1201 = vadd.f32 %v1200, 1e-05
        %v1202 = vrsqrt.pop %v1201
        %v1203 = vmul.f32 %v1195, %v1202
        %v1205 = vlaneseq
        %v1206 = vshrl.u32 %v1205, 7
        %v1207 = vsub.s32 0, %v1206
        %v1208 = vrot.slane %v1187, %v1207
        %v1210 = vmul.f32 %v1203, %v1208
        %v1212 = vlaneseq
        %v1213 = vshrl.u32 %v1212, 7
        %v1214 = vsub.s32 0, %v1213
        %v1215 = vrot.slane %v1188, %v1214
        %v1217 = vadd.f32 %v1210, %v1215
        %v1218 = vld [vmem:[#allocation2] sm:$0xff]
        %v1219 = vld [vmem:[#allocation3] sm:$0xff]
        %v1220 = vpack.c.bf16 %v1217, %v1217
        %v1221 = vld [vmem:[%s4] sm:$0xf]
        %v1222 = vld [vmem:[%s4 + $0x4] sm:$0xf]
        %v1223 = vld [vmem:[%s4 + $0x8] sm:$0xf]
        %v1224 = vld [vmem:[%s4 + $0xc] sm:$0xf]
        %v1225 = vld [vmem:[%s5] sm:$0x1]
        %v1227 = vlaneseq
        %v1228 = vshrl.u32 %v1227, 7
        %v1229 = vsub.s32 0, %v1228
        %v1230 = vrot.slane %v1225, %v1229
        %v1236 = vunpack.c.l.b16 %v1221
        %v1237 = vunpack.c.l.b16 %v1222
        %v1238 = vunpack.c.l.b16 %v1223
        %v1239 = vunpack.c.l.b16 %v1224
        %v1240 = vpack.c.b16 %v1237, %v1236
        %v1241 = vpack.c.b16 %v1239, %v1238
        %v1245 = vsel %vm1189, %v1220, 0
        %1247 = vmatprep.subr.bf16.mxu0 0
        %1248 = vmatpush1.bf16.msra.mxu0 %v1240
        %1249 = vmatprep.subr.bf16.mxu0 0
        %1250 = vmatpush1.bf16.msra.mxu0 %v1241
        %1251 = vmatprep.subr.bf16.mxu0 0
        %1252 = vmatpush1.bf16.msra.mxu0 0
        %1253 = vmatprep.subr.bf16.mxu0 0
        %1254 = vmatpush1.bf16.msra.mxu0 0
        %1255 = vmatprep.subr.bf16.mxu0 0
        %1256 = vmatpush1.bf16.msra.mxu0 0
        %1257 = vmatprep.subr.bf16.mxu0 0
        %1258 = vmatpush1.bf16.msra.mxu0 0
        %1259 = vmatprep.subr.bf16.mxu0 0
        %1260 = vmatpush1.bf16.msra.mxu0 0
        %1261 = vmatprep.subr.bf16.mxu0 0
        %1262 = vmatpush1.bf16.msra.mxu0 0
        %1263 = vmatprep.subr.bf16.mxu0 0
        %1264 = vmatpush1.bf16.msra.mxu0 0
        %1265 = vmatprep.subr.bf16.mxu0 0
        %1266 = vmatpush1.bf16.msra.mxu0 0
        %1267 = vmatprep.subr.bf16.mxu0 0
        %1268 = vmatpush1.bf16.msra.mxu0 0
        %1269 = vmatprep.subr.bf16.mxu0 0
        %1270 = vmatpush1.bf16.msra.mxu0 0
        %1271 = vmatprep.subr.bf16.mxu0 0
        %1272 = vmatpush1.bf16.msra.mxu0 0
        %1273 = vmatprep.subr.bf16.mxu0 0
        %1274 = vmatpush1.bf16.msra.mxu0 0
        %1275 = vmatprep.subr.bf16.mxu0 0
        %1276 = vmatpush1.bf16.msra.mxu0 0
        %1277 = vmatprep.subr.bf16.mxu0 0
        %1278 = vmatpush1.bf16.msra.mxu0 0
        %1279 = vmatprep.mubr.bf16.mxu0 0
        %1280 = vmatmul.mubr.bf16.gmra.mrb[0].mxu0 %v1245
        %v1281 = vpop.f32.mrb[0].mxu0
        %v1282 = vadd.f32 %v1230, %v1281
        %v1283 = vpop.f32.mrb[0].mxu0
        %v1284 = vpop.f32.mrb[0].mxu0
        %v1285 = vpop.f32.mrb[0].mxu0
        %1286 = vdwg.mxu0
        %v1287 = vpack.c.bf16 %v1282, %v1282
        %vm1288 = vcmask 64512
        %v1290 = vsel %vm1288, %v1287, 0
        %v1293 = vsel %vm1288, %v1218, 0
        %1295 = vmatprep.subr.bf16.mxu0 0
        %1296 = vmatpush1.bf16.xpose.msra.mxu0 %v1293
        %1297 = vmatprep.subr.bf16.mxu0 0
        %1298 = vmatpush1.bf16.xpose.msra.mxu0 0
        %1299 = vmatprep.subr.bf16.mxu0 0
        %1300 = vmatpush1.bf16.xpose.msra.mxu0 0
        %1301 = vmatprep.subr.bf16.mxu0 0
        %1302 = vmatpush1.bf16.xpose.msra.mxu0 0
        %1303 = vmatprep.subr.bf16.mxu0 0
        %1304 = vmatpush1.bf16.xpose.msra.mxu0 0
        %1305 = vmatprep.subr.bf16.mxu0 0
        %1306 = vmatpush1.bf16.xpose.msra.mxu0 0
        %1307 = vmatprep.subr.bf16.mxu0 0
        %1308 = vmatpush1.bf16.xpose.msra.mxu0 0
        %1309 = vmatprep.subr.bf16.mxu0 0
        %1310 = vmatpush1.bf16.xpose.msra.mxu0 0
        %1311 = vmatprep.subr.bf16.mxu0 0
        %1312 = vmatpush1.bf16.xpose.msra.mxu0 0
        %1313 = vmatprep.subr.bf16.mxu0 0
        %1314 = vmatpush1.bf16.xpose.msra.mxu0 0
        %1315 = vmatprep.subr.bf16.mxu0 0
        %1316 = vmatpush1.bf16.xpose.msra.mxu0 0
        %1317 = vmatprep.subr.bf16.mxu0 0
        %1318 = vmatpush1.bf16.xpose.msra.mxu0 0
        %1319 = vmatprep.subr.bf16.mxu0 0
        %1320 = vmatpush1.bf16.xpose.msra.mxu0 0
        %1321 = vmatprep.subr.bf16.mxu0 0
        %1322 = vmatpush1.bf16.xpose.msra.mxu0 0
        %1323 = vmatprep.subr.bf16.mxu0 0
        %1324 = vmatpush1.bf16.xpose.msra.mxu0 0
        %1325 = vmatprep.subr.bf16.mxu0 0
        %1326 = vmatpush1.bf16.xpose.msra.mxu0 0
        %1327 = vmatprep.mubr.bf16.mxu0 0
        %1328 = vmatmul.mubr.bf16.gmra.mrb[0].mxu0 %v1290
        %v1329 = vpop.f32.mrb[0].mxu0
        %v1330 = vadd.f32 0.0, %v1329
        %v1331 = vpop.f32.mrb[0].mxu0
        %v1332 = vpop.f32.mrb[0].mxu0
        %v1333 = vpop.f32.mrb[0].mxu0
        %1334 = vdwg.mxu0
        %vm1335 = vcmask 130048
        %v1336 = vsel %vm1335, %v1330, -inf
        %1337 = vmax.xlane.f32.xlu0 %v1336
        %v1338 = vpop.xlane.xlu0 %1337
        %v1339 = vsub.f32 %v1330, %v1338
        %v1340 = vmul.f32 %v1339, 1.442695
        %v1341 = vpow.pop %v1340
        %v1342 = vsel %vm1335, %v1341, 0.0
        %1343 = vadd.xlane.f32.xlu0 %v1342
        %v1344 = vpop.xlane.xlu0 %1343
        %v1345 = vrcp.pop %v1344
        %v1346 = vpack.c.bf16 %v1341, %v1341
        %v1348 = vsel %vm1335, %v1346, 0
        %1350 = vmatprep.subr.bf16.mxu0 0
        %1351 = vmatpush1.bf16.msra.mxu0 %v1219
        %1352 = vmatprep.subr.bf16.mxu0 0
        %1353 = vmatpush1.bf16.msra.mxu0 0
        %1354 = vmatprep.subr.bf16.mxu0 0
        %1355 = vmatpush1.bf16.msra.mxu0 0
        %1356 = vmatprep.subr.bf16.mxu0 0
        %1357 = vmatpush1.bf16.msra.mxu0 0
        %1358 = vmatprep.subr.bf16.mxu0 0
        %1359 = vmatpush1.bf16.msra.mxu0 0
        %1360 = vmatprep.subr.bf16.mxu0 0
        %1361 = vmatpush1.bf16.msra.mxu0 0
        %1362 = vmatprep.subr.bf16.mxu0 0
        %1363 = vmatpush1.bf16.msra.mxu0 0
        %1364 = vmatprep.subr.bf16.mxu0 0
        %1365 = vmatpush1.bf16.msra.mxu0 0
        %1366 = vmatprep.subr.bf16.mxu0 0
        %1367 = vmatpush1.bf16.msra.mxu0 0
        %1368 = vmatprep.subr.bf16.mxu0 0
        %1369 = vmatpush1.bf16.msra.mxu0 0
        %1370 = vmatprep.subr.bf16.mxu0 0
        %1371 = vmatpush1.bf16.msra.mxu0 0
        %1372 = vmatprep.subr.bf16.mxu0 0
        %1373 = vmatpush1.bf16.msra.mxu0 0
        %1374 = vmatprep.subr.bf16.mxu0 0
        %1375 = vmatpush1.bf16.msra.mxu0 0
        %1376 = vmatprep.subr.bf16.mxu0 0
        %1377 = vmatpush1.bf16.msra.mxu0 0
        %1378 = vmatprep.subr.bf16.mxu0 0
        %1379 = vmatpush1.bf16.msra.mxu0 0
        %1380 = vmatprep.subr.bf16.mxu0 0
        %1381 = vmatpush1.bf16.msra.mxu0 0
        %1382 = vmatprep.mubr.bf16.mxu0 0
        %1383 = vmatmul.mubr.bf16.gmra.mrb[0].mxu0 %v1348
        %v1384 = vpop.f32.mrb[0].mxu0
        %v1385 = vadd.f32 0.0, %v1384
        %v1386 = vpop.f32.mrb[0].mxu0
        %v1387 = vpop.f32.mrb[0].mxu0
        %v1388 = vpop.f32.mrb[0].mxu0
        %1389 = vdwg.mxu0
        %v1390 = vmul.f32 %v1385, %v1345
        %1392 = vrot.lane.b32.xlu0 %v1287, 120
        %v1393 = vpop.permute.xlu0 %1392
        %1395 = vrot.lane.b32.xlu0 %v1218, 120
        %v1396 = vpop.permute.xlu0 %1395
        %v1398 = vsel %vm1288, %v1393, 0
        %v1401 = vsel %vm1288, %v1396, 0
        %1403 = vmatprep.subr.bf16.mxu0 0
        %1404 = vmatpush1.bf16.xpose.msra.mxu0 %v1401
        %1405 = vmatprep.subr.bf16.mxu0 0
        %1406 = vmatpush1.bf16.xpose.msra.mxu0 0
        %1407 = vmatprep.subr.bf16.mxu0 0
        %1408 = vmatpush1.bf16.xpose.msra.mxu0 0
        %1409 = vmatprep.subr.bf16.mxu0 0
        %1410 = vmatpush1.bf16.xpose.msra.mxu0 0
        %1411 = vmatprep.subr.bf16.mxu0 0
        %1412 = vmatpush1.bf16.xpose.msra.mxu0 0
        %1413 = vmatprep.subr.bf16.mxu0 0
        %1414 = vmatpush1.bf16.xpose.msra.mxu0 0
        %1415 = vmatprep.subr.bf16.mxu0 0
        %1416 = vmatpush1.bf16.xpose.msra.mxu0 0
        %1417 = vmatprep.subr.bf16.mxu0 0
        %1418 = vmatpush1.bf16.xpose.msra.mxu0 0
        %1419 = vmatprep.subr.bf16.mxu0 0
        %1420 = vmatpush1.bf16.xpose.msra.mxu0 0
        %1421 = vmatprep.subr.bf16.mxu0 0
        %1422 = vmatpush1.bf16.xpose.msra.mxu0 0
        %1423 = vmatprep.subr.bf16.mxu0 0
        %1424 = vmatpush1.bf16.xpose.msra.mxu0 0
        %1425 = vmatprep.subr.bf16.mxu0 0
        %1426 = vmatpush1.bf16.xpose.msra.mxu0 0
        %1427 = vmatprep.subr.bf16.mxu0 0
        %1428 = vmatpush1.bf16.xpose.msra.mxu0 0
        %1429 = vmatprep.subr.bf16.mxu0 0
        %1430 = vmatpush1.bf16.xpose.msra.mxu0 0
        %1431 = vmatprep.subr.bf16.mxu0 0
        %1432 = vmatpush1.bf16.xpose.msra.mxu0 0
        %1433 = vmatprep.subr.bf16.mxu0 0
        %1434 = vmatpush1.bf16.xpose.msra.mxu0 0
        %1435 = vmatprep.mubr.bf16.mxu0 0
        %1436 = vmatmul.mubr.bf16.gmra.mrb[0].mxu0 %v1398
        %v1437 = vpop.f32.mrb[0].mxu0
        %v1438 = vadd.f32 0.0, %v1437
        %v1439 = vpop.f32.mrb[0].mxu0
        %v1440 = vpop.f32.mrb[0].mxu0
        %v1441 = vpop.f32.mrb[0].mxu0
        %1442 = vdwg.mxu0
        %v1443 = vsel %vm1335, %v1438, -inf
        %1444 = vmax.xlane.f32.xlu0 %v1443
        %v1445 = vpop.xlane.xlu0 %1444
        %v1446 = vsub.f32 %v1438, %v1445
        %v1447 = vmul.f32 %v1446, 1.442695
        %v1448 = vpow.pop %v1447
        %v1449 = vsel %vm1335, %v1448, 0.0
        %1450 = vadd.xlane.f32.xlu0 %v1449
        %v1451 = vpop.xlane.xlu0 %1450
        %v1452 = vrcp.pop %v1451
        %v1453 = vpack.c.bf16 %v1448, %v1448
        %1455 = vrot.lane.b32.xlu0 %v1219, 120
        %v1456 = vpop.permute.xlu0 %1455
        %v1459 = vsel %vm1335, %v1453, 0
        %1461 = vmatprep.subr.bf16.mxu0 0
        %1462 = vmatpush1.bf16.msra.mxu0 %v1456
        %1463 = vmatprep.subr.bf16.mxu0 0
        %1464 = vmatpush1.bf16.msra.mxu0 0
        %1465 = vmatprep.subr.bf16.mxu0 0
        %1466 = vmatpush1.bf16.msra.mxu0 0
        %1467 = vmatprep.subr.bf16.mxu0 0
        %1468 = vmatpush1.bf16.msra.mxu0 0
        %1469 = vmatprep.subr.bf16.mxu0 0
        %1470 = vmatpush1.bf16.msra.mxu0 0
        %1471 = vmatprep.subr.bf16.mxu0 0
        %1472 = vmatpush1.bf16.msra.mxu0 0
        %1473 = vmatprep.subr.bf16.mxu0 0
        %1474 = vmatpush1.bf16.msra.mxu0 0
        %1475 = vmatprep.subr.bf16.mxu0 0
        %1476 = vmatpush1.bf16.msra.mxu0 0
        %1477 = vmatprep.subr.bf16.mxu0 0
        %1478 = vmatpush1.bf16.msra.mxu0 0
        %1479 = vmatprep.subr.bf16.mxu0 0
        %1480 = vmatpush1.bf16.msra.mxu0 0
        %1481 = vmatprep.subr.bf16.mxu0 0
        %1482 = vmatpush1.bf16.msra.mxu0 0
        %1483 = vmatprep.subr.bf16.mxu0 0
        %1484 = vmatpush1.bf16.msra.mxu0 0
        %1485 = vmatprep.subr.bf16.mxu0 0
        %1486 = vmatpush1.bf16.msra.mxu0 0
        %1487 = vmatprep.subr.bf16.mxu0 0
        %1488 = vmatpush1.bf16.msra.mxu0 0
        %1489 = vmatprep.subr.bf16.mxu0 0
        %1490 = vmatpush1.bf16.msra.mxu0 0
        %1491 = vmatprep.subr.bf16.mxu0 0
        %1492 = vmatpush1.bf16.msra.mxu0 0
        %1493 = vmatprep.mubr.bf16.mxu0 0
        %1494 = vmatmul.mubr.bf16.gmra.mrb[0].mxu0 %v1459
        %v1495 = vpop.f32.mrb[0].mxu0
        %v1496 = vadd.f32 0.0, %v1495
        %v1497 = vpop.f32.mrb[0].mxu0
        %v1498 = vpop.f32.mrb[0].mxu0
        %v1499 = vpop.f32.mrb[0].mxu0
        %1500 = vdwg.mxu0
        %v1501 = vmul.f32 %v1496, %v1452
        %1503 = vrot.lane.b32.xlu0 %v1501, 8
        %v1504 = vpop.permute.xlu0 %1503
        %v1506 = vsel %vm1288, %v1390, %v1504
        %v1507 = vpack.c.bf16 %v1506, %v1506
        %v1508 = vld [vmem:[%s10] sm:$0xf]
        %v1509 = vld [vmem:[%s10 + $0x4] sm:$0xf]
        %v1510 = vld [vmem:[%s11] sm:$0x1]
        %v1512 = vlaneseq
        %v1513 = vshrl.u32 %v1512, 7
        %v1514 = vsub.s32 0, %v1513
        %v1515 = vrot.slane %v1510, %v1514
        %v1519 = vunpack.c.l.b16 %v1508
        %v1520 = vunpack.c.l.b16 %v1509
        %v1521 = vpack.c.b16 %v1520, %v1519
        %v1524 = vsel %vm1335, %v1507, 0
        %1526 = vmatprep.subr.bf16.mxu0 0
        %1527 = vmatpush1.bf16.msra.mxu0 %v1521
        %1528 = vmatprep.subr.bf16.mxu0 0
        %1529 = vmatpush1.bf16.msra.mxu0 0
        %1530 = vmatprep.subr.bf16.mxu0 0
        %1531 = vmatpush1.bf16.msra.mxu0 0
        %1532 = vmatprep.subr.bf16.mxu0 0
        %1533 = vmatpush1.bf16.msra.mxu0 0
        %1534 = vmatprep.subr.bf16.mxu0 0
        %1535 = vmatpush1.bf16.msra.mxu0 0
        %1536 = vmatprep.subr.bf16.mxu0 0
        %1537 = vmatpush1.bf16.msra.mxu0 0
        %1538 = vmatprep.subr.bf16.mxu0 0
        %1539 = vmatpush1.bf16.msra.mxu0 0
        %1540 = vmatprep.subr.bf16.mxu0 0
        %1541 = vmatpush1.bf16.msra.mxu0 0
        %1542 = vmatprep.subr.bf16.mxu0 0
        %1543 = vmatpush1.bf16.msra.mxu0 0
        %1544 = vmatprep.subr.bf16.mxu0 0
        %1545 = vmatpush1.bf16.msra.mxu0 0
        %1546 = vmatprep.subr.bf16.mxu0 0
        %1547 = vmatpush1.bf16.msra.mxu0 0
        %1548 = vmatprep.subr.bf16.mxu0 0
        %1549 = vmatpush1.bf16.msra.mxu0 0
        %1550 = vmatprep.subr.bf16.mxu0 0
        %1551 = vmatpush1.bf16.msra.mxu0 0
        %1552 = vmatprep.subr.bf16.mxu0 0
        %1553 = vmatpush1.bf16.msra.mxu0 0
        %1554 = vmatprep.subr.bf16.mxu0 0
        %1555 = vmatpush1.bf16.msra.mxu0 0
        %1556 = vmatprep.subr.bf16.mxu0 0
        %1557 = vmatpush1.bf16.msra.mxu0 0
        %1558 = vmatprep.mubr.bf16.mxu0 0
        %1559 = vmatmul.mubr.bf16.gmra.mrb[0].mxu0 %v1524
        %v1560 = vpop.f32.mrb[0].mxu0
        %v1561 = vadd.f32 %v1515, %v1560
        %v1562 = vpop.f32.mrb[0].mxu0
        %v1563 = vpop.f32.mrb[0].mxu0
        %v1564 = vpop.f32.mrb[0].mxu0
        %1565 = vdwg.mxu0
        %v1566 = vadd.f32 %v1186, %v1561
        %v1567 = vld [vmem:[%s12] sm:$0x1]
        %v1568 = vld [vmem:[%s13] sm:$0x1]
        %v1569 = vsel %vm1189, %v1566, 0.0
        %1570 = vadd.xlane.f32.xlu0 %v1569
        %v1571 = vpop.xlane.xlu0 %1570
        %v1572 = vmul.f32 %v1571, %v1193
        %v1573 = vsub.f32 %v1566, %v1572
        %v1574 = vmul.f32 %v1573, %v1573
        %v1575 = vsel %vm1189, %v1574, 0.0
        %1576 = vadd.xlane.f32.xlu0 %v1575
        %v1577 = vpop.xlane.xlu0 %1576
        %v1578 = vmul.f32 %v1577, %v1193
        %v1579 = vadd.f32 %v1578, 1e-05
        %v1580 = vrsqrt.pop %v1579
        %v1581 = vmul.f32 %v1573, %v1580
        %v1583 = vlaneseq
        %v1584 = vshrl.u32 %v1583, 7
        %v1585 = vsub.s32 0, %v1584
        %v1586 = vrot.slane %v1567, %v1585
        %v1588 = vmul.f32 %v1581, %v1586
        %v1590 = vlaneseq
        %v1591 = vshrl.u32 %v1590, 7
        %v1592 = vsub.s32 0, %v1591
        %v1593 = vrot.slane %v1568, %v1592
        %v1595 = vadd.f32 %v1588, %v1593
        %v1596 = vld [vmem:[#allocation4] sm:$0xf]
        %v1597 = vld [vmem:[#allocation5] sm:$0xf]
        %v1598 = vpack.c.bf16 %v1595, %v1595
        %v1599 = vld [vmem:[%s14] sm:$0xf]
        %v1600 = vld [vmem:[%s14 + $0x4] sm:$0xf]
        %v1601 = vld [vmem:[%s14 + $0x8] sm:$0xf]
        %v1602 = vld [vmem:[%s14 + $0xc] sm:$0xf]
        %v1603 = vld [vmem:[%s15] sm:$0x1]
        %v1605 = vlaneseq
        %v1606 = vshrl.u32 %v1605, 7
        %v1607 = vsub.s32 0, %v1606
        %v1608 = vrot.slane %v1603, %v1607
        %v1614 = vunpack.c.l.b16 %v1599
        %v1615 = vunpack.c.l.b16 %v1600
        %v1616 = vunpack.c.l.b16 %v1601
        %v1617 = vunpack.c.l.b16 %v1602
        %v1618 = vpack.c.b16 %v1615, %v1614
        %v1619 = vpack.c.b16 %v1617, %v1616
        %v1623 = vsel %vm1189, %v1598, 0
        %1625 = vmatprep.subr.bf16.mxu0 0
        %1626 = vmatpush1.bf16.msra.mxu0 %v1618
        %1627 = vmatprep.subr.bf16.mxu0 0
        %1628 = vmatpush1.bf16.msra.mxu0 %v1619
        %1629 = vmatprep.subr.bf16.mxu0 0
        %1630 = vmatpush1.bf16.msra.mxu0 0
        %1631 = vmatprep.subr.bf16.mxu0 0
        %1632 = vmatpush1.bf16.msra.mxu0 0
        %1633 = vmatprep.subr.bf16.mxu0 0
        %1634 = vmatpush1.bf16.msra.mxu0 0
        %1635 = vmatprep.subr.bf16.mxu0 0
        %1636 = vmatpush1.bf16.msra.mxu0 0
        %1637 = vmatprep.subr.bf16.mxu0 0
        %1638 = vmatpush1.bf16.msra.mxu0 0
        %1639 = vmatprep.subr.bf16.mxu0 0
        %1640 = vmatpush1.bf16.msra.mxu0 0
        %1641 = vmatprep.subr.bf16.mxu0 0
        %1642 = vmatpush1.bf16.msra.mxu0 0
        %1643 = vmatprep.subr.bf16.mxu0 0
        %1644 = vmatpush1.bf16.msra.mxu0 0
        %1645 = vmatprep.subr.bf16.mxu0 0
        %1646 = vmatpush1.bf16.msra.mxu0 0
        %1647 = vmatprep.subr.bf16.mxu0 0
        %1648 = vmatpush1.bf16.msra.mxu0 0
        %1649 = vmatprep.subr.bf16.mxu0 0
        %1650 = vmatpush1.bf16.msra.mxu0 0
        %1651 = vmatprep.subr.bf16.mxu0 0
        %1652 = vmatpush1.bf16.msra.mxu0 0
        %1653 = vmatprep.subr.bf16.mxu0 0
        %1654 = vmatpush1.bf16.msra.mxu0 0
        %1655 = vmatprep.subr.bf16.mxu0 0
        %1656 = vmatpush1.bf16.msra.mxu0 0
        %1657 = vmatprep.mubr.bf16.mxu0 0
        %1658 = vmatmul.mubr.bf16.gmra.mrb[0].mxu0 %v1623
        %v1659 = vpop.f32.mrb[0].mxu0
        %v1660 = vadd.f32 %v1608, %v1659
        %v1661 = vpop.f32.mrb[0].mxu0
        %v1662 = vpop.f32.mrb[0].mxu0
        %v1663 = vpop.f32.mrb[0].mxu0
        %1664 = vdwg.mxu0
        %v1665 = vpack.c.bf16 %v1660, %v1660
        %v1667 = vsel %vm1288, %v1665, 0
        %v1670 = vsel %vm1288, %v1596, 0
        %1672 = vmatprep.subr.bf16.mxu0 0
        %1673 = vmatpush1.bf16.xpose.msra.mxu0 %v1670
        %1674 = vmatprep.subr.bf16.mxu0 0
        %1675 = vmatpush1.bf16.xpose.msra.mxu0 0
        %1676 = vmatprep.subr.bf16.mxu0 0
        %1677 = vmatpush1.bf16.xpose.msra.mxu0 0
        %1678 = vmatprep.subr.bf16.mxu0 0
        %1679 = vmatpush1.bf16.xpose.msra.mxu0 0
        %1680 = vmatprep.subr.bf16.mxu0 0
        %1681 = vmatpush1.bf16.xpose.msra.mxu0 0
        %1682 = vmatprep.subr.bf16.mxu0 0
        %1683 = vmatpush1.bf16.xpose.msra.mxu0 0
        %1684 = vmatprep.subr.bf16.mxu0 0
        %1685 = vmatpush1.bf16.xpose.msra.mxu0 0
        %1686 = vmatprep.subr.bf16.mxu0 0
        %1687 = vmatpush1.bf16.xpose.msra.mxu0 0
        %1688 = vmatprep.subr.bf16.mxu0 0
        %1689 = vmatpush1.bf16.xpose.msra.mxu0 0
        %1690 = vmatprep.subr.bf16.mxu0 0
        %1691 = vmatpush1.bf16.xpose.msra.mxu0 0
        %1692 = vmatprep.subr.bf16.mxu0 0
        %1693 = vmatpush1.bf16.xpose.msra.mxu0 0
        %1694 = vmatprep.subr.bf16.mxu0 0
        %1695 = vmatpush1.bf16.xpose.msra.mxu0 0
        %1696 = vmatprep.subr.bf16.mxu0 0
        %1697 = vmatpush1.bf16.xpose.msra.mxu0 0
        %1698 = vmatprep.subr.bf16.mxu0 0
        %1699 = vmatpush1.bf16.xpose.msra.mxu0 0
        %1700 = vmatprep.subr.bf16.mxu0 0
        %1701 = vmatpush1.bf16.xpose.msra.mxu0 0
        %1702 = vmatprep.subr.bf16.mxu0 0
        %1703 = vmatpush1.bf16.xpose.msra.mxu0 0
        %1704 = vmatprep.mubr.bf16.mxu0 0
        %1705 = vmatmul.mubr.bf16.gmra.mrb[0].mxu0 %v1667
        %v1706 = vpop.f32.mrb[0].mxu0
        %v1707 = vadd.f32 0.0, %v1706
        %v1708 = vpop.f32.mrb[0].mxu0
        %v1709 = vpop.f32.mrb[0].mxu0
        %v1710 = vpop.f32.mrb[0].mxu0
        %1711 = vdwg.mxu0
        %v1712 = vsel %vm1288, %v1707, -inf
        %1713 = vmax.xlane.f32.xlu0 %v1712
        %v1714 = vpop.xlane.xlu0 %1713
        %v1715 = vsub.f32 %v1707, %v1714
        %v1716 = vmul.f32 %v1715, 1.442695
        %v1717 = vpow.pop %v1716
        %v1718 = vsel %vm1288, %v1717, 0.0
        %1719 = vadd.xlane.f32.xlu0 %v1718
        %v1720 = vpop.xlane.xlu0 %1719
        %v1721 = vrcp.pop %v1720
        %v1722 = vpack.c.bf16 %v1717, %v1717
        %v1724 = vsel %vm1288, %v1722, 0
        %vm1726 = vcmask 1043456
        %v1728 = vsel %vm1726, %v1597, 0
        %1730 = vmatprep.subr.bf16.mxu0 0
        %1731 = vmatpush1.bf16.msra.mxu0 %v1728
        %1732 = vmatprep.subr.bf16.mxu0 0
        %1733 = vmatpush1.bf16.msra.mxu0 0
        %1734 = vmatprep.subr.bf16.mxu0 0
        %1735 = vmatpush1.bf16.msra.mxu0 0
        %1736 = vmatprep.subr.bf16.mxu0 0
        %1737 = vmatpush1.bf16.msra.mxu0 0
        %1738 = vmatprep.subr.bf16.mxu0 0
        %1739 = vmatpush1.bf16.msra.mxu0 0
        %1740 = vmatprep.subr.bf16.mxu0 0
        %1741 = vmatpush1.bf16.msra.mxu0 0
        %1742 = vmatprep.subr.bf16.mxu0 0
        %1743 = vmatpush1.bf16.msra.mxu0 0
        %1744 = vmatprep.subr.bf16.mxu0 0
        %1745 = vmatpush1.bf16.msra.mxu0 0
        %1746 = vmatprep.subr.bf16.mxu0 0
        %1747 = vmatpush1.bf16.msra.mxu0 0
        %1748 = vmatprep.subr.bf16.mxu0 0
        %1749 = vmatpush1.bf16.msra.mxu0 0
        %1750 = vmatprep.subr.bf16.mxu0 0
        %1751 = vmatpush1.bf16.msra.mxu0 0
        %1752 = vmatprep.subr.bf16.mxu0 0
        %1753 = vmatpush1.bf16.msra.mxu0 0
        %1754 = vmatprep.subr.bf16.mxu0 0
        %1755 = vmatpush1.bf16.msra.mxu0 0
        %1756 = vmatprep.subr.bf16.mxu0 0
        %1757 = vmatpush1.bf16.msra.mxu0 0
        %1758 = vmatprep.subr.bf16.mxu0 0
        %1759 = vmatpush1.bf16.msra.mxu0 0
        %1760 = vmatprep.subr.bf16.mxu0 0
        %1761 = vmatpush1.bf16.msra.mxu0 0
        %1762 = vmatprep.mubr.bf16.mxu0 0
        %1763 = vmatmul.mubr.bf16.gmra.mrb[0].mxu0 %v1724
        %v1764 = vpop.f32.mrb[0].mxu0
        %v1765 = vadd.f32 0.0, %v1764
        %v1766 = vpop.f32.mrb[0].mxu0
        %v1767 = vpop.f32.mrb[0].mxu0
        %v1768 = vpop.f32.mrb[0].mxu0
        %1769 = vdwg.mxu0
        %v1770 = vmul.f32 %v1765, %v1721
        %1772 = vrot.lane.b32.xlu0 %v1665, 120
        %v1773 = vpop.permute.xlu0 %1772
        %v1775 = vunpack.c.l.b16 %v1596
        %v1776 = vpack.c.b16 %v1775, %v1775
        %1777 = vrot.lane.b32.xlu0 %v1776, 120
        %v1778 = vpop.permute.xlu0 %1777
        %v1780 = vsel %vm1288, %v1773, 0
        %v1783 = vsel %vm1288, %v1778, 0
        %1785 = vmatprep.subr.bf16.mxu0 0
        %1786 = vmatpush1.bf16.xpose.msra.mxu0 %v1783
        %1787 = vmatprep.subr.bf16.mxu0 0
        %1788 = vmatpush1.bf16.xpose.msra.mxu0 0
        %1789 = vmatprep.subr.bf16.mxu0 0
        %1790 = vmatpush1.bf16.xpose.msra.mxu0 0
        %1791 = vmatprep.subr.bf16.mxu0 0
        %1792 = vmatpush1.bf16.xpose.msra.mxu0 0
        %1793 = vmatprep.subr.bf16.mxu0 0
        %1794 = vmatpush1.bf16.xpose.msra.mxu0 0
        %1795 = vmatprep.subr.bf16.mxu0 0
        %1796 = vmatpush1.bf16.xpose.msra.mxu0 0
        %1797 = vmatprep.subr.bf16.mxu0 0
        %1798 = vmatpush1.bf16.xpose.msra.mxu0 0
        %1799 = vmatprep.subr.bf16.mxu0 0
        %1800 = vmatpush1.bf16.xpose.msra.mxu0 0
        %1801 = vmatprep.subr.bf16.mxu0 0
        %1802 = vmatpush1.bf16.xpose.msra.mxu0 0
        %1803 = vmatprep.subr.bf16.mxu0 0
        %1804 = vmatpush1.bf16.xpose.msra.mxu0 0
        %1805 = vmatprep.subr.bf16.mxu0 0
        %1806 = vmatpush1.bf16.xpose.msra.mxu0 0
        %1807 = vmatprep.subr.bf16.mxu0 0
        %1808 = vmatpush1.bf16.xpose.msra.mxu0 0
        %1809 = vmatprep.subr.bf16.mxu0 0
        %1810 = vmatpush1.bf16.xpose.msra.mxu0 0
        %1811 = vmatprep.subr.bf16.mxu0 0
        %1812 = vmatpush1.bf16.xpose.msra.mxu0 0
        %1813 = vmatprep.subr.bf16.mxu0 0
        %1814 = vmatpush1.bf16.xpose.msra.mxu0 0
        %1815 = vmatprep.subr.bf16.mxu0 0
        %1816 = vmatpush1.bf16.xpose.msra.mxu0 0
        %1817 = vmatprep.mubr.bf16.mxu0 0
        %1818 = vmatmul.mubr.bf16.gmra.mrb[0].mxu0 %v1780
        %v1819 = vpop.f32.mrb[0].mxu0
        %v1820 = vadd.f32 0.0, %v1819
        %v1821 = vpop.f32.mrb[0].mxu0
        %v1822 = vpop.f32.mrb[0].mxu0
        %v1823 = vpop.f32.mrb[0].mxu0
        %1824 = vdwg.mxu0
        %v1825 = vsel %vm1288, %v1820, -inf
        %1826 = vmax.xlane.f32.xlu0 %v1825
        %v1827 = vpop.xlane.xlu0 %1826
        %v1828 = vsub.f32 %v1820, %v1827
        %v1829 = vmul.f32 %v1828, 1.442695
        %v1830 = vpow.pop %v1829
        %v1831 = vsel %vm1288, %v1830, 0.0
        %1832 = vadd.xlane.f32.xlu0 %v1831
        %v1833 = vpop.xlane.xlu0 %1832
        %v1834 = vrcp.pop %v1833
        %v1835 = vpack.c.bf16 %v1830, %v1830
        %v1837 = vunpack.c.l.b16 %v1597
        %v1838 = vpack.c.b16 %v1837, %v1837
        %1839 = vrot.lane.b32.xlu0 %v1838, 120
        %v1840 = vpop.permute.xlu0 %1839
        %v1842 = vsel %vm1288, %v1835, 0
        %v1845 = vsel %vm1726, %v1840, 0
        %1847 = vmatprep.subr.bf16.mxu0 0
        %1848 = vmatpush1.bf16.msra.mxu0 %v1845
        %1849 = vmatprep.subr.bf16.mxu0 0
        %1850 = vmatpush1.bf16.msra.mxu0 0
        %1851 = vmatprep.subr.bf16.mxu0 0
        %1852 = vmatpush1.bf16.msra.mxu0 0
        %1853 = vmatprep.subr.bf16.mxu0 0
        %1854 = vmatpush1.bf16.msra.mxu0 0
        %1855 = vmatprep.subr.bf16.mxu0 0
        %1856 = vmatpush1.bf16.msra.mxu0 0
        %1857 = vmatprep.subr.bf16.mxu0 0
        %1858 = vmatpush1.bf16.msra.mxu0 0
        %1859 = vmatprep.subr.bf16.mxu0 0
        %1860 = vmatpush1.bf16.msra.mxu0 0
        %1861 = vmatprep.subr.bf16.mxu0 0
        %1862 = vmatpush1.bf16.msra.mxu0 0
        %1863 = vmatprep.subr.bf16.mxu0 0
        %1864 = vmatpush1.bf16.msra.mxu0 0
        %1865 = vmatprep.subr.bf16.mxu0 0
        %1866 = vmatpush1.bf16.msra.mxu0 0
        %1867 = vmatprep.subr.bf16.mxu0 0
        %1868 = vmatpush1.bf16.msra.mxu0 0
        %1869 = vmatprep.subr.bf16.mxu0 0
        %1870 = vmatpush1.bf16.msra.mxu0 0
        %1871 = vmatprep.subr.bf16.mxu0 0
        %1872 = vmatpush1.bf16.msra.mxu0 0
        %1873 = vmatprep.subr.bf16.mxu0 0
        %1874 = vmatpush1.bf16.msra.mxu0 0
        %1875 = vmatprep.subr.bf16.mxu0 0
        %1876 = vmatpush1.bf16.msra.mxu0 0
        %1877 = vmatprep.subr.bf16.mxu0 0
        %1878 = vmatpush1.bf16.msra.mxu0 0
        %1879 = vmatprep.mubr.bf16.mxu0 0
        %1880 = vmatmul.mubr.bf16.gmra.mrb[0].mxu0 %v1842
        %v1881 = vpop.f32.mrb[0].mxu0
        %v1882 = vadd.f32 0.0, %v1881
        %v1883 = vpop.f32.mrb[0].mxu0
        %v1884 = vpop.f32.mrb[0].mxu0
        %v1885 = vpop.f32.mrb[0].mxu0
        %1886 = vdwg.mxu0
        %v1887 = vmul.f32 %v1882, %v1834
        %1889 = vrot.lane.b32.xlu0 %v1887, 8
        %v1890 = vpop.permute.xlu0 %1889
        %v1892 = vsel %vm1288, %v1770, %v1890
        %v1893 = vpack.c.bf16 %v1892, %v1892
        %v1894 = vld [vmem:[%s20] sm:$0xf]
        %v1895 = vld [vmem:[%s20 + $0x4] sm:$0xf]
        %v1896 = vld [vmem:[%s21] sm:$0x1]
        %v1898 = vlaneseq
        %v1899 = vshrl.u32 %v1898, 7
        %v1900 = vsub.s32 0, %v1899
        %v1901 = vrot.slane %v1896, %v1900
        %v1905 = vunpack.c.l.b16 %v1894
        %v1906 = vunpack.c.l.b16 %v1895
        %v1907 = vpack.c.b16 %v1906, %v1905
        %v1910 = vsel %vm1335, %v1893, 0
        %1912 = vmatprep.subr.bf16.mxu0 0
        %1913 = vmatpush1.bf16.msra.mxu0 %v1907
        %1914 = vmatprep.subr.bf16.mxu0 0
        %1915 = vmatpush1.bf16.msra.mxu0 0
        %1916 = vmatprep.subr.bf16.mxu0 0
        %1917 = vmatpush1.bf16.msra.mxu0 0
        %1918 = vmatprep.subr.bf16.mxu0 0
        %1919 = vmatpush1.bf16.msra.mxu0 0
        %1920 = vmatprep.subr.bf16.mxu0 0
        %1921 = vmatpush1.bf16.msra.mxu0 0
        %1922 = vmatprep.subr.bf16.mxu0 0
        %1923 = vmatpush1.bf16.msra.mxu0 0
        %1924 = vmatprep.subr.bf16.mxu0 0
        %1925 = vmatpush1.bf16.msra.mxu0 0
        %1926 = vmatprep.subr.bf16.mxu0 0
        %1927 = vmatpush1.bf16.msra.mxu0 0
        %1928 = vmatprep.subr.bf16.mxu0 0
        %1929 = vmatpush1.bf16.msra.mxu0 0
        %1930 = vmatprep.subr.bf16.mxu0 0
        %1931 = vmatpush1.bf16.msra.mxu0 0
        %1932 = vmatprep.subr.bf16.mxu0 0
        %1933 = vmatpush1.bf16.msra.mxu0 0
        %1934 = vmatprep.subr.bf16.mxu0 0
        %1935 = vmatpush1.bf16.msra.mxu0 0
        %1936 = vmatprep.subr.bf16.mxu0 0
        %1937 = vmatpush1.bf16.msra.mxu0 0
        %1938 = vmatprep.subr.bf16.mxu0 0
        %1939 = vmatpush1.bf16.msra.mxu0 0
        %1940 = vmatprep.subr.bf16.mxu0 0
        %1941 = vmatpush1.bf16.msra.mxu0 0
        %1942 = vmatprep.subr.bf16.mxu0 0
        %1943 = vmatpush1.bf16.msra.mxu0 0
        %1944 = vmatprep.mubr.bf16.mxu0 0
        %1945 = vmatmul.mubr.bf16.gmra.mrb[0].mxu0 %v1910
        %v1946 = vpop.f32.mrb[0].mxu0
        %v1947 = vadd.f32 %v1901, %v1946
        %v1948 = vpop.f32.mrb[0].mxu0
        %v1949 = vpop.f32.mrb[0].mxu0
        %v1950 = vpop.f32.mrb[0].mxu0
        %1951 = vdwg.mxu0
        %v1952 = vadd.f32 %v1566, %v1947
        %v1953 = vld [vmem:[%s22] sm:$0x1]
        %v1954 = vld [vmem:[%s23] sm:$0x1]
        %v1955 = vsel %vm1189, %v1952, 0.0
        %1956 = vadd.xlane.f32.xlu0 %v1955
        %v1957 = vpop.xlane.xlu0 %1956
        %v1958 = vmul.f32 %v1957, %v1193
        %v1959 = vsub.f32 %v1952, %v1958
        %v1960 = vmul.f32 %v1959, %v1959
        %v1961 = vsel %vm1189, %v1960, 0.0
        %1962 = vadd.xlane.f32.xlu0 %v1961
        %v1963 = vpop.xlane.xlu0 %1962
        %v1964 = vmul.f32 %v1963, %v1193
        %v1965 = vadd.f32 %v1964, 1e-05
        %v1966 = vrsqrt.pop %v1965
        %v1967 = vmul.f32 %v1959, %v1966
        %v1969 = vlaneseq
        %v1970 = vshrl.u32 %v1969, 7
        %v1971 = vsub.s32 0, %v1970
        %v1972 = vrot.slane %v1953, %v1971
        %v1974 = vmul.f32 %v1967, %v1972
        %v1976 = vlaneseq
        %v1977 = vshrl.u32 %v1976, 7
        %v1978 = vsub.s32 0, %v1977
        %v1979 = vrot.slane %v1954, %v1978
        %v1981 = vadd.f32 %v1974, %v1979
        %v1982 = vpack.c.bf16 %v1981, %v1981
        %v1983 = vld [vmem:[%s24] sm:$0xf]
        %v1984 = vld [vmem:[%s24 + $0x4] sm:$0xf]
        %v1985 = vld [vmem:[%s24 + $0x8] sm:$0xf]
        %v1986 = vld [vmem:[%s24 + $0xc] sm:$0xf]
        %v1987 = vld [vmem:[%s25] sm:$0x1]
        %v1989 = vlaneseq
        %v1990 = vshrl.u32 %v1989, 7
        %v1991 = vsub.s32 0, %v1990
        %v1992 = vrot.slane %v1987, %v1991
        %v1998 = vunpack.c.l.b16 %v1983
        %v1999 = vunpack.c.l.b16 %v1984
        %v2000 = vunpack.c.l.b16 %v1985
        %v2001 = vunpack.c.l.b16 %v1986
        %v2002 = vpack.c.b16 %v1999, %v1998
        %v2003 = vpack.c.b16 %v2001, %v2000
        %v2007 = vsel %vm1189, %v1982, 0
        %2009 = vmatprep.subr.bf16.mxu0 0
        %2010 = vmatpush1.bf16.msra.mxu0 %v2002
        %2011 = vmatprep.subr.bf16.mxu0 0
        %2012 = vmatpush1.bf16.msra.mxu0 %v2003
        %2013 = vmatprep.subr.bf16.mxu0 0
        %2014 = vmatpush1.bf16.msra.mxu0 0
        %2015 = vmatprep.subr.bf16.mxu0 0
        %2016 = vmatpush1.bf16.msra.mxu0 0
        %2017 = vmatprep.subr.bf16.mxu0 0
        %2018 = vmatpush1.bf16.msra.mxu0 0
        %2019 = vmatprep.subr.bf16.mxu0 0
        %2020 = vmatpush1.bf16.msra.mxu0 0
        %2021 = vmatprep.subr.bf16.mxu0 0
        %2022 = vmatpush1.bf16.msra.mxu0 0
        %2023 = vmatprep.subr.bf16.mxu0 0
        %2024 = vmatpush1.bf16.msra.mxu0 0
        %2025 = vmatprep.subr.bf16.mxu0 0
        %2026 = vmatpush1.bf16.msra.mxu0 0
        %2027 = vmatprep.subr.bf16.mxu0 0
        %2028 = vmatpush1.bf16.msra.mxu0 0
        %2029 = vmatprep.subr.bf16.mxu0 0
        %2030 = vmatpush1.bf16.msra.mxu0 0
        %2031 = vmatprep.subr.bf16.mxu0 0
        %2032 = vmatpush1.bf16.msra.mxu0 0
        %2033 = vmatprep.subr.bf16.mxu0 0
        %2034 = vmatpush1.bf16.msra.mxu0 0
        %2035 = vmatprep.subr.bf16.mxu0 0
        %2036 = vmatpush1.bf16.msra.mxu0 0
        %2037 = vmatprep.subr.bf16.mxu0 0
        %2038 = vmatpush1.bf16.msra.mxu0 0
        %2039 = vmatprep.subr.bf16.mxu0 0
        %2040 = vmatpush1.bf16.msra.mxu0 0
        %2041 = vmatprep.mubr.bf16.mxu0 0
        %2042 = vmatmul.mubr.bf16.gmra.mrb[0].mxu0 %v2007
        %v2043 = vpop.f32.mrb[0].mxu0
        %v2044 = vadd.f32 %v1992, %v2043
        %v2045 = vpop.f32.mrb[0].mxu0
        %v2046 = vpop.f32.mrb[0].mxu0
        %v2047 = vpop.f32.mrb[0].mxu0
        %2048 = vdwg.mxu0
        %v2049 = vmax.f32 %v2044, 0.0
        %v2050 = vpack.c.bf16 %v2049, %v2049
        %v2051 = vld [vmem:[%s26] sm:$0xf]
        %v2052 = vld [vmem:[%s26 + $0x4] sm:$0xf]
        %v2053 = vld [vmem:[%s26 + $0x8] sm:$0xf]
        %v2054 = vld [vmem:[%s26 + $0xc] sm:$0xf]
        %v2055 = vld [vmem:[%s26 + $0x10] sm:$0xf]
        %v2056 = vld [vmem:[%s26 + $0x14] sm:$0xf]
        %v2057 = vld [vmem:[%s26 + $0x18] sm:$0xf]
        %v2058 = vld [vmem:[%s26 + $0x1c] sm:$0xf]
        %v2059 = vld [vmem:[%s26 + $0x20] sm:$0xf]
        %v2060 = vld [vmem:[%s26 + $0x24] sm:$0xf]
        %v2061 = vld [vmem:[%s26 + $0x28] sm:$0xf]
        %v2062 = vld [vmem:[%s26 + $0x2c] sm:$0xf]
        %v2063 = vld [vmem:[%s26 + $0x30] sm:$0xf]
        %v2064 = vld [vmem:[%s26 + $0x34] sm:$0xf]
        %v2065 = vld [vmem:[%s26 + $0x38] sm:$0xf]
        %v2066 = vld [vmem:[%s26 + $0x3c] sm:$0xf]
        %v2083 = vunpack.c.l.b16 %v2051
        %v2084 = vunpack.c.l.b16 %v2052
        %v2085 = vunpack.c.l.b16 %v2053
        %v2086 = vunpack.c.l.b16 %v2054
        %v2087 = vunpack.c.l.b16 %v2055
        %v2088 = vunpack.c.l.b16 %v2056
        %v2089 = vunpack.c.l.b16 %v2057
        %v2090 = vunpack.c.l.b16 %v2058
        %v2091 = vunpack.c.l.b16 %v2059
        %v2092 = vunpack.c.l.b16 %v2060
        %v2093 = vunpack.c.l.b16 %v2061
        %v2094 = vunpack.c.l.b16 %v2062
        %v2095 = vunpack.c.l.b16 %v2063
        %v2096 = vunpack.c.l.b16 %v2064
        %v2097 = vunpack.c.l.b16 %v2065
        %v2098 = vunpack.c.l.b16 %v2066
        %v2099 = vpack.c.b16 %v2084, %v2083
        %v2100 = vpack.c.b16 %v2086, %v2085
        %v2101 = vpack.c.b16 %v2088, %v2087
        %v2102 = vpack.c.b16 %v2090, %v2089
        %v2103 = vpack.c.b16 %v2092, %v2091
        %v2104 = vpack.c.b16 %v2094, %v2093
        %v2105 = vpack.c.b16 %v2096, %v2095
        %v2106 = vpack.c.b16 %v2098, %v2097
        %2115 = vmatprep.subr.bf16.mxu0 0
        %2116 = vmatpush1.bf16.msra.mxu0 %v2099
        %2117 = vmatprep.subr.bf16.mxu0 0
        %2118 = vmatpush1.bf16.msra.mxu0 %v2100
        %2119 = vmatprep.subr.bf16.mxu0 0
        %2120 = vmatpush1.bf16.msra.mxu0 %v2101
        %2121 = vmatprep.subr.bf16.mxu0 0
        %2122 = vmatpush1.bf16.msra.mxu0 %v2102
        %2123 = vmatprep.subr.bf16.mxu0 0
        %2124 = vmatpush1.bf16.msra.mxu0 %v2103
        %2125 = vmatprep.subr.bf16.mxu0 0
        %2126 = vmatpush1.bf16.msra.mxu0 %v2104
        %2127 = vmatprep.subr.bf16.mxu0 0
        %2128 = vmatpush1.bf16.msra.mxu0 %v2105
        %2129 = vmatprep.subr.bf16.mxu0 0
        %2130 = vmatpush1.bf16.msra.mxu0 %v2106
        %2131 = vmatprep.subr.bf16.mxu0 0
        %2132 = vmatpush1.bf16.msra.mxu0 0
        %2133 = vmatprep.subr.bf16.mxu0 0
        %2134 = vmatpush1.bf16.msra.mxu0 0
        %2135 = vmatprep.subr.bf16.mxu0 0
        %2136 = vmatpush1.bf16.msra.mxu0 0
        %2137 = vmatprep.subr.bf16.mxu0 0
        %2138 = vmatpush1.bf16.msra.mxu0 0
        %2139 = vmatprep.subr.bf16.mxu0 0
        %2140 = vmatpush1.bf16.msra.mxu0 0
        %2141 = vmatprep.subr.bf16.mxu0 0
        %2142 = vmatpush1.bf16.msra.mxu0 0
        %2143 = vmatprep.subr.bf16.mxu0 0
        %2144 = vmatpush1.bf16.msra.mxu0 0
        %2145 = vmatprep.subr.bf16.mxu0 0
        %2146 = vmatpush1.bf16.msra.mxu0 0
        %2147 = vmatprep.mubr.bf16.mxu0 0
        %2148 = vmatmul.mubr.bf16.gmra.mrb[0].mxu0 %v2050
        %v2149 = vpop.f32.mrb[0].mxu0
        %v2150 = vadd.f32 0.0, %v2149
        %v2151 = vpop.f32.mrb[0].mxu0
        %v2152 = vpop.f32.mrb[0].mxu0
        %v2153 = vpop.f32.mrb[0].mxu0
        %2154 = vdwg.mxu0
        %v2155 = vadd.f32 %v1952, %v2150
        %v2156 = vld [vmem:[%s27] sm:$0x1]
        %v2158 = vlaneseq
        %v2159 = vshrl.u32 %v2158, 7
        %v2160 = vsub.s32 0, %v2159
        %v2161 = vrot.slane %v2156, %v2160
        %v2163 = vadd.f32 %v2155, %v2161
        %2164 = vst.msk [vmem:[%s865] sm:$0xff] %vm1189, %v2163
        %s2165 = sand.u32 %s662, 1
        %s2166 = scalar_lea.sflag [#allocation7], %s2165
        %s2167 = sand.u32 %s662, 1
        %s2168 = smul.addr %s2167, 8
        %s2169 = scalar_lea.vmem [#allocation6], %s2168
        // Predicated region
        $region137: #{tpu_custom_call.1} parent=131 // pred_check
          %p2170 = pneg %p672
        $region138: #{tpu_custom_call.1} parent=131 // pred_check_branch
          %2172 = sbr.rel (%p2170) target = $region140
        $region139: #{tpu_custom_call.1} parent=131 // pred_region
          %s2174 = ssub.s32 128, 128
          %2175 = vsyncadd %s2166, %s2174
          %s2176 = smul.addr %s46, 2
          %s2177 = sadd.s32 %s47, %s2176
          %s2178 = smul.addr %s2177, 128
          %s2179 = scalar_lea.hbm %s28, %s2178
          %s2181 = sshll.u32 %s2169, 4
          %s2182 = int_to_ptr.vmem [resolvable:$true] %s2181
          %2184 = dma.vmem_to_hbm [thread:$0]  %s2182, 128, %s2179, %s2166
        $region140: #{tpu_custom_call.1} parent=131 // pred_fallthru
          _
      $region132: #{tpu_custom_call.1} parent=5 // pred_fallthru
        _
      %p2185 = scmp.le.s32.totalorder 2, %s37
      // Predicated region
      $region141: #{tpu_custom_call.1} parent=5 // pred_check
        %p2186 = pneg %p2185
      $region142: #{tpu_custom_call.1} parent=5 // pred_check_branch
        %2188 = sbr.rel (%p2186) target = $region144
      $region143: #{tpu_custom_call.1} parent=5 // pred_region
        %s2189 = ssub.s32 %s37, 2
        // Predicated region
        $region145: #{tpu_custom_call.1} parent=143 // pred_check
          %p2190 = pneg %p678
        $region146: #{tpu_custom_call.1} parent=143 // pred_check_branch
          %2192 = sbr.rel (%p2190) target = $region148
        $region147: #{tpu_custom_call.1} parent=143 // pred_region
          %s2193 = sand.u32 %s663, 1
          %s2194 = scalar_lea.sflag [#allocation7], %s2193
          %s2195 = sand.u32 %s663, 1
          %s2196 = smul.addr %s2195, 8
          %s2197 = scalar_lea.vmem [#allocation6], %s2196
          %2198 = dma.done %s2194, 128
        $region148: #{tpu_custom_call.1} parent=143 // pred_fallthru
          _
      $region144: #{tpu_custom_call.1} parent=5 // pred_fallthru
        _
    $region6: #{tpu_custom_call.1} parent=1 // loop_footer
      %s41 = sadd.s32 1, %s37
    $region7: #{tpu_custom_call.1} parent=1 // loop_footer_branch
      %36 = sbr.rel target = $region3
    $region8: #{tpu_custom_call.1} parent=1 // loop_exit
      _
    %2199 = vsyncpa [#allocation7], 1
    %s2200 = scalar_lea.sflag [#allocation7], 1
    %2201 = vsyncpa %s2200, 1

// kernel: tpu_custom_call.1
$region0: #{tpu_custom_call.1}
  #allocation0 [shape = 'u32[]', space=smem, size = 0x4, offset = 0x4, fixed_abs, tag = 'smem constant byte address 0x4 - core index']
  #allocation1 [shape = 'u32[144,128]{1,0:T(1,128)}', space=vmem, size = 0x12000, scoped, tag = 'internal scratch']
  #allocation2 [shape = 'bf16[16,16]{1,0:T(16,128)(2,1)}', space=vmem, size = 0x1000, scoped, tag = 'scratch operand']
  #allocation3 [shape = 'bf16[16,16]{1,0:T(16,128)(2,1)}', space=vmem, size = 0x1000, scoped, tag = 'scratch operand']
  #allocation4 [shape = 'bf16[8,16]{1,0:T(8,128)(2,1)}', space=vmem, size = 0x800, scoped, tag = 'scratch operand']
  #allocation5 [shape = 'bf16[8,16]{1,0:T(8,128)(2,1)}', space=vmem, size = 0x800, scoped, tag = 'scratch operand']
  %s0 = inlined_call_operand.vmem [shape: f32[2,16,32], index: 0, kind: input, shape index: {}]
  %s1 = inlined_call_operand.vmem [shape: bf16[2,8,16], index: 1, kind: input, shape index: {}]
  %s2 = inlined_call_operand.vmem [shape: f32[1,32], index: 2, kind: input, shape index: {}]
  %s3 = inlined_call_operand.vmem [shape: f32[1,32], index: 3, kind: input, shape index: {}]
  %s4 = inlined_call_operand.vmem [shape: bf16[32,16], index: 4, kind: input, shape index: {}]
  %s5 = inlined_call_operand.vmem [shape: f32[1,16], index: 5, kind: input, shape index: {}]
  %s6 = inlined_call_operand.vmem [shape: bf16[32,16], index: 6, kind: input, shape index: {}]
  %s7 = inlined_call_operand.vmem [shape: f32[1,16], index: 7, kind: input, shape index: {}]
  %s8 = inlined_call_operand.vmem [shape: bf16[32,16], index: 8, kind: input, shape index: {}]
  %s9 = inlined_call_operand.vmem [shape: f32[1,16], index: 9, kind: input, shape index: {}]
  %s10 = inlined_call_operand.vmem [shape: bf16[16,32], index: 10, kind: input, shape index: {}]
  %s11 = inlined_call_operand.vmem [shape: f32[1,32], index: 11, kind: input, shape index: {}]
  %s12 = inlined_call_operand.vmem [shape: f32[1,32], index: 12, kind: input, shape index: {}]
  %s13 = inlined_call_operand.vmem [shape: f32[1,32], index: 13, kind: input, shape index: {}]
  %s14 = inlined_call_operand.vmem [shape: bf16[32,16], index: 14, kind: input, shape index: {}]
  %s15 = inlined_call_operand.vmem [shape: f32[1,16], index: 15, kind: input, shape index: {}]
  %s16 = inlined_call_operand.vmem [shape: bf16[16,16], index: 16, kind: input, shape index: {}]
  %s17 = inlined_call_operand.vmem [shape: f32[1,16], index: 17, kind: input, shape index: {}]
  %s18 = inlined_call_operand.vmem [shape: bf16[16,16], index: 18, kind: input, shape index: {}]
  %s19 = inlined_call_operand.vmem [shape: f32[1,16], index: 19, kind: input, shape index: {}]
  %s20 = inlined_call_operand.vmem [shape: bf16[16,32], index: 20, kind: input, shape index: {}]
  %s21 = inlined_call_operand.vmem [shape: f32[1,32], index: 21, kind: input, shape index: {}]
  %s22 = inlined_call_operand.vmem [shape: f32[1,32], index: 22, kind: input, shape index: {}]
  %s23 = inlined_call_operand.vmem [shape: f32[1,32], index: 23, kind: input, shape index: {}]
  %s24 = inlined_call_operand.vmem [shape: bf16[32,128], index: 24, kind: input, shape index: {}]
  %s25 = inlined_call_operand.vmem [shape: f32[1,128], index: 25, kind: input, shape index: {}]
  %s26 = inlined_call_operand.vmem [shape: bf16[128,32], index: 26, kind: input, shape index: {}]
  %s27 = inlined_call_operand.vmem [shape: f32[1,32], index: 27, kind: input, shape index: {}]
  %s28 = inlined_call_operand.hbm [shape: f32[2,16,32], index: 28, kind: output, shape index: {}]
  %s29 = sld [smem:[#allocation0]]
  $region149: #{tpu_custom_call.1} parent=0
    _
  %s31 = ssub.s32 1, %s29
  %s32 = scalar_select 0, %s31, %s29
  $region1: #{tpu_custom_call.1} parent=0
    #allocation6 [shape = 'u8[8192]{0}', space=vmem, size = 0x2000, scoped, tag = 'output window, operand 0']
    #allocation7 [shape = 's32[2]{0}', space=sflag, size = 0x8, scoped, tag = 'scoped memory for tpu_custom_call.1']
    %33 = vsyncpa [#allocation7], 0
    %s34 = scalar_lea.sflag [#allocation7], 1
    %35 = vsyncpa %s34, 0
    loop: start=0, step=1, limit=6
    $region2: #{tpu_custom_call.1} parent=1 // loop_pre_header
      _
    $region3: #{tpu_custom_call.1} parent=1 // loop_header
      %s37 = sphi 0, %s41
      %p38 = scmp.ge.s32.totalorder %s37, 6
      %s44 = sphi 0, %s56
      %s45 = sphi 0, %s52
      %s46 = sphi 0, %s44
      %s47 = sphi 0, %s45
      %s48 = sphi 0, %s46
      %s49 = sphi 0, %s47
      %s59 = sphi 0, %s61
      %s62 = sphi 0, %s59
      %s63 = sphi 0, %s62
      %s79 = sphi 0, %s63
      %s85 = sphi 0, %s87
      %s88 = sphi 0, %s85
      %s89 = sphi 0, %s88
      %s105 = sphi 0, %s89
      %s109 = sphi 0, %s109
      %s111 = sphi 0, %s109
      %s112 = sphi 0, %s111
      %s126 = sphi 0, %s112
      %s130 = sphi 0, %s130
      %s132 = sphi 0, %s130
      %s133 = sphi 0, %s132
      %s147 = sphi 0, %s133
      %s151 = sphi 0, %s151
      %s153 = sphi 0, %s151
      %s154 = sphi 0, %s153
      %s168 = sphi 0, %s154
      %s172 = sphi 0, %s172
      %s174 = sphi 0, %s172
      %s175 = sphi 0, %s174
      %s189 = sphi 0, %s175
      %s193 = sphi 0, %s193
      %s195 = sphi 0, %s193
      %s196 = sphi 0, %s195
      %s210 = sphi 0, %s196
      %s214 = sphi 0, %s214
      %s216 = sphi 0, %s214
      %s217 = sphi 0, %s216
      %s231 = sphi 0, %s217
      %s235 = sphi 0, %s235
      %s237 = sphi 0, %s235
      %s238 = sphi 0, %s237
      %s252 = sphi 0, %s238
      %s256 = sphi 0, %s256
      %s258 = sphi 0, %s256
      %s259 = sphi 0, %s258
      %s273 = sphi 0, %s259
      %s277 = sphi 0, %s277
      %s279 = sphi 0, %s277
      %s280 = sphi 0, %s279
      %s294 = sphi 0, %s280
      %s298 = sphi 0, %s298
      %s300 = sphi 0, %s298
      %s301 = sphi 0, %s300
      %s315 = sphi 0, %s301
      %s319 = sphi 0, %s319
      %s321 = sphi 0, %s319
      %s322 = sphi 0, %s321
      %s336 = sphi 0, %s322
      %s340 = sphi 0, %s340
      %s342 = sphi 0, %s340
      %s343 = sphi 0, %s342
      %s357 = sphi 0, %s343
      %s361 = sphi 0, %s361
      %s363 = sphi 0, %s361
      %s364 = sphi 0, %s363
      %s378 = sphi 0, %s364
      %s382 = sphi 0, %s382
      %s384 = sphi 0, %s382
      %s385 = sphi 0, %s384
      %s399 = sphi 0, %s385
      %s403 = sphi 0, %s403
      %s405 = sphi 0, %s403
      %s406 = sphi 0, %s405
      %s420 = sphi 0, %s406
      %s424 = sphi 0, %s424
      %s426 = sphi 0, %s424
      %s427 = sphi 0, %s426
      %s441 = sphi 0, %s427
      %s445 = sphi 0, %s445
      %s447 = sphi 0, %s445
      %s448 = sphi 0, %s447
      %s462 = sphi 0, %s448
      %s466 = sphi 0, %s466
      %s468 = sphi 0, %s466
      %s469 = sphi 0, %s468
      %s483 = sphi 0, %s469
      %s487 = sphi 0, %s487
      %s489 = sphi 0, %s487
      %s490 = sphi 0, %s489
      %s504 = sphi 0, %s490
      %s508 = sphi 0, %s508
      %s510 = sphi 0, %s508
      %s511 = sphi 0, %s510
      %s525 = sphi 0, %s511
      %s529 = sphi 0, %s529
      %s531 = sphi 0, %s529
      %s532 = sphi 0, %s531
      %s546 = sphi 0, %s532
      %s550 = sphi 0, %s550
      %s552 = sphi 0, %s550
      %s553 = sphi 0, %s552
      %s567 = sphi 0, %s553
      %s571 = sphi 0, %s571
      %s573 = sphi 0, %s571
      %s574 = sphi 0, %s573
      %s588 = sphi 0, %s574
      %s592 = sphi 0, %s592
      %s594 = sphi 0, %s592
      %s595 = sphi 0, %s594
      %s609 = sphi 0, %s595
      %s613 = sphi 0, %s613
      %s615 = sphi 0, %s613
      %s616 = sphi 0, %s615
      %s630 = sphi 0, %s616
      %s634 = sphi 0, %s634
      %s636 = sphi 0, %s634
      %s637 = sphi 0, %s636
      %s651 = sphi 0, %s637
      %s659 = sphi 0, %s661
      %s662 = sphi 0, %s659
      %s663 = sphi 0, %s662
      %s679 = sphi 0, %s663
    $region4: #{tpu_custom_call.1} parent=1 // loop_header_branch
      %40 = sbr.rel (%p38) target = $region8
    $region5: #{tpu_custom_call.1} parent=1 // loop_body
      %s42 = ssub.s32 %s37, 1
      %s43 = ssub.s32 %s37, 2
      %s50 = sadd.s32 1, %s45
      %p51 = scmp.ge.s32.totalorder %s50, 2
      %s52 = scalar_select %p51, 0, %s50
      %s53 = sadd.s32 1, %s44
      %s54 = scalar_select %p51, %s53, %s44
      %p55 = scmp.ge.s32.totalorder %s54, 2
      %s56 = scalar_select %p55, 0, %s54
      %s57 = ssub.s32 %s44, %s56
      %p58 = scmp.eq.s32.totalorder %s57, 0
      %s60 = sadd.s32 %s59, 1
      %s61 = scalar_select %p58, %s59, %s60
      %p64 = pneg %p58
      %p65 = scmp.eq.s32.totalorder %s37, 3
      %p66 = por %p64, %p65
      %p67 = scmp.ne.s32.totalorder %s59, %s62
      %p68 = scmp.eq.s32.totalorder %s37, 0
      %p69 = por %p67, %p68
      %p70 = scmp.ne.s32.totalorder %s59, %s62
      %p71 = scmp.eq.s32.totalorder %s42, 3
      %p72 = por %p70, %p71
      %p73 = scmp.ne.s32.totalorder %s62, %s63
      %p74 = scmp.eq.s32.totalorder %s42, 0
      %p75 = por %p73, %p74
      %p76 = scmp.ne.s32.totalorder %s62, %s63
      %p77 = scmp.eq.s32.totalorder %s43, 3
      %p78 = por %p76, %p77
      %p80 = scmp.ne.s32.totalorder %s63, %s79
      %p81 = scmp.eq.s32.totalorder %s43, 0
      %p82 = por %p80, %p81
      %s83 = ssub.s32 %s44, %s56
      %p84 = scmp.eq.s32.totalorder %s83, 0
      %s86 = sadd.s32 %s85, 1
      %s87 = scalar_select %p84, %s85, %s86
      %p90 = pneg %p84
      %p91 = scmp.eq.s32.totalorder %s37, 3
      %p92 = por %p90, %p91
      %p93 = scmp.ne.s32.totalorder %s85, %s88
      %p94 = scmp.eq.s32.totalorder %s37, 0
      %p95 = por %p93, %p94
      %p96 = scmp.ne.s32.totalorder %s85, %s88
      %p97 = scmp.eq.s32.totalorder %s42, 3
      %p98 = por %p96, %p97
      %p99 = scmp.ne.s32.totalorder %s88, %s89
      %p100 = scmp.eq.s32.totalorder %s42, 0
      %p101 = por %p99, %p100
      %p102 = scmp.ne.s32.totalorder %s88, %s89
      %p103 = scmp.eq.s32.totalorder %s43, 3
      %p104 = por %p102, %p103
      %p106 = scmp.ne.s32.totalorder %s89, %s105
      %p107 = scmp.eq.s32.totalorder %s43, 0
      %p108 = por %p106, %p107
      %s110 = sadd.s32 %s109, 1
      %p113 = scmp.eq.s32.totalorder %s37, 3
      %p114 = scmp.ne.s32.totalorder %s109, %s111
      %p115 = scmp.eq.s32.totalorder %s37, 0
      %p116 = por %p114, %p115
      %p117 = scmp.ne.s32.totalorder %s109, %s111
      %p118 = scmp.eq.s32.totalorder %s42, 3
      %p119 = por %p117, %p118
      %p120 = scmp.ne.s32.totalorder %s111, %s112
      %p121 = scmp.eq.s32.totalorder %s42, 0
      %p122 = por %p120, %p121
      %p123 = scmp.ne.s32.totalorder %s111, %s112
      %p124 = scmp.eq.s32.totalorder %s43, 3
      %p125 = por %p123, %p124
      %p127 = scmp.ne.s32.totalorder %s112, %s126
      %p128 = scmp.eq.s32.totalorder %s43, 0
      %p129 = por %p127, %p128
      %s131 = sadd.s32 %s130, 1
      %p134 = scmp.eq.s32.totalorder %s37, 3
      %p135 = scmp.ne.s32.totalorder %s130, %s132
      %p136 = scmp.eq.s32.totalorder %s37, 0
      %p137 = por %p135, %p136
      %p138 = scmp.ne.s32.totalorder %s130, %s132
      %p139 = scmp.eq.s32.totalorder %s42, 3
      %p140 = por %p138, %p139
      %p141 = scmp.ne.s32.totalorder %s132, %s133
      %p142 = scmp.eq.s32.totalorder %s42, 0
      %p143 = por %p141, %p142
      %p144 = scmp.ne.s32.totalorder %s132, %s133
      %p145 = scmp.eq.s32.totalorder %s43, 3
      %p146 = por %p144, %p145
      %p148 = scmp.ne.s32.totalorder %s133, %s147
      %p149 = scmp.eq.s32.totalorder %s43, 0
      %p150 = por %p148, %p149
      %s152 = sadd.s32 %s151, 1
      %p155 = scmp.eq.s32.totalorder %s37, 3
      %p156 = scmp.ne.s32.totalorder %s151, %s153
      %p157 = scmp.eq.s32.totalorder %s37, 0
      %p158 = por %p156, %p157
      %p159 = scmp.ne.s32.totalorder %s151, %s153
      %p160 = scmp.eq.s32.totalorder %s42, 3
      %p161 = por %p159, %p160
      %p162 = scmp.ne.s32.totalorder %s153, %s154
      %p163 = scmp.eq.s32.totalorder %s42, 0
      %p164 = por %p162, %p163
      %p165 = scmp.ne.s32.totalorder %s153, %s154
      %p166 = scmp.eq.s32.totalorder %s43, 3
      %p167 = por %p165, %p166
      %p169 = scmp.ne.s32.totalorder %s154, %s168
      %p170 = scmp.eq.s32.totalorder %s43, 0
      %p171 = por %p169, %p170
      %s173 = sadd.s32 %s172, 1
      %p176 = scmp.eq.s32.totalorder %s37, 3
      %p177 = scmp.ne.s32.totalorder %s172, %s174
      %p178 = scmp.eq.s32.totalorder %s37, 0
      %p179 = por %p177, %p178
      %p180 = scmp.ne.s32.totalorder %s172, %s174
      %p181 = scmp.eq.s32.totalorder %s42, 3
      %p182 = por %p180, %p181
      %p183 = scmp.ne.s32.totalorder %s174, %s175
      %p184 = scmp.eq.s32.totalorder %s42, 0
      %p185 = por %p183, %p184
      %p186 = scmp.ne.s32.totalorder %s174, %s175
      %p187 = scmp.eq.s32.totalorder %s43, 3
      %p188 = por %p186, %p187
      %p190 = scmp.ne.s32.totalorder %s175, %s189
      %p191 = scmp.eq.s32.totalorder %s43, 0
      %p192 = por %p190, %p191
      %s194 = sadd.s32 %s193, 1
      %p197 = scmp.eq.s32.totalorder %s37, 3
      %p198 = scmp.ne.s32.totalorder %s193, %s195
      %p199 = scmp.eq.s32.totalorder %s37, 0
      %p200 = por %p198, %p199
      %p201 = scmp.ne.s32.totalorder %s193, %s195
      %p202 = scmp.eq.s32.totalorder %s42, 3
      %p203 = por %p201, %p202
      %p204 = scmp.ne.s32.totalorder %s195, %s196
      %p205 = scmp.eq.s32.totalorder %s42, 0
      %p206 = por %p204, %p205
      %p207 = scmp.ne.s32.totalorder %s195, %s196
      %p208 = scmp.eq.s32.totalorder %s43, 3
      %p209 = por %p207, %p208
      %p211 = scmp.ne.s32.totalorder %s196, %s210
      %p212 = scmp.eq.s32.totalorder %s43, 0
      %p213 = por %p211, %p212
      %s215 = sadd.s32 %s214, 1
      %p218 = scmp.eq.s32.totalorder %s37, 3
      %p219 = scmp.ne.s32.totalorder %s214, %s216
      %p220 = scmp.eq.s32.totalorder %s37, 0
      %p221 = por %p219, %p220
      %p222 = scmp.ne.s32.totalorder %s214, %s216
      %p223 = scmp.eq.s32.totalorder %s42, 3
      %p224 = por %p222, %p223
      %p225 = scmp.ne.s32.totalorder %s216, %s217
      %p226 = scmp.eq.s32.totalorder %s42, 0
      %p227 = por %p225, %p226
      %p228 = scmp.ne.s32.totalorder %s216, %s217
      %p229 = scmp.eq.s32.totalorder %s43, 3
      %p230 = por %p228, %p229
      %p232 = scmp.ne.s32.totalorder %s217, %s231
      %p233 = scmp.eq.s32.totalorder %s43, 0
      %p234 = por %p232, %p233
      %s236 = sadd.s32 %s235, 1
      %p239 = scmp.eq.s32.totalorder %s37, 3
      %p240 = scmp.ne.s32.totalorder %s235, %s237
      %p241 = scmp.eq.s32.totalorder %s37, 0
      %p242 = por %p240, %p241
      %p243 = scmp.ne.s32.totalorder %s235, %s237
      %p244 = scmp.eq.s32.totalorder %s42, 3
      %p245 = por %p243, %p244
      %p246 = scmp.ne.s32.totalorder %s237, %s238
      %p247 = scmp.eq.s32.totalorder %s42, 0
      %p248 = por %p246, %p247
      %p249 = scmp.ne.s32.totalorder %s237, %s238
      %p250 = scmp.eq.s32.totalorder %s43, 3
      %p251 = por %p249, %p250
      %p253 = scmp.ne.s32.totalorder %s238, %s252
      %p254 = scmp.eq.s32.totalorder %s43, 0
      %p255 = por %p253, %p254
      %s257 = sadd.s32 %s256, 1
      %p260 = scmp.eq.s32.totalorder %s37, 3
      %p261 = scmp.ne.s32.totalorder %s256, %s258
      %p262 = scmp.eq.s32.totalorder %s37, 0
      %p263 = por %p261, %p262
      %p264 = scmp.ne.s32.totalorder %s256, %s258
      %p265 = scmp.eq.s32.totalorder %s42, 3
      %p266 = por %p264, %p265
      %p267 = scmp.ne.s32.totalorder %s258, %s259
      %p268 = scmp.eq.s32.totalorder %s42, 0
      %p269 = por %p267, %p268
      %p270 = scmp.ne.s32.totalorder %s258, %s259
      %p271 = scmp.eq.s32.totalorder %s43, 3
      %p272 = por %p270, %p271
      %p274 = scmp.ne.s32.totalorder %s259, %s273
      %p275 = scmp.eq.s32.totalorder %s43, 0
      %p276 = por %p274, %p275
      %s278 = sadd.s32 %s277, 1
      %p281 = scmp.eq.s32.totalorder %s37, 3
      %p282 = scmp.ne.s32.totalorder %s277, %s279
      %p283 = scmp.eq.s32.totalorder %s37, 0
      %p284 = por %p282, %p283
      %p285 = scmp.ne.s32.totalorder %s277, %s279
      %p286 = scmp.eq.s32.totalorder %s42, 3
      %p287 = por %p285, %p286
      %p288 = scmp.ne.s32.totalorder %s279, %s280
      %p289 = scmp.eq.s32.totalorder %s42, 0
      %p290 = por %p288, %p289
      %p291 = scmp.ne.s32.totalorder %s279, %s280
      %p292 = scmp.eq.s32.totalorder %s43, 3
      %p293 = por %p291, %p292
      %p295 = scmp.ne.s32.totalorder %s280, %s294
      %p296 = scmp.eq.s32.totalorder %s43, 0
      %p297 = por %p295, %p296
      %s299 = sadd.s32 %s298, 1
      %p302 = scmp.eq.s32.totalorder %s37, 3
      %p303 = scmp.ne.s32.totalorder %s298, %s300
      %p304 = scmp.eq.s32.totalorder %s37, 0
      %p305 = por %p303, %p304
      %p306 = scmp.ne.s32.totalorder %s298, %s300
      %p307 = scmp.eq.s32.totalorder %s42, 3
      %p308 = por %p306, %p307
      %p309 = scmp.ne.s32.totalorder %s300, %s301
      %p310 = scmp.eq.s32.totalorder %s42, 0
      %p311 = por %p309, %p310
      %p312 = scmp.ne.s32.totalorder %s300, %s301
      %p313 = scmp.eq.s32.totalorder %s43, 3
      %p314 = por %p312, %p313
      %p316 = scmp.ne.s32.totalorder %s301, %s315
      %p317 = scmp.eq.s32.totalorder %s43, 0
      %p318 = por %p316, %p317
      %s320 = sadd.s32 %s319, 1
      %p323 = scmp.eq.s32.totalorder %s37, 3
      %p324 = scmp.ne.s32.totalorder %s319, %s321
      %p325 = scmp.eq.s32.totalorder %s37, 0
      %p326 = por %p324, %p325
      %p327 = scmp.ne.s32.totalorder %s319, %s321
      %p328 = scmp.eq.s32.totalorder %s42, 3
      %p329 = por %p327, %p328
      %p330 = scmp.ne.s32.totalorder %s321, %s322
      %p331 = scmp.eq.s32.totalorder %s42, 0
      %p332 = por %p330, %p331
      %p333 = scmp.ne.s32.totalorder %s321, %s322
      %p334 = scmp.eq.s32.totalorder %s43, 3
      %p335 = por %p333, %p334
      %p337 = scmp.ne.s32.totalorder %s322, %s336
      %p338 = scmp.eq.s32.totalorder %s43, 0
      %p339 = por %p337, %p338
      %s341 = sadd.s32 %s340, 1
      %p344 = scmp.eq.s32.totalorder %s37, 3
      %p345 = scmp.ne.s32.totalorder %s340, %s342
      %p346 = scmp.eq.s32.totalorder %s37, 0
      %p347 = por %p345, %p346
      %p348 = scmp.ne.s32.totalorder %s340, %s342
      %p349 = scmp.eq.s32.totalorder %s42, 3
      %p350 = por %p348, %p349
      %p351 = scmp.ne.s32.totalorder %s342, %s343
      %p352 = scmp.eq.s32.totalorder %s42, 0
      %p353 = por %p351, %p352
      %p354 = scmp.ne.s32.totalorder %s342, %s343
      %p355 = scmp.eq.s32.totalorder %s43, 3
      %p356 = por %p354, %p355
      %p358 = scmp.ne.s32.totalorder %s343, %s357
      %p359 = scmp.eq.s32.totalorder %s43, 0
      %p360 = por %p358, %p359
      %s362 = sadd.s32 %s361, 1
      %p365 = scmp.eq.s32.totalorder %s37, 3
      %p366 = scmp.ne.s32.totalorder %s361, %s363
      %p367 = scmp.eq.s32.totalorder %s37, 0
      %p368 = por %p366, %p367
      %p369 = scmp.ne.s32.totalorder %s361, %s363
      %p370 = scmp.eq.s32.totalorder %s42, 3
      %p371 = por %p369, %p370
      %p372 = scmp.ne.s32.totalorder %s363, %s364
      %p373 = scmp.eq.s32.totalorder %s42, 0
      %p374 = por %p372, %p373
      %p375 = scmp.ne.s32.totalorder %s363, %s364
      %p376 = scmp.eq.s32.totalorder %s43, 3
      %p377 = por %p375, %p376
      %p379 = scmp.ne.s32.totalorder %s364, %s378
      %p380 = scmp.eq.s32.totalorder %s43, 0
      %p381 = por %p379, %p380
      %s383 = sadd.s32 %s382, 1
      %p386 = scmp.eq.s32.totalorder %s37, 3
      %p387 = scmp.ne.s32.totalorder %s382, %s384
      %p388 = scmp.eq.s32.totalorder %s37, 0
      %p389 = por %p387, %p388
      %p390 = scmp.ne.s32.totalorder %s382, %s384
      %p391 = scmp.eq.s32.totalorder %s42, 3
      %p392 = por %p390, %p391
      %p393 = scmp.ne.s32.totalorder %s384, %s385
      %p394 = scmp.eq.s32.totalorder %s42, 0
      %p395 = por %p393, %p394
      %p396 = scmp.ne.s32.totalorder %s384, %s385
      %p397 = scmp.eq.s32.totalorder %s43, 3
      %p398 = por %p396, %p397
      %p400 = scmp.ne.s32.totalorder %s385, %s399
      %p401 = scmp.eq.s32.totalorder %s43, 0
      %p402 = por %p400, %p401
      %s404 = sadd.s32 %s403, 1
      %p407 = scmp.eq.s32.totalorder %s37, 3
      %p408 = scmp.ne.s32.totalorder %s403, %s405
      %p409 = scmp.eq.s32.totalorder %s37, 0
      %p410 = por %p408, %p409
      %p411 = scmp.ne.s32.totalorder %s403, %s405
      %p412 = scmp.eq.s32.totalorder %s42, 3
      %p413 = por %p411, %p412
      %p414 = scmp.ne.s32.totalorder %s405, %s406
      %p415 = scmp.eq.s32.totalorder %s42, 0
      %p416 = por %p414, %p415
      %p417 = scmp.ne.s32.totalorder %s405, %s406
      %p418 = scmp.eq.s32.totalorder %s43, 3
      %p419 = por %p417, %p418
      %p421 = scmp.ne.s32.totalorder %s406, %s420
      %p422 = scmp.eq.s32.totalorder %s43, 0
      %p423 = por %p421, %p422
      %s425 = sadd.s32 %s424, 1
      %p428 = scmp.eq.s32.totalorder %s37, 3
      %p429 = scmp.ne.s32.totalorder %s424, %s426
      %p430 = scmp.eq.s32.totalorder %s37, 0
      %p431 = por %p429, %p430
      %p432 = scmp.ne.s32.totalorder %s424, %s426
      %p433 = scmp.eq.s32.totalorder %s42, 3
      %p434 = por %p432, %p433
      %p435 = scmp.ne.s32.totalorder %s426, %s427
      %p436 = scmp.eq.s32.totalorder %s42, 0
      %p437 = por %p435, %p436
      %p438 = scmp.ne.s32.totalorder %s426, %s427
      %p439 = scmp.eq.s32.totalorder %s43, 3
      %p440 = por %p438, %p439
      %p442 = scmp.ne.s32.totalorder %s427, %s441
      %p443 = scmp.eq.s32.totalorder %s43, 0
      %p444 = por %p442, %p443
      %s446 = sadd.s32 %s445, 1
      %p449 = scmp.eq.s32.totalorder %s37, 3
      %p450 = scmp.ne.s32.totalorder %s445, %s447
      %p451 = scmp.eq.s32.totalorder %s37, 0
      %p452 = por %p450, %p451
      %p453 = scmp.ne.s32.totalorder %s445, %s447
      %p454 = scmp.eq.s32.totalorder %s42, 3
      %p455 = por %p453, %p454
      %p456 = scmp.ne.s32.totalorder %s447, %s448
      %p457 = scmp.eq.s32.totalorder %s42, 0
      %p458 = por %p456, %p457
      %p459 = scmp.ne.s32.totalorder %s447, %s448
      %p460 = scmp.eq.s32.totalorder %s43, 3
      %p461 = por %p459, %p460
      %p463 = scmp.ne.s32.totalorder %s448, %s462
      %p464 = scmp.eq.s32.totalorder %s43, 0
      %p465 = por %p463, %p464
      %s467 = sadd.s32 %s466, 1
      %p470 = scmp.eq.s32.totalorder %s37, 3
      %p471 = scmp.ne.s32.totalorder %s466, %s468
      %p472 = scmp.eq.s32.totalorder %s37, 0
      %p473 = por %p471, %p472
      %p474 = scmp.ne.s32.totalorder %s466, %s468
      %p475 = scmp.eq.s32.totalorder %s42, 3
      %p476 = por %p474, %p475
      %p477 = scmp.ne.s32.totalorder %s468, %s469
      %p478 = scmp.eq.s32.totalorder %s42, 0
      %p479 = por %p477, %p478
      %p480 = scmp.ne.s32.totalorder %s468, %s469
      %p481 = scmp.eq.s32.totalorder %s43, 3
      %p482 = por %p480, %p481
      %p484 = scmp.ne.s32.totalorder %s469, %s483
      %p485 = scmp.eq.s32.totalorder %s43, 0
      %p486 = por %p484, %p485
      %s488 = sadd.s32 %s487, 1
      %p491 = scmp.eq.s32.totalorder %s37, 3
      %p492 = scmp.ne.s32.totalorder %s487, %s489
      %p493 = scmp.eq.s32.totalorder %s37, 0
      %p494 = por %p492, %p493
      %p495 = scmp.ne.s32.totalorder %s487, %s489
      %p496 = scmp.eq.s32.totalorder %s42, 3
      %p497 = por %p495, %p496
      %p498 = scmp.ne.s32.totalorder %s489, %s490
      %p499 = scmp.eq.s32.totalorder %s42, 0
      %p500 = por %p498, %p499
      %p501 = scmp.ne.s32.totalorder %s489, %s490
      %p502 = scmp.eq.s32.totalorder %s43, 3
      %p503 = por %p501, %p502
      %p505 = scmp.ne.s32.totalorder %s490, %s504
      %p506 = scmp.eq.s32.totalorder %s43, 0
      %p507 = por %p505, %p506
      %s509 = sadd.s32 %s508, 1
      %p512 = scmp.eq.s32.totalorder %s37, 3
      %p513 = scmp.ne.s32.totalorder %s508, %s510
      %p514 = scmp.eq.s32.totalorder %s37, 0
      %p515 = por %p513, %p514
      %p516 = scmp.ne.s32.totalorder %s508, %s510
      %p517 = scmp.eq.s32.totalorder %s42, 3
      %p518 = por %p516, %p517
      %p519 = scmp.ne.s32.totalorder %s510, %s511
      %p520 = scmp.eq.s32.totalorder %s42, 0
      %p521 = por %p519, %p520
      %p522 = scmp.ne.s32.totalorder %s510, %s511
      %p523 = scmp.eq.s32.totalorder %s43, 3
      %p524 = por %p522, %p523
      %p526 = scmp.ne.s32.totalorder %s511, %s525
      %p527 = scmp.eq.s32.totalorder %s43, 0
      %p528 = por %p526, %p527
      %s530 = sadd.s32 %s529, 1
      %p533 = scmp.eq.s32.totalorder %s37, 3
      %p534 = scmp.ne.s32.totalorder %s529, %s531
      %p535 = scmp.eq.s32.totalorder %s37, 0
      %p536 = por %p534, %p535
      %p537 = scmp.ne.s32.totalorder %s529, %s531
      %p538 = scmp.eq.s32.totalorder %s42, 3
      %p539 = por %p537, %p538
      %p540 = scmp.ne.s32.totalorder %s531, %s532
      %p541 = scmp.eq.s32.totalorder %s42, 0
      %p542 = por %p540, %p541
      %p543 = scmp.ne.s32.totalorder %s531, %s532
      %p544 = scmp.eq.s32.totalorder %s43, 3
      %p545 = por %p543, %p544
      %p547 = scmp.ne.s32.totalorder %s532, %s546
      %p548 = scmp.eq.s32.totalorder %s43, 0
      %p549 = por %p547, %p548
      %s551 = sadd.s32 %s550, 1
      %p554 = scmp.eq.s32.totalorder %s37, 3
      %p555 = scmp.ne.s32.totalorder %s550, %s552
      %p556 = scmp.eq.s32.totalorder %s37, 0
      %p557 = por %p555, %p556
      %p558 = scmp.ne.s32.totalorder %s550, %s552
      %p559 = scmp.eq.s32.totalorder %s42, 3
      %p560 = por %p558, %p559
      %p561 = scmp.ne.s32.totalorder %s552, %s553
      %p562 = scmp.eq.s32.totalorder %s42, 0
      %p563 = por %p561, %p562
      %p564 = scmp.ne.s32.totalorder %s552, %s553
      %p565 = scmp.eq.s32.totalorder %s43, 3
      %p566 = por %p564, %p565
      %p568 = scmp.ne.s32.totalorder %s553, %s567
      %p569 = scmp.eq.s32.totalorder %s43, 0
      %p570 = por %p568, %p569
      %s572 = sadd.s32 %s571, 1
      %p575 = scmp.eq.s32.totalorder %s37, 3
      %p576 = scmp.ne.s32.totalorder %s571, %s573
      %p577 = scmp.eq.s32.totalorder %s37, 0
      %p578 = por %p576, %p577
      %p579 = scmp.ne.s32.totalorder %s571, %s573
      %p580 = scmp.eq.s32.totalorder %s42, 3
      %p581 = por %p579, %p580
      %p582 = scmp.ne.s32.totalorder %s573, %s574
      %p583 = scmp.eq.s32.totalorder %s42, 0
      %p584 = por %p582, %p583
      %p585 = scmp.ne.s32.totalorder %s573, %s574
      %p586 = scmp.eq.s32.totalorder %s43, 3
      %p587 = por %p585, %p586
      %p589 = scmp.ne.s32.totalorder %s574, %s588
      %p590 = scmp.eq.s32.totalorder %s43, 0
      %p591 = por %p589, %p590
      %s593 = sadd.s32 %s592, 1
      %p596 = scmp.eq.s32.totalorder %s37, 3
      %p597 = scmp.ne.s32.totalorder %s592, %s594
      %p598 = scmp.eq.s32.totalorder %s37, 0
      %p599 = por %p597, %p598
      %p600 = scmp.ne.s32.totalorder %s592, %s594
      %p601 = scmp.eq.s32.totalorder %s42, 3
      %p602 = por %p600, %p601
      %p603 = scmp.ne.s32.totalorder %s594, %s595
      %p604 = scmp.eq.s32.totalorder %s42, 0
      %p605 = por %p603, %p604
      %p606 = scmp.ne.s32.totalorder %s594, %s595
      %p607 = scmp.eq.s32.totalorder %s43, 3
      %p608 = por %p606, %p607
      %p610 = scmp.ne.s32.totalorder %s595, %s609
      %p611 = scmp.eq.s32.totalorder %s43, 0
      %p612 = por %p610, %p611
      %s614 = sadd.s32 %s613, 1
      %p617 = scmp.eq.s32.totalorder %s37, 3
      %p618 = scmp.ne.s32.totalorder %s613, %s615
      %p619 = scmp.eq.s32.totalorder %s37, 0
      %p620 = por %p618, %p619
      %p621 = scmp.ne.s32.totalorder %s613, %s615
      %p622 = scmp.eq.s32.totalorder %s42, 3
      %p623 = por %p621, %p622
      %p624 = scmp.ne.s32.totalorder %s615, %s616
      %p625 = scmp.eq.s32.totalorder %s42, 0
      %p626 = por %p624, %p625
      %p627 = scmp.ne.s32.totalorder %s615, %s616
      %p628 = scmp.eq.s32.totalorder %s43, 3
      %p629 = por %p627, %p628
      %p631 = scmp.ne.s32.totalorder %s616, %s630
      %p632 = scmp.eq.s32.totalorder %s43, 0
      %p633 = por %p631, %p632
      %s635 = sadd.s32 %s634, 1
      %p638 = scmp.eq.s32.totalorder %s37, 3
      %p639 = scmp.ne.s32.totalorder %s634, %s636
      %p640 = scmp.eq.s32.totalorder %s37, 0
      %p641 = por %p639, %p640
      %p642 = scmp.ne.s32.totalorder %s634, %s636
      %p643 = scmp.eq.s32.totalorder %s42, 3
      %p644 = por %p642, %p643
      %p645 = scmp.ne.s32.totalorder %s636, %s637
      %p646 = scmp.eq.s32.totalorder %s42, 0
      %p647 = por %p645, %p646
      %p648 = scmp.ne.s32.totalorder %s636, %s637
      %p649 = scmp.eq.s32.totalorder %s43, 3
      %p650 = por %p648, %p649
      %p652 = scmp.ne.s32.totalorder %s637, %s651
      %p653 = scmp.eq.s32.totalorder %s43, 0
      %p654 = por %p652, %p653
      %s655 = ssub.s32 %s44, %s56
      %s656 = ssub.s32 %s45, %s52
      %s657 = sor.u32 %s655, %s656
      %p658 = scmp.eq.s32.totalorder %s657, 0
      %s660 = sadd.s32 %s659, 1
      %s661 = scalar_select %p658, %s659, %s660
      %p664 = pneg %p658
      %p665 = scmp.eq.s32.totalorder %s37, 3
      %p666 = por %p664, %p665
      %p667 = scmp.ne.s32.totalorder %s659, %s662
      %p668 = scmp.eq.s32.totalorder %s37, 0
      %p669 = por %p667, %p668
      %p670 = scmp.ne.s32.totalorder %s659, %s662
      %p671 = scmp.eq.s32.totalorder %s42, 3
      %p672 = por %p670, %p671
      %p673 = scmp.ne.s32.totalorder %s662, %s663
      %p674 = scmp.eq.s32.totalorder %s42, 0
      %p675 = por %p673, %p674
      %p676 = scmp.ne.s32.totalorder %s662, %s663
      %p677 = scmp.eq.s32.totalorder %s43, 3
      %p678 = por %p676, %p677
      %p680 = scmp.ne.s32.totalorder %s663, %s679
      %p681 = scmp.eq.s32.totalorder %s43, 0
      %p682 = por %p680, %p681
      %p683 = scmp.le.s32.totalorder 1, %s37
      %p684 = scmp.lt.s32.totalorder %s37, 5
      %p685 = pnand %p683, %p684
      %p686 = pneg %p685
      // Predicated region
      $region9: #{tpu_custom_call.1} parent=5 // pred_check
        _
      $region10: #{tpu_custom_call.1} parent=5 // pred_check_branch
        %688 = sbr.rel (%p685) target = $region12
      $region11: #{tpu_custom_call.1} parent=5 // pred_region
        %s689 = ssub.s32 %s37, 1
        // Predicated region
        $region13: #{tpu_custom_call.1} parent=11 // pred_check
          %p690 = pneg %p122
        $region14: #{tpu_custom_call.1} parent=11 // pred_check_branch
          %692 = sbr.rel (%p690) target = $region16
        $region15: #{tpu_custom_call.1} parent=11 // pred_region
          _
        $region16: #{tpu_custom_call.1} parent=11 // pred_fallthru
          _
        // Predicated region
        $region17: #{tpu_custom_call.1} parent=11 // pred_check
          %p693 = pneg %p143
        $region18: #{tpu_custom_call.1} parent=11 // pred_check_branch
          %695 = sbr.rel (%p693) target = $region20
        $region19: #{tpu_custom_call.1} parent=11 // pred_region
          _
        $region20: #{tpu_custom_call.1} parent=11 // pred_fallthru
          _
        // Predicated region
        $region21: #{tpu_custom_call.1} parent=11 // pred_check
          %p696 = pneg %p164
        $region22: #{tpu_custom_call.1} parent=11 // pred_check_branch
          %698 = sbr.rel (%p696) target = $region24
        $region23: #{tpu_custom_call.1} parent=11 // pred_region
          _
        $region24: #{tpu_custom_call.1} parent=11 // pred_fallthru
          _
        // Predicated region
        $region25: #{tpu_custom_call.1} parent=11 // pred_check
          %p699 = pneg %p185
        $region26: #{tpu_custom_call.1} parent=11 // pred_check_branch
          %701 = sbr.rel (%p699) target = $region28
        $region27: #{tpu_custom_call.1} parent=11 // pred_region
          _
        $region28: #{tpu_custom_call.1} parent=11 // pred_fallthru
          _
        // Predicated region
        $region29: #{tpu_custom_call.1} parent=11 // pred_check
          %p702 = pneg %p206
        $region30: #{tpu_custom_call.1} parent=11 // pred_check_branch
          %704 = sbr.rel (%p702) target = $region32
        $region31: #{tpu_custom_call.1} parent=11 // pred_region
          _
        $region32: #{tpu_custom_call.1} parent=11 // pred_fallthru
          _
        // Predicated region
        $region33: #{tpu_custom_call.1} parent=11 // pred_check
          %p705 = pneg %p227
        $region34: #{tpu_custom_call.1} parent=11 // pred_check_branch
          %707 = sbr.rel (%p705) target = $region36
        $region35: #{tpu_custom_call.1} parent=11 // pred_region
          _
        $region36: #{tpu_custom_call.1} parent=11 // pred_fallthru
          _
        // Predicated region
        $region37: #{tpu_custom_call.1} parent=11 // pred_check
          %p708 = pneg %p248
        $region38: #{tpu_custom_call.1} parent=11 // pred_check_branch
          %710 = sbr.rel (%p708) target = $region40
        $region39: #{tpu_custom_call.1} parent=11 // pred_region
          _
        $region40: #{tpu_custom_call.1} parent=11 // pred_fallthru
          _
        // Predicated region
        $region41: #{tpu_custom_call.1} parent=11 // pred_check
          %p711 = pneg %p269
        $region42: #{tpu_custom_call.1} parent=11 // pred_check_branch
          %713 = sbr.rel (%p711) target = $region44
        $region43: #{tpu_custom_call.1} parent=11 // pred_region
          _
        $region44: #{tpu_custom_call.1} parent=11 // pred_fallthru
          _
        // Predicated region
        $region45: #{tpu_custom_call.1} parent=11 // pred_check
          %p714 = pneg %p290
        $region46: #{tpu_custom_call.1} parent=11 // pred_check_branch
          %716 = sbr.rel (%p714) target = $region48
        $region47: #{tpu_custom_call.1} parent=11 // pred_region
          _
        $region48: #{tpu_custom_call.1} parent=11 // pred_fallthru
          _
        // Predicated region
        $region49: #{tpu_custom_call.1} parent=11 // pred_check
          %p717 = pneg %p311
        $region50: #{tpu_custom_call.1} parent=11 // pred_check_branch
          %719 = sbr.rel (%p717) target = $region52
        $region51: #{tpu_custom_call.1} parent=11 // pred_region
          _
        $region52: #{tpu_custom_call.1} parent=11 // pred_fallthru
          _
        // Predicated region
        $region53: #{tpu_custom_call.1} parent=11 // pred_check
          %p720 = pneg %p332
        $region54: #{tpu_custom_call.1} parent=11 // pred_check_branch
          %722 = sbr.rel (%p720) target = $region56
        $region55: #{tpu_custom_call.1} parent=11 // pred_region
          _
        $region56: #{tpu_custom_call.1} parent=11 // pred_fallthru
          _
        // Predicated region
        $region57: #{tpu_custom_call.1} parent=11 // pred_check
          %p723 = pneg %p353
        $region58: #{tpu_custom_call.1} parent=11 // pred_check_branch
          %725 = sbr.rel (%p723) target = $region60
        $region59: #{tpu_custom_call.1} parent=11 // pred_region
          _
        $region60: #{tpu_custom_call.1} parent=11 // pred_fallthru
          _
        // Predicated region
        $region61: #{tpu_custom_call.1} parent=11 // pred_check
          %p726 = pneg %p374
        $region62: #{tpu_custom_call.1} parent=11 // pred_check_branch
          %728 = sbr.rel (%p726) target = $region64
        $region63: #{tpu_custom_call.1} parent=11 // pred_region
          _
        $region64: #{tpu_custom_call.1} parent=11 // pred_fallthru
          _
        // Predicated region
        $region65: #{tpu_custom_call.1} parent=11 // pred_check
          %p729 = pneg %p395
        $region66: #{tpu_custom_call.1} parent=11 // pred_check_branch
          %731 = sbr.rel (%p729) target = $region68
        $region67: #{tpu_custom_call.1} parent=11 // pred_region
          _
        $region68: #{tpu_custom_call.1} parent=11 // pred_fallthru
          _
        // Predicated region
        $region69: #{tpu_custom_call.1} parent=11 // pred_check
          %p732 = pneg %p416
        $region70: #{tpu_custom_call.1} parent=11 // pred_check_branch
          %734 = sbr.rel (%p732) target = $region72
        $region71: #{tpu_custom_call.1} parent=11 // pred_region
          _
        $region72: #{tpu_custom_call.1} parent=11 // pred_fallthru
          _
        // Predicated region
        $region73: #{tpu_custom_call.1} parent=11 // pred_check
          %p735 = pneg %p437
        $region74: #{tpu_custom_call.1} parent=11 // pred_check_branch
          %737 = sbr.rel (%p735) target = $region76
        $region75: #{tpu_custom_call.1} parent=11 // pred_region
          _
        $region76: #{tpu_custom_call.1} parent=11 // pred_fallthru
          _
        // Predicated region
        $region77: #{tpu_custom_call.1} parent=11 // pred_check
          %p738 = pneg %p458
        $region78: #{tpu_custom_call.1} parent=11 // pred_check_branch
          %740 = sbr.rel (%p738) target = $region80
        $region79: #{tpu_custom_call.1} parent=11 // pred_region
          _
        $region80: #{tpu_custom_call.1} parent=11 // pred_fallthru
          _
        // Predicated region
        $region81: #{tpu_custom_call.1} parent=11 // pred_check
          %p741 = pneg %p479
        $region82: #{tpu_custom_call.1} parent=11 // pred_check_branch
          %743 = sbr.rel (%p741) target = $region84
        $region83: #{tpu_custom_call.1} parent=11 // pred_region
          _
        $region84: #{tpu_custom_call.1} parent=11 // pred_fallthru
          _
        // Predicated region
        $region85: #{tpu_custom_call.1} parent=11 // pred_check
          %p744 = pneg %p500
        $region86: #{tpu_custom_call.1} parent=11 // pred_check_branch
          %746 = sbr.rel (%p744) target = $region88
        $region87: #{tpu_custom_call.1} parent=11 // pred_region
          _
        $region88: #{tpu_custom_call.1} parent=11 // pred_fallthru
          _
        // Predicated region
        $region89: #{tpu_custom_call.1} parent=11 // pred_check
          %p747 = pneg %p521
        $region90: #{tpu_custom_call.1} parent=11 // pred_check_branch
          %749 = sbr.rel (%p747) target = $region92
        $region91: #{tpu_custom_call.1} parent=11 // pred_region
          _
        $region92: #{tpu_custom_call.1} parent=11 // pred_fallthru
          _
        // Predicated region
        $region93: #{tpu_custom_call.1} parent=11 // pred_check
          %p750 = pneg %p542
        $region94: #{tpu_custom_call.1} parent=11 // pred_check_branch
          %752 = sbr.rel (%p750) target = $region96
        $region95: #{tpu_custom_call.1} parent=11 // pred_region
          _
        $region96: #{tpu_custom_call.1} parent=11 // pred_fallthru
          _
        // Predicated region
        $region97: #{tpu_custom_call.1} parent=11 // pred_check
          %p753 = pneg %p563
        $region98: #{tpu_custom_call.1} parent=11 // pred_check_branch
          %755 = sbr.rel (%p753) target = $region100
        $region99: #{tpu_custom_call.1} parent=11 // pred_region
          _
        $region100: #{tpu_custom_call.1} parent=11 // pred_fallthru
          _
        // Predicated region
        $region101: #{tpu_custom_call.1} parent=11 // pred_check
          %p756 = pneg %p584
        $region102: #{tpu_custom_call.1} parent=11 // pred_check_branch
          %758 = sbr.rel (%p756) target = $region104
        $region103: #{tpu_custom_call.1} parent=11 // pred_region
          _
        $region104: #{tpu_custom_call.1} parent=11 // pred_fallthru
          _
        // Predicated region
        $region105: #{tpu_custom_call.1} parent=11 // pred_check
          %p759 = pneg %p605
        $region106: #{tpu_custom_call.1} parent=11 // pred_check_branch
          %761 = sbr.rel (%p759) target = $region108
        $region107: #{tpu_custom_call.1} parent=11 // pred_region
          _
        $region108: #{tpu_custom_call.1} parent=11 // pred_fallthru
          _
        // Predicated region
        $region109: #{tpu_custom_call.1} parent=11 // pred_check
          %p762 = pneg %p626
        $region110: #{tpu_custom_call.1} parent=11 // pred_check_branch
          %764 = sbr.rel (%p762) target = $region112
        $region111: #{tpu_custom_call.1} parent=11 // pred_region
          _
        $region112: #{tpu_custom_call.1} parent=11 // pred_fallthru
          _
        // Predicated region
        $region113: #{tpu_custom_call.1} parent=11 // pred_check
          %p765 = pneg %p647
        $region114: #{tpu_custom_call.1} parent=11 // pred_check_branch
          %767 = sbr.rel (%p765) target = $region116
        $region115: #{tpu_custom_call.1} parent=11 // pred_region
          _
        $region116: #{tpu_custom_call.1} parent=11 // pred_fallthru
          _
      $region12: #{tpu_custom_call.1} parent=5 // pred_fallthru
        _
      %p768 = scmp.lt.s32.totalorder %s37, 4
      // Predicated region
      $region117: #{tpu_custom_call.1} parent=5 // pred_check
        %p769 = pneg %p768
      $region118: #{tpu_custom_call.1} parent=5 // pred_check_branch
        %771 = sbr.rel (%p769) target = $region120
      $region119: #{tpu_custom_call.1} parent=5 // pred_region
        // Predicated region
        $region121: #{tpu_custom_call.1} parent=119 // pred_check
          %p772 = pneg %p69
        $region122: #{tpu_custom_call.1} parent=119 // pred_check_branch
          %774 = sbr.rel (%p772) target = $region124
        $region123: #{tpu_custom_call.1} parent=119 // pred_region
          %p775 = scmp.lt.s32.totalorder %s44, 1
          %s776 = scalar_select %p775, %s44, 1
          %s777 = smul.addr %s776, 2
          %s778 = smul.addr %s777, 8
          %s779 = scalar_lea.vmem %s0, %s778
        $region124: #{tpu_custom_call.1} parent=119 // pred_fallthru
          _
        // Predicated region
        $region125: #{tpu_custom_call.1} parent=119 // pred_check
          %p780 = pneg %p95
        $region126: #{tpu_custom_call.1} parent=119 // pred_check_branch
          %782 = sbr.rel (%p780) target = $region128
        $region127: #{tpu_custom_call.1} parent=119 // pred_region
          %p783 = scmp.lt.s32.totalorder %s44, 1
          %s784 = scalar_select %p783, %s44, 1
          %s785 = smul.addr %s784, 4
          %s786 = scalar_lea.vmem %s1, %s785
        $region128: #{tpu_custom_call.1} parent=119 // pred_fallthru
          _
      $region120: #{tpu_custom_call.1} parent=5 // pred_fallthru
        _
      %p787 = scmp.le.s32.totalorder 1, %s37
      %p788 = scmp.lt.s32.totalorder %s37, 5
      %p789 = pnand %p787, %p788
      %p790 = pneg %p789
      // Predicated region
      $region129: #{tpu_custom_call.1} parent=5 // pred_check
        _
      $region130: #{tpu_custom_call.1} parent=5 // pred_check_branch
        %792 = sbr.rel (%p789) target = $region132
      $region131: #{tpu_custom_call.1} parent=5 // pred_region
        %s793 = ssub.s32 %s37, 1
        %p794 = scmp.lt.s32.totalorder %s46, 1
        %s795 = scalar_select %p794, %s46, 1
        %s796 = smul.addr %s795, 2
        %s797 = smul.addr %s796, 8
        %s798 = scalar_lea.vmem %s0, %s797
        %p799 = pneg %p75
        %p800 = pneg %p72
        %p801 = scmp.lt.s32.totalorder %s46, 1
        %s802 = scalar_select %p801, %s46, 1
        %s803 = smul.addr %s802, 4
        %s804 = scalar_lea.vmem %s1, %s803
        %p805 = pneg %p101
        %p806 = pneg %p98
        %p807 = pneg %p122
        %p808 = pneg %p119
        %p809 = pneg %p143
        %p810 = pneg %p140
        %p811 = pneg %p164
        %p812 = pneg %p161
        %p813 = pneg %p185
        %p814 = pneg %p182
        %p815 = pneg %p206
        %p816 = pneg %p203
        %p817 = pneg %p227
        %p818 = pneg %p224
        %p819 = pneg %p248
        %p820 = pneg %p245
        %p821 = pneg %p269
        %p822 = pneg %p266
        %p823 = pneg %p290
        %p824 = pneg %p287
        %p825 = pneg %p311
        %p826 = pneg %p308
        %p827 = pneg %p332
        %p828 = pneg %p329
        %p829 = pneg %p353
        %p830 = pneg %p350
        %p831 = pneg %p374
        %p832 = pneg %p371
        %p833 = pneg %p395
        %p834 = pneg %p392
        %p835 = pneg %p416
        %p836 = pneg %p413
        %p837 = pneg %p437
        %p838 = pneg %p434
        %p839 = pneg %p458
        %p840 = pneg %p455
        %p841 = pneg %p479
        %p842 = pneg %p476
        %p843 = pneg %p500
        %p844 = pneg %p497
        %p845 = pneg %p521
        %p846 = pneg %p518
        %p847 = pneg %p542
        %p848 = pneg %p539
        %p849 = pneg %p563
        %p850 = pneg %p560
        %p851 = pneg %p584
        %p852 = pneg %p581
        %p853 = pneg %p605
        %p854 = pneg %p602
        %p855 = pneg %p626
        %p856 = pneg %p623
        %p857 = pneg %p647
        %p858 = pneg %p644
        %p859 = pneg %p675
        %p860 = pneg %p672
        %s861 = sand.u32 %s662, 1
        %s862 = scalar_lea.sflag [#allocation7], %s861
        %s863 = sand.u32 %s662, 1
        %s864 = smul.addr %s863, 8
        %s865 = scalar_lea.vmem [#allocation6], %s864
        %p866 = scmp.lt.s32.totalorder %s46, 1
        %s867 = scalar_select %p866, %s46, 1
        %s868 = smul.addr %s867, 2
        %s869 = smul.addr %s868, 8
        %s870 = scalar_lea.vmem %s0, %s869
        %p871 = scmp.lt.s32.totalorder %s46, 1
        %s872 = scalar_select %p871, %s46, 1
        %s873 = smul.addr %s872, 4
        %s874 = scalar_lea.vmem %s1, %s873
        %p876 = scmp.eq.s32.totalorder %s47, 0
        // Predicated region
        $region133: #{tpu_custom_call.1} parent=131 // pred_check
          %p877 = pneg %p876
        $region134: #{tpu_custom_call.1} parent=131 // pred_check_branch
          %879 = sbr.rel (%p877) target = $region136
        $region135: #{tpu_custom_call.1} parent=131 // pred_region
          %v880 = vld [vmem:[%s870] sm:$0xff]
          %v881 = vld [vmem:[%s870 + $0x8] sm:$0xff]
          %v882 = vld [vmem:[%s2] sm:$0x1]
          %v883 = vld [vmem:[%s3] sm:$0x1]
          %vm884 = vcmask 261120
          %v885 = vsel %vm884, %v880, 0.0
          %886 = vadd.xlane.f32.xlu0 %v885
          %v887 = vpop.xlane.xlu0 %886
          %v888 = vsel %vm884, %v881, 0.0
          %889 = vadd.xlane.f32.xlu0 %v888
          %v890 = vpop.xlane.xlu0 %889
          %v891 = vrcp.pop 32.0
          %v892 = vmul.f32 %v887, %v891
          %v893 = vmul.f32 %v890, %v891
          %v894 = vsub.f32 %v880, %v892
          %v895 = vsub.f32 %v881, %v893
          %v896 = vmul.f32 %v894, %v894
          %v897 = vmul.f32 %v895, %v895
          %v898 = vsel %vm884, %v896, 0.0
          %899 = vadd.xlane.f32.xlu0 %v898
          %v900 = vpop.xlane.xlu0 %899
          %v901 = vsel %vm884, %v897, 0.0
          %902 = vadd.xlane.f32.xlu0 %v901
          %v903 = vpop.xlane.xlu0 %902
          %v904 = vmul.f32 %v900, %v891
          %v905 = vmul.f32 %v903, %v891
          %v906 = vadd.f32 %v904, 1e-05
          %v907 = vadd.f32 %v905, 1e-05
          %v908 = vrsqrt.pop %v906
          %v909 = vrsqrt.pop %v907
          %v910 = vmul.f32 %v894, %v908
          %v911 = vmul.f32 %v895, %v909
          %v913 = vlaneseq
          %v914 = vshrl.u32 %v913, 7
          %v915 = vsub.s32 0, %v914
          %v916 = vrot.slane %v882, %v915
          %v918 = vmul.f32 %v910, %v916
          %v919 = vmul.f32 %v911, %v916
          %v921 = vlaneseq
          %v922 = vshrl.u32 %v921, 7
          %v923 = vsub.s32 0, %v922
          %v924 = vrot.slane %v883, %v923
          %v926 = vadd.f32 %v918, %v924
          %v927 = vadd.f32 %v919, %v924
          %v928 = vpack.c.bf16 %v927, %v926
          %v929 = vld [vmem:[%s6] sm:$0xf]
          %v930 = vld [vmem:[%s6 + $0x4] sm:$0xf]
          %v931 = vld [vmem:[%s6 + $0x8] sm:$0xf]
          %v932 = vld [vmem:[%s6 + $0xc] sm:$0xf]
          %v933 = vld [vmem:[%s7] sm:$0x1]
          %v935 = vlaneseq
          %v936 = vshrl.u32 %v935, 7
          %v937 = vsub.s32 0, %v936
          %v938 = vrot.slane %v933, %v937
          %v944 = vunpack.c.l.b16 %v929
          %v945 = vunpack.c.l.b16 %v930
          %v946 = vunpack.c.l.b16 %v931
          %v947 = vunpack.c.l.b16 %v932
          %v948 = vpack.c.b16 %v945, %v944
          %v949 = vpack.c.b16 %v947, %v946
          %v953 = vsel %vm884, %v928, 0
          %955 = vmatprep.subr.bf16.mxu0 0
          %956 = vmatpush1.bf16.msra.mxu0 %v948
          %957 = vmatprep.subr.bf16.mxu0 0
          %958 = vmatpush1.bf16.msra.mxu0 %v949
          %959 = vmatprep.subr.bf16.mxu0 0
          %960 = vmatpush1.bf16.msra.mxu0 0
          %961 = vmatprep.subr.bf16.mxu0 0
          %962 = vmatpush1.bf16.msra.mxu0 0
          %963 = vmatprep.subr.bf16.mxu0 0
          %964 = vmatpush1.bf16.msra.mxu0 0
          %965 = vmatprep.subr.bf16.mxu0 0
          %966 = vmatpush1.bf16.msra.mxu0 0
          %967 = vmatprep.subr.bf16.mxu0 0
          %968 = vmatpush1.bf16.msra.mxu0 0
          %969 = vmatprep.subr.bf16.mxu0 0
          %970 = vmatpush1.bf16.msra.mxu0 0
          %971 = vmatprep.subr.bf16.mxu0 0
          %972 = vmatpush1.bf16.msra.mxu0 0
          %973 = vmatprep.subr.bf16.mxu0 0
          %974 = vmatpush1.bf16.msra.mxu0 0
          %975 = vmatprep.subr.bf16.mxu0 0
          %976 = vmatpush1.bf16.msra.mxu0 0
          %977 = vmatprep.subr.bf16.mxu0 0
          %978 = vmatpush1.bf16.msra.mxu0 0
          %979 = vmatprep.subr.bf16.mxu0 0
          %980 = vmatpush1.bf16.msra.mxu0 0
          %981 = vmatprep.subr.bf16.mxu0 0
          %982 = vmatpush1.bf16.msra.mxu0 0
          %983 = vmatprep.subr.bf16.mxu0 0
          %984 = vmatpush1.bf16.msra.mxu0 0
          %985 = vmatprep.subr.bf16.mxu0 0
          %986 = vmatpush1.bf16.msra.mxu0 0
          %987 = vmatprep.mubr.bf16.mxu0 0
          %988 = vmatmul.mubr.bf16.gmra.mrb[0].mxu0 %v953
          %v989 = vpop.f32.mrb[0].mxu0
          %v990 = vadd.f32 %v938, %v989
          %v991 = vpop.f32.mrb[0].mxu0
          %v992 = vpop.f32.mrb[0].mxu0
          %v993 = vadd.f32 %v938, %v992
          %v994 = vpop.f32.mrb[0].mxu0
          %995 = vdwg.mxu0
          %v996 = vpack.c.bf16 %v993, %v990
          %vm997 = vcmask 130048
          %998 = vst.msk [vmem:[#allocation2] sm:$0xff] %vm997, %v996
          %v999 = vld [vmem:[%s8] sm:$0xf]
          %v1000 = vld [vmem:[%s8 + $0x4] sm:$0xf]
          %v1001 = vld [vmem:[%s8 + $0x8] sm:$0xf]
          %v1002 = vld [vmem:[%s8 + $0xc] sm:$0xf]
          %v1003 = vld [vmem:[%s9] sm:$0x1]
          %v1005 = vlaneseq
          %v1006 = vshrl.u32 %v1005, 7
          %v1007 = vsub.s32 0, %v1006
          %v1008 = vrot.slane %v1003, %v1007
          %v1014 = vunpack.c.l.b16 %v999
          %v1015 = vunpack.c.l.b16 %v1000
          %v1016 = vunpack.c.l.b16 %v1001
          %v1017 = vunpack.c.l.b16 %v1002
          %v1018 = vpack.c.b16 %v1015, %v1014
          %v1019 = vpack.c.b16 %v1017, %v1016
          %1022 = vmatprep.subr.bf16.mxu0 0
          %1023 = vmatpush1.bf16.msra.mxu0 %v1018
          %1024 = vmatprep.subr.bf16.mxu0 0
          %1025 = vmatpush1.bf16.msra.mxu0 %v1019
          %1026 = vmatprep.subr.bf16.mxu0 0
          %1027 = vmatpush1.bf16.msra.mxu0 0
          %1028 = vmatprep.subr.bf16.mxu0 0
          %1029 = vmatpush1.bf16.msra.mxu0 0
          %1030 = vmatprep.subr.bf16.mxu0 0
          %1031 = vmatpush1.bf16.msra.mxu0 0
          %1032 = vmatprep.subr.bf16.mxu0 0
          %1033 = vmatpush1.bf16.msra.mxu0 0
          %1034 = vmatprep.subr.bf16.mxu0 0
          %1035 = vmatpush1.bf16.msra.mxu0 0
          %1036 = vmatprep.subr.bf16.mxu0 0
          %1037 = vmatpush1.bf16.msra.mxu0 0
          %1038 = vmatprep.subr.bf16.mxu0 0
          %1039 = vmatpush1.bf16.msra.mxu0 0
          %1040 = vmatprep.subr.bf16.mxu0 0
          %1041 = vmatpush1.bf16.msra.mxu0 0
          %1042 = vmatprep.subr.bf16.mxu0 0
          %1043 = vmatpush1.bf16.msra.mxu0 0
          %1044 = vmatprep.subr.bf16.mxu0 0
          %1045 = vmatpush1.bf16.msra.mxu0 0
          %1046 = vmatprep.subr.bf16.mxu0 0
          %1047 = vmatpush1.bf16.msra.mxu0 0
          %1048 = vmatprep.subr.bf16.mxu0 0
          %1049 = vmatpush1.bf16.msra.mxu0 0
          %1050 = vmatprep.subr.bf16.mxu0 0
          %1051 = vmatpush1.bf16.msra.mxu0 0
          %1052 = vmatprep.subr.bf16.mxu0 0
          %1053 = vmatpush1.bf16.msra.mxu0 0
          %1054 = vmatprep.mubr.bf16.mxu0 0
          %1055 = vmatmul.mubr.bf16.gmra.mrb[0].mxu0 %v953
          %v1056 = vpop.f32.mrb[0].mxu0
          %v1057 = vadd.f32 %v1008, %v1056
          %v1058 = vpop.f32.mrb[0].mxu0
          %v1059 = vpop.f32.mrb[0].mxu0
          %v1060 = vadd.f32 %v1008, %v1059
          %v1061 = vpop.f32.mrb[0].mxu0
          %1062 = vdwg.mxu0
          %v1063 = vpack.c.bf16 %v1060, %v1057
          %1064 = vst.msk [vmem:[#allocation3] sm:$0xff] %vm997, %v1063
          %v1065 = vld [vmem:[%s874] sm:$0xf]
          %v1066 = vld [vmem:[%s16] sm:$0xf]
          %v1067 = vld [vmem:[%s16 + $0x4] sm:$0xf]
          %v1068 = vld [vmem:[%s17] sm:$0x1]
          %v1070 = vlaneseq
          %v1071 = vshrl.u32 %v1070, 7
          %v1072 = vsub.s32 0, %v1071
          %v1073 = vrot.slane %v1068, %v1072
          %v1077 = vunpack.c.l.b16 %v1066
          %v1078 = vunpack.c.l.b16 %v1067
          %v1079 = vpack.c.b16 %v1078, %v1077
          %v1082 = vsel %vm997, %v1065, 0
          %1084 = vmatprep.subr.bf16.mxu0 0
          %1085 = vmatpush1.bf16.msra.mxu0 %v1079
          %1086 = vmatprep.subr.bf16.mxu0 0
          %1087 = vmatpush1.bf16.msra.mxu0 0
          %1088 = vmatprep.subr.bf16.mxu0 0
          %1089 = vmatpush1.bf16.msra.mxu0 0
          %1090 = vmatprep.subr.bf16.mxu0 0
          %1091 = vmatpush1.bf16.msra.mxu0 0
          %1092 = vmatprep.subr.bf16.mxu0 0
          %1093 = vmatpush1.bf16.msra.mxu0 0
          %1094 = vmatprep.subr.bf16.mxu0 0
          %1095 = vmatpush1.bf16.msra.mxu0 0
          %1096 = vmatprep.subr.bf16.mxu0 0
          %1097 = vmatpush1.bf16.msra.mxu0 0
          %1098 = vmatprep.subr.bf16.mxu0 0
          %1099 = vmatpush1.bf16.msra.mxu0 0
          %1100 = vmatprep.subr.bf16.mxu0 0
          %1101 = vmatpush1.bf16.msra.mxu0 0
          %1102 = vmatprep.subr.bf16.mxu0 0
          %1103 = vmatpush1.bf16.msra.mxu0 0
          %1104 = vmatprep.subr.bf16.mxu0 0
          %1105 = vmatpush1.bf16.msra.mxu0 0
          %1106 = vmatprep.subr.bf16.mxu0 0
          %1107 = vmatpush1.bf16.msra.mxu0 0
          %1108 = vmatprep.subr.bf16.mxu0 0
          %1109 = vmatpush1.bf16.msra.mxu0 0
          %1110 = vmatprep.subr.bf16.mxu0 0
          %1111 = vmatpush1.bf16.msra.mxu0 0
          %1112 = vmatprep.subr.bf16.mxu0 0
          %1113 = vmatpush1.bf16.msra.mxu0 0
          %1114 = vmatprep.subr.bf16.mxu0 0
          %1115 = vmatpush1.bf16.msra.mxu0 0
          %1116 = vmatprep.mubr.bf16.mxu0 0
          %1117 = vmatmul.mubr.bf16.gmra.mrb[0].mxu0 %v1082
          %v1118 = vpop.f32.mrb[0].mxu0
          %v1119 = vadd.f32 %v1073, %v1118
          %v1120 = vpop.f32.mrb[0].mxu0
          %v1121 = vpop.f32.mrb[0].mxu0
          %v1122 = vpop.f32.mrb[0].mxu0
          %1123 = vdwg.mxu0
          %v1124 = vpack.c.bf16 %v1119, %v1119
          %vm1125 = vcmask 125952
          %1126 = vst.msk [vmem:[#allocation4] sm:$0xf] %vm1125, %v1124
          %v1127 = vld [vmem:[%s18] sm:$0xf]
          %v1128 = vld [vmem:[%s18 + $0x4] sm:$0xf]
          %v1129 = vld [vmem:[%s19] sm:$0x1]
          %v1131 = vlaneseq
          %v1132 = vshrl.u32 %v1131, 7
          %v1133 = vsub.s32 0, %v1132
          %v1134 = vrot.slane %v1129, %v1133
          %v1138 = vunpack.c.l.b16 %v1127
          %v1139 = vunpack.c.l.b16 %v1128
          %v1140 = vpack.c.b16 %v1139, %v1138
          %1142 = vmatprep.subr.bf16.mxu0 0
          %1143 = vmatpush1.bf16.msra.mxu0 %v1140
          %1144 = vmatprep.subr.bf16.mxu0 0
          %1145 = vmatpush1.bf16.msra.mxu0 0
          %1146 = vmatprep.subr.bf16.mxu0 0
          %1147 = vmatpush1.bf16.msra.mxu0 0
          %1148 = vmatprep.subr.bf16.mxu0 0
          %1149 = vmatpush1.bf16.msra.mxu0 0
          %1150 = vmatprep.subr.bf16.mxu0 0
          %1151 = vmatpush1.bf16.msra.mxu0 0
          %1152 = vmatprep.subr.bf16.mxu0 0
          %1153 = vmatpush1.bf16.msra.mxu0 0
          %1154 = vmatprep.subr.bf16.mxu0 0
          %1155 = vmatpush1.bf16.msra.mxu0 0
          %1156 = vmatprep.subr.bf16.mxu0 0
          %1157 = vmatpush1.bf16.msra.mxu0 0
          %1158 = vmatprep.subr.bf16.mxu0 0
          %1159 = vmatpush1.bf16.msra.mxu0 0
          %1160 = vmatprep.subr.bf16.mxu0 0
          %1161 = vmatpush1.bf16.msra.mxu0 0
          %1162 = vmatprep.subr.bf16.mxu0 0
          %1163 = vmatpush1.bf16.msra.mxu0 0
          %1164 = vmatprep.subr.bf16.mxu0 0
          %1165 = vmatpush1.bf16.msra.mxu0 0
          %1166 = vmatprep.subr.bf16.mxu0 0
          %1167 = vmatpush1.bf16.msra.mxu0 0
          %1168 = vmatprep.subr.bf16.mxu0 0
          %1169 = vmatpush1.bf16.msra.mxu0 0
          %1170 = vmatprep.subr.bf16.mxu0 0
          %1171 = vmatpush1.bf16.msra.mxu0 0
          %1172 = vmatprep.subr.bf16.mxu0 0
          %1173 = vmatpush1.bf16.msra.mxu0 0
          %1174 = vmatprep.mubr.bf16.mxu0 0
          %1175 = vmatmul.mubr.bf16.gmra.mrb[0].mxu0 %v1082
          %v1176 = vpop.f32.mrb[0].mxu0
          %v1177 = vadd.f32 %v1134, %v1176
          %v1178 = vpop.f32.mrb[0].mxu0
          %v1179 = vpop.f32.mrb[0].mxu0
          %v1180 = vpop.f32.mrb[0].mxu0
          %1181 = vdwg.mxu0
          %v1182 = vpack.c.bf16 %v1177, %v1177
          %1183 = vst.msk [vmem:[#allocation5] sm:$0xf] %vm1125, %v1182
        $region136: #{tpu_custom_call.1} parent=131 // pred_fallthru
          _
        %s1184 = smul.u32 %s47, 8
        %s1185 = scalar_lea.vmem %s870, %s1184
        %v1186 = vld [vmem:[%s1185] sm:$0xff]
        %v1187 = vld [vmem:[%s2] sm:$0x1]
        %v1188 = vld [vmem:[%s3] sm:$0x1]
        %vm1189 = vcmask 261120
        %v1190 = vsel %vm1189, %v1186, 0.0
        %1191 = vadd.xlane.f32.xlu0 %v1190
        %v1192 = vpop.xlane.xlu0 %1191
        %v1193 = vrcp.pop 32.0
        %v1194 = vmul.f32 %v1192, %v1193
        %v1195 = vsub.f32 %v1186, %v1194
        %v1196 = vmul.f32 %v1195, %v1195
        %v1197 = vsel %vm1189, %v1196, 0.0
        %1198 = vadd.xlane.f32.xlu0 %v1197
        %v1199 = vpop.xlane.xlu0 %1198
        %v1200 = vmul.f32 %v1199, %v1193
        %v1201 = vadd.f32 %v1200, 1e-05
        %v1202 = vrsqrt.pop %v1201
        %v1203 = vmul.f32 %v1195, %v1202
        %v1205 = vlaneseq
        %v1206 = vshrl.u32 %v1205, 7
        %v1207 = vsub.s32 0, %v1206
        %v1208 = vrot.slane %v1187, %v1207
        %v1210 = vmul.f32 %v1203, %v1208
        %v1212 = vlaneseq
        %v1213 = vshrl.u32 %v1212, 7
        %v1214 = vsub.s32 0, %v1213
        %v1215 = vrot.slane %v1188, %v1214
        %v1217 = vadd.f32 %v1210, %v1215
        %v1218 = vld [vmem:[#allocation2] sm:$0xff]
        %v1219 = vld [vmem:[#allocation3] sm:$0xff]
        %v1220 = vpack.c.bf16 %v1217, %v1217
        %v1221 = vld [vmem:[%s4] sm:$0xf]
        %v1222 = vld [vmem:[%s4 + $0x4] sm:$0xf]
        %v1223 = vld [vmem:[%s4 + $0x8] sm:$0xf]
        %v1224 = vld [vmem:[%s4 + $0xc] sm:$0xf]
        %v1225 = vld [vmem:[%s5] sm:$0x1]
        %v1227 = vlaneseq
        %v1228 = vshrl.u32 %v1227, 7
        %v1229 = vsub.s32 0, %v1228
        %v1230 = vrot.slane %v1225, %v1229
        %v1236 = vunpack.c.l.b16 %v1221
        %v1237 = vunpack.c.l.b16 %v1222
        %v1238 = vunpack.c.l.b16 %v1223
        %v1239 = vunpack.c.l.b16 %v1224
        %v1240 = vpack.c.b16 %v1237, %v1236
        %v1241 = vpack.c.b16 %v1239, %v1238
        %v1245 = vsel %vm1189, %v1220, 0
        %1247 = vmatprep.subr.bf16.mxu0 0
        %1248 = vmatpush1.bf16.msra.mxu0 %v1240
        %1249 = vmatprep.subr.bf16.mxu0 0
        %1250 = vmatpush1.bf16.msra.mxu0 %v1241
        %1251 = vmatprep.subr.bf16.mxu0 0
        %1252 = vmatpush1.bf16.msra.mxu0 0
        %1253 = vmatprep.subr.bf16.mxu0 0
        %1254 = vmatpush1.bf16.msra.mxu0 0
        %1255 = vmatprep.subr.bf16.mxu0 0
        %1256 = vmatpush1.bf16.msra.mxu0 0
        %1257 = vmatprep.subr.bf16.mxu0 0
        %1258 = vmatpush1.bf16.msra.mxu0 0
        %1259 = vmatprep.subr.bf16.mxu0 0
        %1260 = vmatpush1.bf16.msra.mxu0 0
        %1261 = vmatprep.subr.bf16.mxu0 0
        %1262 = vmatpush1.bf16.msra.mxu0 0
        %1263 = vmatprep.subr.bf16.mxu0 0
        %1264 = vmatpush1.bf16.msra.mxu0 0
        %1265 = vmatprep.subr.bf16.mxu0 0
        %1266 = vmatpush1.bf16.msra.mxu0 0
        %1267 = vmatprep.subr.bf16.mxu0 0
        %1268 = vmatpush1.bf16.msra.mxu0 0
        %1269 = vmatprep.subr.bf16.mxu0 0
        %1270 = vmatpush1.bf16.msra.mxu0 0
        %1271 = vmatprep.subr.bf16.mxu0 0
        %1272 = vmatpush1.bf16.msra.mxu0 0
        %1273 = vmatprep.subr.bf16.mxu0 0
        %1274 = vmatpush1.bf16.msra.mxu0 0
        %1275 = vmatprep.subr.bf16.mxu0 0
        %1276 = vmatpush1.bf16.msra.mxu0 0
        %1277 = vmatprep.subr.bf16.mxu0 0
        %1278 = vmatpush1.bf16.msra.mxu0 0
        %1279 = vmatprep.mubr.bf16.mxu0 0
        %1280 = vmatmul.mubr.bf16.gmra.mrb[0].mxu0 %v1245
        %v1281 = vpop.f32.mrb[0].mxu0
        %v1282 = vadd.f32 %v1230, %v1281
        %v1283 = vpop.f32.mrb[0].mxu0
        %v1284 = vpop.f32.mrb[0].mxu0
        %v1285 = vpop.f32.mrb[0].mxu0
        %1286 = vdwg.mxu0
        %v1287 = vpack.c.bf16 %v1282, %v1282
        %vm1288 = vcmask 64512
        %v1290 = vsel %vm1288, %v1287, 0
        %v1293 = vsel %vm1288, %v1218, 0
        %1295 = vmatprep.subr.bf16.mxu0 0
        %1296 = vmatpush1.bf16.xpose.msra.mxu0 %v1293
        %1297 = vmatprep.subr.bf16.mxu0 0
        %1298 = vmatpush1.bf16.xpose.msra.mxu0 0
        %1299 = vmatprep.subr.bf16.mxu0 0
        %1300 = vmatpush1.bf16.xpose.msra.mxu0 0
        %1301 = vmatprep.subr.bf16.mxu0 0
        %1302 = vmatpush1.bf16.xpose.msra.mxu0 0
        %1303 = vmatprep.subr.bf16.mxu0 0
        %1304 = vmatpush1.bf16.xpose.msra.mxu0 0
        %1305 = vmatprep.subr.bf16.mxu0 0
        %1306 = vmatpush1.bf16.xpose.msra.mxu0 0
        %1307 = vmatprep.subr.bf16.mxu0 0
        %1308 = vmatpush1.bf16.xpose.msra.mxu0 0
        %1309 = vmatprep.subr.bf16.mxu0 0
        %1310 = vmatpush1.bf16.xpose.msra.mxu0 0
        %1311 = vmatprep.subr.bf16.mxu0 0
        %1312 = vmatpush1.bf16.xpose.msra.mxu0 0
        %1313 = vmatprep.subr.bf16.mxu0 0
        %1314 = vmatpush1.bf16.xpose.msra.mxu0 0
        %1315 = vmatprep.subr.bf16.mxu0 0
        %1316 = vmatpush1.bf16.xpose.msra.mxu0 0
        %1317 = vmatprep.subr.bf16.mxu0 0
        %1318 = vmatpush1.bf16.xpose.msra.mxu0 0
        %1319 = vmatprep.subr.bf16.mxu0 0
        %1320 = vmatpush1.bf16.xpose.msra.mxu0 0
        %1321 = vmatprep.subr.bf16.mxu0 0
        %1322 = vmatpush1.bf16.xpose.msra.mxu0 0
        %1323 = vmatprep.subr.bf16.mxu0 0
        %1324 = vmatpush1.bf16.xpose.msra.mxu0 0
        %1325 = vmatprep.subr.bf16.mxu0 0
        %1326 = vmatpush1.bf16.xpose.msra.mxu0 0
        %1327 = vmatprep.mubr.bf16.mxu0 0
        %1328 = vmatmul.mubr.bf16.gmra.mrb[0].mxu0 %v1290
        %v1329 = vpop.f32.mrb[0].mxu0
        %v1330 = vadd.f32 0.0, %v1329
        %v1331 = vpop.f32.mrb[0].mxu0
        %v1332 = vpop.f32.mrb[0].mxu0
        %v1333 = vpop.f32.mrb[0].mxu0
        %1334 = vdwg.mxu0
        %vm1335 = vcmask 130048
        %v1336 = vsel %vm1335, %v1330, -inf
        %1337 = vmax.xlane.f32.xlu0 %v1336
        %v1338 = vpop.xlane.xlu0 %1337
        %v1339 = vsub.f32 %v1330, %v1338
        %v1340 = vmul.f32 %v1339, 1.442695
        %v1341 = vpow.pop %v1340
        %v1342 = vsel %vm1335, %v1341, 0.0
        %1343 = vadd.xlane.f32.xlu0 %v1342
        %v1344 = vpop.xlane.xlu0 %1343
        %v1345 = vrcp.pop %v1344
        %v1346 = vpack.c.bf16 %v1341, %v1341
        %v1348 = vsel %vm1335, %v1346, 0
        %1350 = vmatprep.subr.bf16.mxu0 0
        %1351 = vmatpush1.bf16.msra.mxu0 %v1219
        %1352 = vmatprep.subr.bf16.mxu0 0
        %1353 = vmatpush1.bf16.msra.mxu0 0
        %1354 = vmatprep.subr.bf16.mxu0 0
        %1355 = vmatpush1.bf16.msra.mxu0 0
        %1356 = vmatprep.subr.bf16.mxu0 0
        %1357 = vmatpush1.bf16.msra.mxu0 0
        %1358 = vmatprep.subr.bf16.mxu0 0
        %1359 = vmatpush1.bf16.msra.mxu0 0
        %1360 = vmatprep.subr.bf16.mxu0 0
        %1361 = vmatpush1.bf16.msra.mxu0 0
        %1362 = vmatprep.subr.bf16.mxu0 0
        %1363 = vmatpush1.bf16.msra.mxu0 0
        %1364 = vmatprep.subr.bf16.mxu0 0
        %1365 = vmatpush1.bf16.msra.mxu0 0
        %1366 = vmatprep.subr.bf16.mxu0 0
        %1367 = vmatpush1.bf16.msra.mxu0 0
        %1368 = vmatprep.subr.bf16.mxu0 0
        %1369 = vmatpush1.bf16.msra.mxu0 0
        %1370 = vmatprep.subr.bf16.mxu0 0
        %1371 = vmatpush1.bf16.msra.mxu0 0
        %1372 = vmatprep.subr.bf16.mxu0 0
        %1373 = vmatpush1.bf16.msra.mxu0 0
        %1374 = vmatprep.subr.bf16.mxu0 0
        %1375 = vmatpush1.bf16.msra.mxu0 0
        %1376 = vmatprep.subr.bf16.mxu0 0
        %1377 = vmatpush1.bf16.msra.mxu0 0
        %1378 = vmatprep.subr.bf16.mxu0 0
        %1379 = vmatpush1.bf16.msra.mxu0 0
        %1380 = vmatprep.subr.bf16.mxu0 0
        %1381 = vmatpush1.bf16.msra.mxu0 0
        %1382 = vmatprep.mubr.bf16.mxu0 0
        %1383 = vmatmul.mubr.bf16.gmra.mrb[0].mxu0 %v1348
        %v1384 = vpop.f32.mrb[0].mxu0
        %v1385 = vadd.f32 0.0, %v1384
        %v1386 = vpop.f32.mrb[0].mxu0
        %v1387 = vpop.f32.mrb[0].mxu0
        %v1388 = vpop.f32.mrb[0].mxu0
        %1389 = vdwg.mxu0
        %v1390 = vmul.f32 %v1385, %v1345
        %1392 = vrot.lane.b32.xlu0 %v1287, 120
        %v1393 = vpop.permute.xlu0 %1392
        %1395 = vrot.lane.b32.xlu0 %v1218, 120
        %v1396 = vpop.permute.xlu0 %1395
        %v1398 = vsel %vm1288, %v1393, 0
        %v1401 = vsel %vm1288, %v1396, 0
        %1403 = vmatprep.subr.bf16.mxu0 0
        %1404 = vmatpush1.bf16.xpose.msra.mxu0 %v1401
        %1405 = vmatprep.subr.bf16.mxu0 0
        %1406 = vmatpush1.bf16.xpose.msra.mxu0 0
        %1407 = vmatprep.subr.bf16.mxu0 0
        %1408 = vmatpush1.bf16.xpose.msra.mxu0 0
        %1409 = vmatprep.subr.bf16.mxu0 0
        %1410 = vmatpush1.bf16.xpose.msra.mxu0 0
        %1411 = vmatprep.subr.bf16.mxu0 0
        %1412 = vmatpush1.bf16.xpose.msra.mxu0 0
        %1413 = vmatprep.subr.bf16.mxu0 0
        %1414 = vmatpush1.bf16.xpose.msra.mxu0 0
        %1415 = vmatprep.subr.bf16.mxu0 0
        %1416 = vmatpush1.bf16.xpose.msra.mxu0 0
        %1417 = vmatprep.subr.bf16.mxu0 0
        %1418 = vmatpush1.bf16.xpose.msra.mxu0 0
        %1419 = vmatprep.subr.bf16.mxu0 0
        %1420 = vmatpush1.bf16.xpose.msra.mxu0 0
        %1421 = vmatprep.subr.bf16.mxu0 0
        %1422 = vmatpush1.bf16.xpose.msra.mxu0 0
        %1423 = vmatprep.subr.bf16.mxu0 0
        %1424 = vmatpush1.bf16.xpose.msra.mxu0 0
        %1425 = vmatprep.subr.bf16.mxu0 0
        %1426 = vmatpush1.bf16.xpose.msra.mxu0 0
        %1427 = vmatprep.subr.bf16.mxu0 0
        %1428 = vmatpush1.bf16.xpose.msra.mxu0 0
        %1429 = vmatprep.subr.bf16.mxu0 0
        %1430 = vmatpush1.bf16.xpose.msra.mxu0 0
        %1431 = vmatprep.subr.bf16.mxu0 0
        %1432 = vmatpush1.bf16.xpose.msra.mxu0 0
        %1433 = vmatprep.subr.bf16.mxu0 0
        %1434 = vmatpush1.bf16.xpose.msra.mxu0 0
        %1435 = vmatprep.mubr.bf16.mxu0 0
        %1436 = vmatmul.mubr.bf16.gmra.mrb[0].mxu0 %v1398
        %v1437 = vpop.f32.mrb[0].mxu0
        %v1438 = vadd.f32 0.0, %v1437
        %v1439 = vpop.f32.mrb[0].mxu0
        %v1440 = vpop.f32.mrb[0].mxu0
        %v1441 = vpop.f32.mrb[0].mxu0
        %1442 = vdwg.mxu0
        %v1443 = vsel %vm1335, %v1438, -inf
        %1444 = vmax.xlane.f32.xlu0 %v1443
        %v1445 = vpop.xlane.xlu0 %1444
        %v1446 = vsub.f32 %v1438, %v1445
        %v1447 = vmul.f32 %v1446, 1.442695
        %v1448 = vpow.pop %v1447
        %v1449 = vsel %vm1335, %v1448, 0.0
        %1450 = vadd.xlane.f32.xlu0 %v1449
        %v1451 = vpop.xlane.xlu0 %1450
        %v1452 = vrcp.pop %v1451
        %v1453 = vpack.c.bf16 %v1448, %v1448
        %1455 = vrot.lane.b32.xlu0 %v1219, 120
        %v1456 = vpop.permute.xlu0 %1455
        %v1459 = vsel %vm1335, %v1453, 0
        %1461 = vmatprep.subr.bf16.mxu0 0
        %1462 = vmatpush1.bf16.msra.mxu0 %v1456
        %1463 = vmatprep.subr.bf16.mxu0 0
        %1464 = vmatpush1.bf16.msra.mxu0 0
        %1465 = vmatprep.subr.bf16.mxu0 0
        %1466 = vmatpush1.bf16.msra.mxu0 0
        %1467 = vmatprep.subr.bf16.mxu0 0
        %1468 = vmatpush1.bf16.msra.mxu0 0
        %1469 = vmatprep.subr.bf16.mxu0 0
        %1470 = vmatpush1.bf16.msra.mxu0 0
        %1471 = vmatprep.subr.bf16.mxu0 0
        %1472 = vmatpush1.bf16.msra.mxu0 0
        %1473 = vmatprep.subr.bf16.mxu0 0
        %1474 = vmatpush1.bf16.msra.mxu0 0
        %1475 = vmatprep.subr.bf16.mxu0 0
        %1476 = vmatpush1.bf16.msra.mxu0 0
        %1477 = vmatprep.subr.bf16.mxu0 0
        %1478 = vmatpush1.bf16.msra.mxu0 0
        %1479 = vmatprep.subr.bf16.mxu0 0
        %1480 = vmatpush1.bf16.msra.mxu0 0
        %1481 = vmatprep.subr.bf16.mxu0 0
        %1482 = vmatpush1.bf16.msra.mxu0 0
        %1483 = vmatprep.subr.bf16.mxu0 0
        %1484 = vmatpush1.bf16.msra.mxu0 0
        %1485 = vmatprep.subr.bf16.mxu0 0
        %1486 = vmatpush1.bf16.msra.mxu0 0
        %1487 = vmatprep.subr.bf16.mxu0 0
        %1488 = vmatpush1.bf16.msra.mxu0 0
        %1489 = vmatprep.subr.bf16.mxu0 0
        %1490 = vmatpush1.bf16.msra.mxu0 0
        %1491 = vmatprep.subr.bf16.mxu0 0
        %1492 = vmatpush1.bf16.msra.mxu0 0
        %1493 = vmatprep.mubr.bf16.mxu0 0
        %1494 = vmatmul.mubr.bf16.gmra.mrb[0].mxu0 %v1459
        %v1495 = vpop.f32.mrb[0].mxu0
        %v1496 = vadd.f32 0.0, %v1495
        %v1497 = vpop.f32.mrb[0].mxu0
        %v1498 = vpop.f32.mrb[0].mxu0
        %v1499 = vpop.f32.mrb[0].mxu0
        %1500 = vdwg.mxu0
        %v1501 = vmul.f32 %v1496, %v1452
        %1503 = vrot.lane.b32.xlu0 %v1501, 8
        %v1504 = vpop.permute.xlu0 %1503
        %v1506 = vsel %vm1288, %v1390, %v1504
        %v1507 = vpack.c.bf16 %v1506, %v1506
        %v1508 = vld [vmem:[%s10] sm:$0xf]
        %v1509 = vld [vmem:[%s10 + $0x4] sm:$0xf]
        %v1510 = vld [vmem:[%s11] sm:$0x1]
        %v1512 = vlaneseq
        %v1513 = vshrl.u32 %v1512, 7
        %v1514 = vsub.s32 0, %v1513
        %v1515 = vrot.slane %v1510, %v1514
        %v1519 = vunpack.c.l.b16 %v1508
        %v1520 = vunpack.c.l.b16 %v1509
        %v1521 = vpack.c.b16 %v1520, %v1519
        %v1524 = vsel %vm1335, %v1507, 0
        %1526 = vmatprep.subr.bf16.mxu0 0
        %1527 = vmatpush1.bf16.msra.mxu0 %v1521
        %1528 = vmatprep.subr.bf16.mxu0 0
        %1529 = vmatpush1.bf16.msra.mxu0 0
        %1530 = vmatprep.subr.bf16.mxu0 0
        %1531 = vmatpush1.bf16.msra.mxu0 0
        %1532 = vmatprep.subr.bf16.mxu0 0
        %1533 = vmatpush1.bf16.msra.mxu0 0
        %1534 = vmatprep.subr.bf16.mxu0 0
        %1535 = vmatpush1.bf16.msra.mxu0 0
        %1536 = vmatprep.subr.bf16.mxu0 0
        %1537 = vmatpush1.bf16.msra.mxu0 0
        %1538 = vmatprep.subr.bf16.mxu0 0
        %1539 = vmatpush1.bf16.msra.mxu0 0
        %1540 = vmatprep.subr.bf16.mxu0 0
        %1541 = vmatpush1.bf16.msra.mxu0 0
        %1542 = vmatprep.subr.bf16.mxu0 0
        %1543 = vmatpush1.bf16.msra.mxu0 0
        %1544 = vmatprep.subr.bf16.mxu0 0
        %1545 = vmatpush1.bf16.msra.mxu0 0
        %1546 = vmatprep.subr.bf16.mxu0 0
        %1547 = vmatpush1.bf16.msra.mxu0 0
        %1548 = vmatprep.subr.bf16.mxu0 0
        %1549 = vmatpush1.bf16.msra.mxu0 0
        %1550 = vmatprep.subr.bf16.mxu0 0
        %1551 = vmatpush1.bf16.msra.mxu0 0
        %1552 = vmatprep.subr.bf16.mxu0 0
        %1553 = vmatpush1.bf16.msra.mxu0 0
        %1554 = vmatprep.subr.bf16.mxu0 0
        %1555 = vmatpush1.bf16.msra.mxu0 0
        %1556 = vmatprep.subr.bf16.mxu0 0
        %1557 = vmatpush1.bf16.msra.mxu0 0
        %1558 = vmatprep.mubr.bf16.mxu0 0
        %1559 = vmatmul.mubr.bf16.gmra.mrb[0].mxu0 %v1524
        %v1560 = vpop.f32.mrb[0].mxu0
        %v1561 = vadd.f32 %v1515, %v1560
        %v1562 = vpop.f32.mrb[0].mxu0
        %v1563 = vpop.f32.mrb[0].mxu0
        %v1564 = vpop.f32.mrb[0].mxu0
        %1565 = vdwg.mxu0
        %v1566 = vadd.f32 %v1186, %v1561
        %v1567 = vld [vmem:[%s12] sm:$0x1]
        %v1568 = vld [vmem:[%s13] sm:$0x1]
        %v1569 = vsel %vm1189, %v1566, 0.0
        %1570 = vadd.xlane.f32.xlu0 %v1569
        %v1571 = vpop.xlane.xlu0 %1570
        %v1572 = vmul.f32 %v1571, %v1193
        %v1573 = vsub.f32 %v1566, %v1572
        %v1574 = vmul.f32 %v1573, %v1573
        %v1575 = vsel %vm1189, %v1574, 0.0
        %1576 = vadd.xlane.f32.xlu0 %v1575
        %v1577 = vpop.xlane.xlu0 %1576
        %v1578 = vmul.f32 %v1577, %v1193
        %v1579 = vadd.f32 %v1578, 1e-05
        %v1580 = vrsqrt.pop %v1579
        %v1581 = vmul.f32 %v1573, %v1580
        %v1583 = vlaneseq
        %v1584 = vshrl.u32 %v1583, 7
        %v1585 = vsub.s32 0, %v1584
        %v1586 = vrot.slane %v1567, %v1585
        %v1588 = vmul.f32 %v1581, %v1586
        %v1590 = vlaneseq
        %v1591 = vshrl.u32 %v1590, 7
        %v1592 = vsub.s32 0, %v1591
        %v1593 = vrot.slane %v1568, %v1592
        %v1595 = vadd.f32 %v1588, %v1593
        %v1596 = vld [vmem:[#allocation4] sm:$0xf]
        %v1597 = vld [vmem:[#allocation5] sm:$0xf]
        %v1598 = vpack.c.bf16 %v1595, %v1595
        %v1599 = vld [vmem:[%s14] sm:$0xf]
        %v1600 = vld [vmem:[%s14 + $0x4] sm:$0xf]
        %v1601 = vld [vmem:[%s14 + $0x8] sm:$0xf]
        %v1602 = vld [vmem:[%s14 + $0xc] sm:$0xf]
        %v1603 = vld [vmem:[%s15] sm:$0x1]
        %v1605 = vlaneseq
        %v1606 = vshrl.u32 %v1605, 7
        %v1607 = vsub.s32 0, %v1606
        %v1608 = vrot.slane %v1603, %v1607
        %v1614 = vunpack.c.l.b16 %v1599
        %v1615 = vunpack.c.l.b16 %v1600
        %v1616 = vunpack.c.l.b16 %v1601
        %v1617 = vunpack.c.l.b16 %v1602
        %v1618 = vpack.c.b16 %v1615, %v1614
        %v1619 = vpack.c.b16 %v1617, %v1616
        %v1623 = vsel %vm1189, %v1598, 0
        %1625 = vmatprep.subr.bf16.mxu0 0
        %1626 = vmatpush1.bf16.msra.mxu0 %v1618
        %1627 = vmatprep.subr.bf16.mxu0 0
        %1628 = vmatpush1.bf16.msra.mxu0 %v1619
        %1629 = vmatprep.subr.bf16.mxu0 0
        %1630 = vmatpush1.bf16.msra.mxu0 0
        %1631 = vmatprep.subr.bf16.mxu0 0
        %1632 = vmatpush1.bf16.msra.mxu0 0
        %1633 = vmatprep.subr.bf16.mxu0 0
        %1634 = vmatpush1.bf16.msra.mxu0 0
        %1635 = vmatprep.subr.bf16.mxu0 0
        %1636 = vmatpush1.bf16.msra.mxu0 0
        %1637 = vmatprep.subr.bf16.mxu0 0
        %1638 = vmatpush1.bf16.msra.mxu0 0
        %1639 = vmatprep.subr.bf16.mxu0 0
        %1640 = vmatpush1.bf16.msra.mxu0 0
        %1641 = vmatprep.subr.bf16.mxu0 0
        %1642 = vmatpush1.bf16.msra.mxu0 0
        %1643 = vmatprep.subr.bf16.mxu0 0
        %1644 = vmatpush1.bf16.msra.mxu0 0
        %1645 = vmatprep.subr.bf16.mxu0 0
        %1646 = vmatpush1.bf16.msra.mxu0 0
        %1647 = vmatprep.subr.bf16.mxu0 0
        %1648 = vmatpush1.bf16.msra.mxu0 0
        %1649 = vmatprep.subr.bf16.mxu0 0
        %1650 = vmatpush1.bf16.msra.mxu0 0
        %1651 = vmatprep.subr.bf16.mxu0 0
        %1652 = vmatpush1.bf16.msra.mxu0 0
        %1653 = vmatprep.subr.bf16.mxu0 0
        %1654 = vmatpush1.bf16.msra.mxu0 0
        %1655 = vmatprep.subr.bf16.mxu0 0
        %1656 = vmatpush1.bf16.msra.mxu0 0
        %1657 = vmatprep.mubr.bf16.mxu0 0
        %1658 = vmatmul.mubr.bf16.gmra.mrb[0].mxu0 %v1623
        %v1659 = vpop.f32.mrb[0].mxu0
        %v1660 = vadd.f32 %v1608, %v1659
        %v1661 = vpop.f32.mrb[0].mxu0
        %v1662 = vpop.f32.mrb[0].mxu0
        %v1663 = vpop.f32.mrb[0].mxu0
        %1664 = vdwg.mxu0
        %v1665 = vpack.c.bf16 %v1660, %v1660
        %v1667 = vsel %vm1288, %v1665, 0
        %v1670 = vsel %vm1288, %v1596, 0
        %1672 = vmatprep.subr.bf16.mxu0 0
        %1673 = vmatpush1.bf16.xpose.msra.mxu0 %v1670
        %1674 = vmatprep.subr.bf16.mxu0 0
        %1675 = vmatpush1.bf16.xpose.msra.mxu0 0
        %1676 = vmatprep.subr.bf16.mxu0 0
        %1677 = vmatpush1.bf16.xpose.msra.mxu0 0
        %1678 = vmatprep.subr.bf16.mxu0 0
        %1679 = vmatpush1.bf16.xpose.msra.mxu0 0
        %1680 = vmatprep.subr.bf16.mxu0 0
        %1681 = vmatpush1.bf16.xpose.msra.mxu0 0
        %1682 = vmatprep.subr.bf16.mxu0 0
        %1683 = vmatpush1.bf16.xpose.msra.mxu0 0
        %1684 = vmatprep.subr.bf16.mxu0 0
        %1685 = vmatpush1.bf16.xpose.msra.mxu0 0
        %1686 = vmatprep.subr.bf16.mxu0 0
        %1687 = vmatpush1.bf16.xpose.msra.mxu0 0
        %1688 = vmatprep.subr.bf16.mxu0 0
        %1689 = vmatpush1.bf16.xpose.msra.mxu0 0
        %1690 = vmatprep.subr.bf16.mxu0 0
        %1691 = vmatpush1.bf16.xpose.msra.mxu0 0
        %1692 = vmatprep.subr.bf16.mxu0 0
        %1693 = vmatpush1.bf16.xpose.msra.mxu0 0
        %1694 = vmatprep.subr.bf16.mxu0 0
        %1695 = vmatpush1.bf16.xpose.msra.mxu0 0
        %1696 = vmatprep.subr.bf16.mxu0 0
        %1697 = vmatpush1.bf16.xpose.msra.mxu0 0
        %1698 = vmatprep.subr.bf16.mxu0 0
        %1699 = vmatpush1.bf16.xpose.msra.mxu0 0
        %1700 = vmatprep.subr.bf16.mxu0 0
        %1701 = vmatpush1.bf16.xpose.msra.mxu0 0
        %1702 = vmatprep.subr.bf16.mxu0 0
        %1703 = vmatpush1.bf16.xpose.msra.mxu0 0
        %1704 = vmatprep.mubr.bf16.mxu0 0
        %1705 = vmatmul.mubr.bf16.gmra.mrb[0].mxu0 %v1667
        %v1706 = vpop.f32.mrb[0].mxu0
        %v1707 = vadd.f32 0.0, %v1706
        %v1708 = vpop.f32.mrb[0].mxu0
        %v1709 = vpop.f32.mrb[0].mxu0
        %v1710 = vpop.f32.mrb[0].mxu0
        %1711 = vdwg.mxu0
        %v1712 = vsel %vm1288, %v1707, -inf
        %1713 = vmax.xlane.f32.xlu0 %v1712
        %v1714 = vpop.xlane.xlu0 %1713
        %v1715 = vsub.f32 %v1707, %v1714
        %v1716 = vmul.f32 %v1715, 1.442695
        %v1717 = vpow.pop %v1716
        %v1718 = vsel %vm1288, %v1717, 0.0
        %1719 = vadd.xlane.f32.xlu0 %v1718
        %v1720 = vpop.xlane.xlu0 %1719
        %v1721 = vrcp.pop %v1720
        %v1722 = vpack.c.bf16 %v1717, %v1717
        %v1724 = vsel %vm1288, %v1722, 0
        %vm1726 = vcmask 1043456
        %v1728 = vsel %vm1726, %v1597, 0
        %1730 = vmatprep.subr.bf16.mxu0 0
        %1731 = vmatpush1.bf16.msra.mxu0 %v1728
        %1732 = vmatprep.subr.bf16.mxu0 0
        %1733 = vmatpush1.bf16.msra.mxu0 0
        %1734 = vmatprep.subr.bf16.mxu0 0
        %1735 = vmatpush1.bf16.msra.mxu0 0
        %1736 = vmatprep.subr.bf16.mxu0 0
        %1737 = vmatpush1.bf16.msra.mxu0 0
        %1738 = vmatprep.subr.bf16.mxu0 0
        %1739 = vmatpush1.bf16.msra.mxu0 0
        %1740 = vmatprep.subr.bf16.mxu0 0
        %1741 = vmatpush1.bf16.msra.mxu0 0
        %1742 = vmatprep.subr.bf16.mxu0 0
        %1743 = vmatpush1.bf16.msra.mxu0 0
        %1744 = vmatprep.subr.bf16.mxu0 0
        %1745 = vmatpush1.bf16.msra.mxu0 0
        %1746 = vmatprep.subr.bf16.mxu0 0
        %1747 = vmatpush1.bf16.msra.mxu0 0
        %1748 = vmatprep.subr.bf16.mxu0 0
        %1749 = vmatpush1.bf16.msra.mxu0 0
        %1750 = vmatprep.subr.bf16.mxu0 0
        %1751 = vmatpush1.bf16.msra.mxu0 0
        %1752 = vmatprep.subr.bf16.mxu0 0
        %1753 = vmatpush1.bf16.msra.mxu0 0
        %1754 = vmatprep.subr.bf16.mxu0 0
        %1755 = vmatpush1.bf16.msra.mxu0 0
        %1756 = vmatprep.subr.bf16.mxu0 0
        %1757 = vmatpush1.bf16.msra.mxu0 0
        %1758 = vmatprep.subr.bf16.mxu0 0
        %1759 = vmatpush1.bf16.msra.mxu0 0
        %1760 = vmatprep.subr.bf16.mxu0 0
        %1761 = vmatpush1.bf16.msra.mxu0 0
        %1762 = vmatprep.mubr.bf16.mxu0 0
        %1763 = vmatmul.mubr.bf16.gmra.mrb[0].mxu0 %v1724
        %v1764 = vpop.f32.mrb[0].mxu0
        %v1765 = vadd.f32 0.0, %v1764
        %v1766 = vpop.f32.mrb[0].mxu0
        %v1767 = vpop.f32.mrb[0].mxu0
        %v1768 = vpop.f32.mrb[0].mxu0
        %1769 = vdwg.mxu0
        %v1770 = vmul.f32 %v1765, %v1721
        %1772 = vrot.lane.b32.xlu0 %v1665, 120
        %v1773 = vpop.permute.xlu0 %1772
        %v1775 = vunpack.c.l.b16 %v1596
        %v1776 = vpack.c.b16 %v1775, %v1775
        %1777 = vrot.lane.b32.xlu0 %v1776, 120
        %v1778 = vpop.permute.xlu0 %1777
        %v1780 = vsel %vm1288, %v1773, 0
        %v1783 = vsel %vm1288, %v1778, 0
        %1785 = vmatprep.subr.bf16.mxu0 0
        %1786 = vmatpush1.bf16.xpose.msra.mxu0 %v1783
        %1787 = vmatprep.subr.bf16.mxu0 0
        %1788 = vmatpush1.bf16.xpose.msra.mxu0 0
        %1789 = vmatprep.subr.bf16.mxu0 0
        %1790 = vmatpush1.bf16.xpose.msra.mxu0 0
        %1791 = vmatprep.subr.bf16.mxu0 0
        %1792 = vmatpush1.bf16.xpose.msra.mxu0 0
        %1793 = vmatprep.subr.bf16.mxu0 0
        %1794 = vmatpush1.bf16.xpose.msra.mxu0 0
        %1795 = vmatprep.subr.bf16.mxu0 0
        %1796 = vmatpush1.bf16.xpose.msra.mxu0 0
        %1797 = vmatprep.subr.bf16.mxu0 0
        %1798 = vmatpush1.bf16.xpose.msra.mxu0 0
        %1799 = vmatprep.subr.bf16.mxu0 0
        %1800 = vmatpush1.bf16.xpose.msra.mxu0 0
        %1801 = vmatprep.subr.bf16.mxu0 0
        %1802 = vmatpush1.bf16.xpose.msra.mxu0 0
        %1803 = vmatprep.subr.bf16.mxu0 0
        %1804 = vmatpush1.bf16.xpose.msra.mxu0 0
        %1805 = vmatprep.subr.bf16.mxu0 0
        %1806 = vmatpush1.bf16.xpose.msra.mxu0 0
        %1807 = vmatprep.subr.bf16.mxu0 0
        %1808 = vmatpush1.bf16.xpose.msra.mxu0 0
        %1809 = vmatprep.subr.bf16.mxu0 0
        %1810 = vmatpush1.bf16.xpose.msra.mxu0 0
        %1811 = vmatprep.subr.bf16.mxu0 0
        %1812 = vmatpush1.bf16.xpose.msra.mxu0 0
        %1813 = vmatprep.subr.bf16.mxu0 0
        %1814 = vmatpush1.bf16.xpose.msra.mxu0 0
        %1815 = vmatprep.subr.bf16.mxu0 0
        %1816 = vmatpush1.bf16.xpose.msra.mxu0 0
        %1817 = vmatprep.mubr.bf16.mxu0 0
        %1818 = vmatmul.mubr.bf16.gmra.mrb[0].mxu0 %v1780
        %v1819 = vpop.f32.mrb[0].mxu0
        %v1820 = vadd.f32 0.0, %v1819
        %v1821 = vpop.f32.mrb[0].mxu0
        %v1822 = vpop.f32.mrb[0].mxu0
        %v1823 = vpop.f32.mrb[0].mxu0
        %1824 = vdwg.mxu0
        %v1825 = vsel %vm1288, %v1820, -inf
        %1826 = vmax.xlane.f32.xlu0 %v1825
        %v1827 = vpop.xlane.xlu0 %1826
        %v1828 = vsub.f32 %v1820, %v1827
        %v1829 = vmul.f32 %v1828, 1.442695
        %v1830 = vpow.pop %v1829
        %v1831 = vsel %vm1288, %v1830, 0.0
        %1832 = vadd.xlane.f32.xlu0 %v1831
        %v1833 = vpop.xlane.xlu0 %1832
        %v1834 = vrcp.pop %v1833
        %v1835 = vpack.c.bf16 %v1830, %v1830
        %v1837 = vunpack.c.l.b16 %v1597
        %v1838 = vpack.c.b16 %v1837, %v1837
        %1839 = vrot.lane.b32.xlu0 %v1838, 120
        %v1840 = vpop.permute.xlu0 %1839
        %v1842 = vsel %vm1288, %v1835, 0
        %v1845 = vsel %vm1726, %v1840, 0
        %1847 = vmatprep.subr.bf16.mxu0 0
        %1848 = vmatpush1.bf16.msra.mxu0 %v1845
        %1849 = vmatprep.subr.bf16.mxu0 0
        %1850 = vmatpush1.bf16.msra.mxu0 0
        %1851 = vmatprep.subr.bf16.mxu0 0
        %1852 = vmatpush1.bf16.msra.mxu0 0
        %1853 = vmatprep.subr.bf16.mxu0 0
        %1854 = vmatpush1.bf16.msra.mxu0 0
        %1855 = vmatprep.subr.bf16.mxu0 0
        %1856 = vmatpush1.bf16.msra.mxu0 0
        %1857 = vmatprep.subr.bf16.mxu0 0
        %1858 = vmatpush1.bf16.msra.mxu0 0
        %1859 = vmatprep.subr.bf16.mxu0 0
        %1860 = vmatpush1.bf16.msra.mxu0 0
        %1861 = vmatprep.subr.bf16.mxu0 0
        %1862 = vmatpush1.bf16.msra.mxu0 0
        %1863 = vmatprep.subr.bf16.mxu0 0
        %1864 = vmatpush1.bf16.msra.mxu0 0
        %1865 = vmatprep.subr.bf16.mxu0 0
        %1866 = vmatpush1.bf16.msra.mxu0 0
        %1867 = vmatprep.subr.bf16.mxu0 0
        %1868 = vmatpush1.bf16.msra.mxu0 0
        %1869 = vmatprep.subr.bf16.mxu0 0
        %1870 = vmatpush1.bf16.msra.mxu0 0
        %1871 = vmatprep.subr.bf16.mxu0 0
        %1872 = vmatpush1.bf16.msra.mxu0 0
        %1873 = vmatprep.subr.bf16.mxu0 0
        %1874 = vmatpush1.bf16.msra.mxu0 0
        %1875 = vmatprep.subr.bf16.mxu0 0
        %1876 = vmatpush1.bf16.msra.mxu0 0
        %1877 = vmatprep.subr.bf16.mxu0 0
        %1878 = vmatpush1.bf16.msra.mxu0 0
        %1879 = vmatprep.mubr.bf16.mxu0 0
        %1880 = vmatmul.mubr.bf16.gmra.mrb[0].mxu0 %v1842
        %v1881 = vpop.f32.mrb[0].mxu0
        %v1882 = vadd.f32 0.0, %v1881
        %v1883 = vpop.f32.mrb[0].mxu0
        %v1884 = vpop.f32.mrb[0].mxu0
        %v1885 = vpop.f32.mrb[0].mxu0
        %1886 = vdwg.mxu0
        %v1887 = vmul.f32 %v1882, %v1834
        %1889 = vrot.lane.b32.xlu0 %v1887, 8
        %v1890 = vpop.permute.xlu0 %1889
        %v1892 = vsel %vm1288, %v1770, %v1890
        %v1893 = vpack.c.bf16 %v1892, %v1892
        %v1894 = vld [vmem:[%s20] sm:$0xf]
        %v1895 = vld [vmem:[%s20 + $0x4] sm:$0xf]
        %v1896 = vld [vmem:[%s21] sm:$0x1]
        %v1898 = vlaneseq
        %v1899 = vshrl.u32 %v1898, 7
        %v1900 = vsub.s32 0, %v1899
        %v1901 = vrot.slane %v1896, %v1900
        %v1905 = vunpack.c.l.b16 %v1894
        %v1906 = vunpack.c.l.b16 %v1895
        %v1907 = vpack.c.b16 %v1906, %v1905
        %v1910 = vsel %vm1335, %v1893, 0
        %1912 = vmatprep.subr.bf16.mxu0 0
        %1913 = vmatpush1.bf16.msra.mxu0 %v1907
        %1914 = vmatprep.subr.bf16.mxu0 0
        %1915 = vmatpush1.bf16.msra.mxu0 0
        %1916 = vmatprep.subr.bf16.mxu0 0
        %1917 = vmatpush1.bf16.msra.mxu0 0
        %1918 = vmatprep.subr.bf16.mxu0 0
        %1919 = vmatpush1.bf16.msra.mxu0 0
        %1920 = vmatprep.subr.bf16.mxu0 0
        %1921 = vmatpush1.bf16.msra.mxu0 0
        %1922 = vmatprep.subr.bf16.mxu0 0
        %1923 = vmatpush1.bf16.msra.mxu0 0
        %1924 = vmatprep.subr.bf16.mxu0 0
        %1925 = vmatpush1.bf16.msra.mxu0 0
        %1926 = vmatprep.subr.bf16.mxu0 0
        %1927 = vmatpush1.bf16.msra.mxu0 0
        %1928 = vmatprep.subr.bf16.mxu0 0
        %1929 = vmatpush1.bf16.msra.mxu0 0
        %1930 = vmatprep.subr.bf16.mxu0 0
        %1931 = vmatpush1.bf16.msra.mxu0 0
        %1932 = vmatprep.subr.bf16.mxu0 0
        %1933 = vmatpush1.bf16.msra.mxu0 0
        %1934 = vmatprep.subr.bf16.mxu0 0
        %1935 = vmatpush1.bf16.msra.mxu0 0
        %1936 = vmatprep.subr.bf16.mxu0 0
        %1937 = vmatpush1.bf16.msra.mxu0 0
        %1938 = vmatprep.subr.bf16.mxu0 0
        %1939 = vmatpush1.bf16.msra.mxu0 0
        %1940 = vmatprep.subr.bf16.mxu0 0
        %1941 = vmatpush1.bf16.msra.mxu0 0
        %1942 = vmatprep.subr.bf16.mxu0 0
        %1943 = vmatpush1.bf16.msra.mxu0 0
        %1944 = vmatprep.mubr.bf16.mxu0 0
        %1945 = vmatmul.mubr.bf16.gmra.mrb[0].mxu0 %v1910
        %v1946 = vpop.f32.mrb[0].mxu0
        %v1947 = vadd.f32 %v1901, %v1946
        %v1948 = vpop.f32.mrb[0].mxu0
        %v1949 = vpop.f32.mrb[0].mxu0
        %v1950 = vpop.f32.mrb[0].mxu0
        %1951 = vdwg.mxu0
        %v1952 = vadd.f32 %v1566, %v1947
        %v1953 = vld [vmem:[%s22] sm:$0x1]
        %v1954 = vld [vmem:[%s23] sm:$0x1]
        %v1955 = vsel %vm1189, %v1952, 0.0
        %1956 = vadd.xlane.f32.xlu0 %v1955
        %v1957 = vpop.xlane.xlu0 %1956
        %v1958 = vmul.f32 %v1957, %v1193
        %v1959 = vsub.f32 %v1952, %v1958
        %v1960 = vmul.f32 %v1959, %v1959
        %v1961 = vsel %vm1189, %v1960, 0.0
        %1962 = vadd.xlane.f32.xlu0 %v1961
        %v1963 = vpop.xlane.xlu0 %1962
        %v1964 = vmul.f32 %v1963, %v1193
        %v1965 = vadd.f32 %v1964, 1e-05
        %v1966 = vrsqrt.pop %v1965
        %v1967 = vmul.f32 %v1959, %v1966
        %v1969 = vlaneseq
        %v1970 = vshrl.u32 %v1969, 7
        %v1971 = vsub.s32 0, %v1970
        %v1972 = vrot.slane %v1953, %v1971
        %v1974 = vmul.f32 %v1967, %v1972
        %v1976 = vlaneseq
        %v1977 = vshrl.u32 %v1976, 7
        %v1978 = vsub.s32 0, %v1977
        %v1979 = vrot.slane %v1954, %v1978
        %v1981 = vadd.f32 %v1974, %v1979
        %v1982 = vpack.c.bf16 %v1981, %v1981
        %v1983 = vld [vmem:[%s24] sm:$0xf]
        %v1984 = vld [vmem:[%s24 + $0x4] sm:$0xf]
        %v1985 = vld [vmem:[%s24 + $0x8] sm:$0xf]
        %v1986 = vld [vmem:[%s24 + $0xc] sm:$0xf]
        %v1987 = vld [vmem:[%s25] sm:$0x1]
        %v1989 = vlaneseq
        %v1990 = vshrl.u32 %v1989, 7
        %v1991 = vsub.s32 0, %v1990
        %v1992 = vrot.slane %v1987, %v1991
        %v1998 = vunpack.c.l.b16 %v1983
        %v1999 = vunpack.c.l.b16 %v1984
        %v2000 = vunpack.c.l.b16 %v1985
        %v2001 = vunpack.c.l.b16 %v1986
        %v2002 = vpack.c.b16 %v1999, %v1998
        %v2003 = vpack.c.b16 %v2001, %v2000
        %v2007 = vsel %vm1189, %v1982, 0
        %2009 = vmatprep.subr.bf16.mxu0 0
        %2010 = vmatpush1.bf16.msra.mxu0 %v2002
        %2011 = vmatprep.subr.bf16.mxu0 0
        %2012 = vmatpush1.bf16.msra.mxu0 %v2003
        %2013 = vmatprep.subr.bf16.mxu0 0
        %2014 = vmatpush1.bf16.msra.mxu0 0
        %2015 = vmatprep.subr.bf16.mxu0 0
        %2016 = vmatpush1.bf16.msra.mxu0 0
        %2017 = vmatprep.subr.bf16.mxu0 0
        %2018 = vmatpush1.bf16.msra.mxu0 0
        %2019 = vmatprep.subr.bf16.mxu0 0
        %2020 = vmatpush1.bf16.msra.mxu0 0
        %2021 = vmatprep.subr.bf16.mxu0 0
        %2022 = vmatpush1.bf16.msra.mxu0 0
        %2023 = vmatprep.subr.bf16.mxu0 0
        %2024 = vmatpush1.bf16.msra.mxu0 0
        %2025 = vmatprep.subr.bf16.mxu0 0
        %2026 = vmatpush1.bf16.msra.mxu0 0
        %2027 = vmatprep.subr.bf16.mxu0 0
        %2028 = vmatpush1.bf16.msra.mxu0 0
        %2029 = vmatprep.subr.bf16.mxu0 0
        %2030 = vmatpush1.bf16.msra.mxu0 0
        %2031 = vmatprep.subr.bf16.mxu0 0
        %2032 = vmatpush1.bf16.msra.mxu0 0
        %2033 = vmatprep.subr.bf16.mxu0 0
        %2034 = vmatpush1.bf16.msra.mxu0 0
        %2035 = vmatprep.subr.bf16.mxu0 0
        %2036 = vmatpush1.bf16.msra.mxu0 0
        %2037 = vmatprep.subr.bf16.mxu0 0
        %2038 = vmatpush1.bf16.msra.mxu0 0
        %2039 = vmatprep.subr.bf16.mxu0 0
        %2040 = vmatpush1.bf16.msra.mxu0 0
        %2041 = vmatprep.mubr.bf16.mxu0 0
        %2042 = vmatmul.mubr.bf16.gmra.mrb[0].mxu0 %v2007
        %v2043 = vpop.f32.mrb[0].mxu0
        %v2044 = vadd.f32 %v1992, %v2043
        %v2045 = vpop.f32.mrb[0].mxu0
        %v2046 = vpop.f32.mrb[0].mxu0
        %v2047 = vpop.f32.mrb[0].mxu0
        %2048 = vdwg.mxu0
        %v2049 = vmax.f32 %v2044, 0.0
        %v2050 = vpack.c.bf16 %v2049, %v2049
        %v2051 = vld [vmem:[%s26] sm:$0xf]
        %v2052 = vld [vmem:[%s26 + $0x4] sm:$0xf]
        %v2053 = vld [vmem:[%s26 + $0x8] sm:$0xf]
        %v2054 = vld [vmem:[%s26 + $0xc] sm:$0xf]
        %v2055 = vld [vmem:[%s26 + $0x10] sm:$0xf]
        %v2056 = vld [vmem:[%s26 + $0x14] sm:$0xf]
        %v2057 = vld [vmem:[%s26 + $0x18] sm:$0xf]
        %v2058 = vld [vmem:[%s26 + $0x1c] sm:$0xf]
        %v2059 = vld [vmem:[%s26 + $0x20] sm:$0xf]
        %v2060 = vld [vmem:[%s26 + $0x24] sm:$0xf]
        %v2061 = vld [vmem:[%s26 + $0x28] sm:$0xf]
        %v2062 = vld [vmem:[%s26 + $0x2c] sm:$0xf]
        %v2063 = vld [vmem:[%s26 + $0x30] sm:$0xf]
        %v2064 = vld [vmem:[%s26 + $0x34] sm:$0xf]
        %v2065 = vld [vmem:[%s26 + $0x38] sm:$0xf]
        %v2066 = vld [vmem:[%s26 + $0x3c] sm:$0xf]
        %v2083 = vunpack.c.l.b16 %v2051
        %v2084 = vunpack.c.l.b16 %v2052
        %v2085 = vunpack.c.l.b16 %v2053
        %v2086 = vunpack.c.l.b16 %v2054
        %v2087 = vunpack.c.l.b16 %v2055
        %v2088 = vunpack.c.l.b16 %v2056
        %v2089 = vunpack.c.l.b16 %v2057
        %v2090 = vunpack.c.l.b16 %v2058
        %v2091 = vunpack.c.l.b16 %v2059
        %v2092 = vunpack.c.l.b16 %v2060
        %v2093 = vunpack.c.l.b16 %v2061
        %v2094 = vunpack.c.l.b16 %v2062
        %v2095 = vunpack.c.l.b16 %v2063
        %v2096 = vunpack.c.l.b16 %v2064
        %v2097 = vunpack.c.l.b16 %v2065
        %v2098 = vunpack.c.l.b16 %v2066
        %v2099 = vpack.c.b16 %v2084, %v2083
        %v2100 = vpack.c.b16 %v2086, %v2085
        %v2101 = vpack.c.b16 %v2088, %v2087
        %v2102 = vpack.c.b16 %v2090, %v2089
        %v2103 = vpack.c.b16 %v2092, %v2091
        %v2104 = vpack.c.b16 %v2094, %v2093
        %v2105 = vpack.c.b16 %v2096, %v2095
        %v2106 = vpack.c.b16 %v2098, %v2097
        %2115 = vmatprep.subr.bf16.mxu0 0
        %2116 = vmatpush1.bf16.msra.mxu0 %v2099
        %2117 = vmatprep.subr.bf16.mxu0 0
        %2118 = vmatpush1.bf16.msra.mxu0 %v2100
        %2119 = vmatprep.subr.bf16.mxu0 0
        %2120 = vmatpush1.bf16.msra.mxu0 %v2101
        %2121 = vmatprep.subr.bf16.mxu0 0
        %2122 = vmatpush1.bf16.msra.mxu0 %v2102
        %2123 = vmatprep.subr.bf16.mxu0 0
        %2124 = vmatpush1.bf16.msra.mxu0 %v2103
        %2125 = vmatprep.subr.bf16.mxu0 0
        %2126 = vmatpush1.bf16.msra.mxu0 %v2104
        %2127 = vmatprep.subr.bf16.mxu0 0
        %2128 = vmatpush1.bf16.msra.mxu0 %v2105
        %2129 = vmatprep.subr.bf16.mxu0 0
        %2130 = vmatpush1.bf16.msra.mxu0 %v2106
        %2131 = vmatprep.subr.bf16.mxu0 0
        %2132 = vmatpush1.bf16.msra.mxu0 0
        %2133 = vmatprep.subr.bf16.mxu0 0
        %2134 = vmatpush1.bf16.msra.mxu0 0
        %2135 = vmatprep.subr.bf16.mxu0 0
        %2136 = vmatpush1.bf16.msra.mxu0 0
        %2137 = vmatprep.subr.bf16.mxu0 0
        %2138 = vmatpush1.bf16.msra.mxu0 0
        %2139 = vmatprep.subr.bf16.mxu0 0
        %2140 = vmatpush1.bf16.msra.mxu0 0
        %2141 = vmatprep.subr.bf16.mxu0 0
        %2142 = vmatpush1.bf16.msra.mxu0 0
        %2143 = vmatprep.subr.bf16.mxu0 0
        %2144 = vmatpush1.bf16.msra.mxu0 0
        %2145 = vmatprep.subr.bf16.mxu0 0
        %2146 = vmatpush1.bf16.msra.mxu0 0
        %2147 = vmatprep.mubr.bf16.mxu0 0
        %2148 = vmatmul.mubr.bf16.gmra.mrb[0].mxu0 %v2050
        %v2149 = vpop.f32.mrb[0].mxu0
        %v2150 = vadd.f32 0.0, %v2149
        %v2151 = vpop.f32.mrb[0].mxu0
        %v2152 = vpop.f32.mrb[0].mxu0
        %v2153 = vpop.f32.mrb[0].mxu0
        %2154 = vdwg.mxu0
        %v2155 = vadd.f32 %v1952, %v2150
        %v2156 = vld [vmem:[%s27] sm:$0x1]
        %v2158 = vlaneseq
        %v2159 = vshrl.u32 %v2158, 7
        %v2160 = vsub.s32 0, %v2159
        %v2161 = vrot.slane %v2156, %v2160
        %v2163 = vadd.f32 %v2155, %v2161
        %2164 = vst.msk [vmem:[%s865] sm:$0xff] %vm1189, %v2163
        %s2165 = sand.u32 %s662, 1
        %s2166 = scalar_lea.sflag [#allocation7], %s2165
        %s2167 = sand.u32 %s662, 1
        %s2168 = smul.addr %s2167, 8
        %s2169 = scalar_lea.vmem [#allocation6], %s2168
        // Predicated region
        $region137: #{tpu_custom_call.1} parent=131 // pred_check
          %p2170 = pneg %p672
        $region138: #{tpu_custom_call.1} parent=131 // pred_check_branch
          %2172 = sbr.rel (%p2170) target = $region140
        $region139: #{tpu_custom_call.1} parent=131 // pred_region
          %s2174 = ssub.s32 128, 128
          %2175 = vsyncadd %s2166, %s2174
          %s2176 = smul.addr %s46, 2
          %s2177 = sadd.s32 %s47, %s2176
          %s2178 = smul.addr %s2177, 128
          %s2179 = scalar_lea.hbm %s28, %s2178
          %s2181 = sshll.u32 %s2169, 4
          %s2182 = int_to_ptr.vmem [resolvable:$true] %s2181
          %2184 = dma.vmem_to_hbm [thread:$0]  %s2182, 128, %s2179, %s2166
        $region140: #{tpu_custom_call.1} parent=131 // pred_fallthru
          _
      $region132: #{tpu_custom_call.1} parent=5 // pred_fallthru
        _
      %p2185 = scmp.le.s32.totalorder 2, %s37
      // Predicated region
      $region141: #{tpu_custom_call.1} parent=5 // pred_check
        %p2186 = pneg %p2185
      $region142: #{tpu_custom_call.1} parent=5 // pred_check_branch
        %2188 = sbr.rel (%p2186) target = $region144
      $region143: #{tpu_custom_call.1} parent=5 // pred_region
        %s2189 = ssub.s32 %s37, 2
        // Predicated region
        $region145: #{tpu_custom_call.1} parent=143 // pred_check
          %p2190 = pneg %p678
        $region146: #{tpu_custom_call.1} parent=143 // pred_check_branch
          %2192 = sbr.rel (%p2190) target = $region148
        $region147: #{tpu_custom_call.1} parent=143 // pred_region
          %s2193 = sand.u32 %s663, 1
          %s2194 = scalar_lea.sflag [#allocation7], %s2193
          %s2195 = sand.u32 %s663, 1
          %s2196 = smul.addr %s2195, 8
          %s2197 = scalar_lea.vmem [#allocation6], %s2196
          %2198 = dma.done %s2194, 128
        $region148: #{tpu_custom_call.1} parent=143 // pred_fallthru
          _
      $region144: #{tpu_custom_call.1} parent=5 // pred_fallthru
        _
    $region6: #{tpu_custom_call.1} parent=1 // loop_footer
      %s41 = sadd.s32 1, %s37
    $region7: #{tpu_custom_call.1} parent=1 // loop_footer_branch
      %36 = sbr.rel target = $region3
    $region8: #{tpu_custom_call.1} parent=1 // loop_exit
      _
    %2199 = vsyncpa [#allocation7], 1
    %s2200 = scalar_lea.sflag [#allocation7], 1
    %2201 = vsyncpa %s2200, 1

</llo_original>
